<compile_context>
chip_gen: v5e
topology: v5e:2x2
jax: 0.10.0
libtpu: 0.0.40
codegen_flags: <defaults>
</compile_context>

<pallas_src>
import functools

import jax
import jax.numpy as jnp
from jax.experimental import pallas as pl
from jax.experimental.pallas import tpu as pltpu

LN_EPS = 1e-5

# Row layout of the packed per-layer vector array (L, 6, D):
#   0 bo, 1 ln1_g, 2 ln1_b, 3 b2, 4 ln2_g, 5 ln2_b
_VEC_KEYS = ('bo', 'g1', 'be1', 'b2', 'g2', 'be2')


# ----------------------------- in-kernel helpers -----------------------------

def _ln(x, g, b):
    # x: (M, D) f32; g, b broadcastable (1, D)
    mu = jnp.mean(x, axis=-1, keepdims=True)
    var = jnp.mean((x - mu) ** 2, axis=-1, keepdims=True)
    return (x - mu) * jax.lax.rsqrt(var + LN_EPS) * g + b


def _encoder_layer(x, wqkv, bqkv, wo, w1, b1, w2, vec, nhead, bblk, seq):
    # x: (bblk*seq, D) f32.  wqkv: (D, 3D) bf16 (wq pre-scaled by 1/sqrt(dh)),
    # bqkv: (1, 3D) f32 (bq pre-scaled), wo: (D, D) bf16, w1: (D, dff) bf16,
    # b1: (1, dff) f32, w2: (dff, D) bf16, vec: (6, D) f32.
    M, D = x.shape
    dh = D // nhead

    # Fused QKV projection: one MXU matmul, one bias add.
    qkv = jnp.dot(x.astype(jnp.bfloat16), wqkv,
                  preferred_element_type=jnp.float32) + bqkv          # (M, 3D) f32
    q = qkv[:, 0 * D:1 * D].astype(jnp.bfloat16)
    k = qkv[:, 1 * D:2 * D].astype(jnp.bfloat16)
    v = qkv[:, 2 * D:3 * D].astype(jnp.bfloat16)

    # Attention: static loops over batch rows and heads (S×S is per-element).
    ctx_rows = []
    for b in range(bblk):                                             # static
        r0 = b * seq
        qb = q[r0:r0 + seq, :]
        kb = k[r0:r0 + seq, :]
        vb = v[r0:r0 + seq, :]
        heads = []
        for h in range(nhead):                                        # static
            lo, hi = h * dh, (h + 1) * dh
            s = jax.lax.dot_general(qb[:, lo:hi], kb[:, lo:hi],
                                    (((1,), (1,)), ((), ())),
                                    preferred_element_type=jnp.float32)   # (S, S)
            s = s - jnp.max(s, axis=-1, keepdims=True)                    # f32 softmax
            p = jnp.exp(s)
            p = p * pl.reciprocal(jnp.sum(p, axis=-1, keepdims=True), approx=True)
            heads.append(jnp.dot(p.astype(jnp.bfloat16), vb[:, lo:hi],
                                 preferred_element_type=jnp.float32))     # (S, dh)
        ctx_rows.append(jnp.concatenate(heads, axis=1))                   # (S, D)
    ctx = jnp.concatenate(ctx_rows, axis=0)                               # (M, D)

    # Single output projection for the whole block.
    attn = jnp.dot(ctx.astype(jnp.bfloat16), wo,
                   preferred_element_type=jnp.float32) + vec[0:1, :]
    y = _ln(x + attn, vec[1:2, :], vec[2:3, :])

    # Feed-forward.
    hid = jnp.maximum(jnp.dot(y.astype(jnp.bfloat16), w1,
                              preferred_element_type=jnp.float32) + b1, 0.0)
    ff = jnp.dot(hid.astype(jnp.bfloat16), w2,
                 preferred_element_type=jnp.float32) + vec[3:4, :]
    return _ln(y + ff, vec[4:5, :], vec[5:6, :])


# ------------------------------ fused kernel ----------------------------------

def _fused_kernel(x_ref, xr_ref,
                  f_inw, f_inb, f_wqkv, f_bqkv, f_wo, f_w1, f_b1, f_w2, f_vec,
                  r_inw, r_inb, r_wqkv, r_bqkv, r_wo, r_w1, r_b1, r_w2, r_vec,
                  ln_gb, o_ref, *, nhead, num_layers, bblk, seq):

    def encoder(xflat, inw, inb, wqkv, bqkv, wo, w1, b1, w2, vec):
        # xflat: (bblk*seq, Cin) f32 -> (bblk*seq, D) f32
        h = jnp.dot(xflat.astype(jnp.bfloat16), inw[...],
                    preferred_element_type=jnp.float32) + inb[...]
        # TODO(synk): switch to lax.fori_loop over stacked refs for large L.
        for l in range(num_layers):                                   # static unroll
            h = _encoder_layer(h, wqkv[l], bqkv[l], wo[l], w1[l], b1[l], w2[l],
                               vec[l], nhead, bblk, seq)
        return h

    a = encoder(x_ref[...], f_inw, f_inb, f_wqkv, f_bqkv, f_wo, f_w1, f_b1, f_w2, f_vec)
    r = encoder(xr_ref[...], r_inw, r_inb, r_wqkv, r_bqkv, r_wo, r_w1, r_b1, r_w2, r_vec)
    o_ref[...] = _ln(a + r, ln_gb[0:1, :], ln_gb[1:2, :])


# ------------------------------ pallas wrapper ---------------------------------

def _pack_encoder(p, nhead):
    layers = p['layers']
    D = p['in_w'].shape[1]
    dh = D // nhead
    scale = 1.0 / float(dh) ** 0.5
    # Fuse QKV weights/biases; fold the 1/sqrt(dh) score scale into wq/bq.
    wqkv = jnp.stack([jnp.concatenate([lp['wq'] * scale, lp['wk'], lp['wv']], axis=1)
                      for lp in layers]).astype(jnp.bfloat16)        # (L, D, 3D)
    bqkv = jnp.stack([jnp.concatenate([lp['bq'] * scale, lp['bk'], lp['bv']], axis=1)
                      for lp in layers])                             # (L, 1, 3D) f32
    wo = jnp.stack([lp['wo'] for lp in layers]).astype(jnp.bfloat16)   # (L, D, D)
    w1 = jnp.stack([lp['w1'] for lp in layers]).astype(jnp.bfloat16)   # (L, D, dff)
    b1 = jnp.stack([lp['b1'] for lp in layers])                        # (L, 1, dff) f32
    w2 = jnp.stack([lp['w2'] for lp in layers]).astype(jnp.bfloat16)   # (L, dff, D)
    vec = jnp.stack([jnp.concatenate([lp[k] for k in _VEC_KEYS], axis=0)
                     for lp in layers])                                # (L, 6, D) f32
    return (p['in_w'].astype(jnp.bfloat16), p['in_b'],
            wqkv, bqkv, wo, w1, b1, w2, vec)


def _const_spec(shape):
    zeros = (0,) * len(shape)
    return pl.BlockSpec(shape, lambda i, _z=zeros: _z)


def _choose_bblk(B, S, target_rows=256):
    """Largest divisor of B such that Bblk*S <= target_rows (fatten MXU M)."""
    best = 1
    for d in range(1, B + 1):
        if B % d == 0 and d * S <= target_rows:
            best = d
    return best


@functools.partial(jax.jit, static_argnames=('nhead',))
def bidirectional_transformer_pallas(x, params_fwd, params_rev, ln_g, ln_b, *, nhead):
    B, S, Cin = x.shape
    D = params_fwd['in_w'].shape[1]
    num_layers = len(params_fwd['layers'])
    bblk = _choose_bblk(B, S)
    grid = (B // bblk,)

    fwd = _pack_encoder(params_fwd, nhead)
    rev = _pack_encoder(params_rev, nhead)
    ln_gb = jnp.concatenate([ln_g, ln_b], axis=0)              # (2, D) f32

    # Flip once in the wrapper (one cheap XLA op), flatten batch*seq so every
    # per-token matmul in the kernel sees M = bblk*S rows.
    x2 = x.reshape(B * S, Cin)
    xr2 = jnp.flip(x, axis=1).reshape(B * S, Cin)

    args = (x2, xr2) + fwd + rev + (ln_gb,)
    row_spec = pl.BlockSpec((bblk * S, Cin), lambda i: (i, 0))
    in_specs = [row_spec, row_spec] + [_const_spec(a.shape) for a in args[2:]]

    out = pl.pallas_call(
        functools.partial(_fused_kernel, nhead=nhead, num_layers=num_layers,
                          bblk=bblk, seq=S),
        out_shape=jax.ShapeDtypeStruct((B * S, D), jnp.float32),
        grid=grid,
        in_specs=in_specs,
        out_specs=pl.BlockSpec((bblk * S, D), lambda i: (i, 0)),
        compiler_params=pltpu.CompilerParams(dimension_semantics=("parallel",)),
    )(*args)
    return out.reshape(B, S, D)


# ------------------------------- pure-JAX reference ---------------------------

def _ln_ref(x, g, b):
    mu = jnp.mean(x, axis=-1, keepdims=True)
    var = jnp.mean((x - mu) ** 2, axis=-1, keepdims=True)
    return (x - mu) * jax.lax.rsqrt(var + LN_EPS) * g + b


def _ref_encoder_layer(x, p, nhead):
    B, S, D = x.shape
    dh = D // nhead
    q = x @ p['wq'] + p['bq'][0]
    k = x @ p['wk'] + p['bk'][0]
    v = x @ p['wv'] + p['bv'][0]
    qh = q.reshape(B, S, nhead, dh)
    kh = k.reshape(B, S, nhead, dh)
    vh = v.reshape(B, S, nhead, dh)
    scores = jnp.einsum('bqhd,bkhd->bhqk', qh, kh) / jnp.sqrt(float(dh))
    att = jax.nn.softmax(scores, axis=-1)
    ctx = jnp.einsum('bhqk,bkhd->bqhd', att, vh).reshape(B, S, D)
    attn = ctx @ p['wo'] + p['bo'][0]
    y = _ln_ref(x + attn, p['g1'][0], p['be1'][0])
    h = jax.nn.relu(y @ p['w1'] + p['b1'][0])
    ff = h @ p['w2'] + p['b2'][0]
    return _ln_ref(y + ff, p['g2'][0], p['be2'][0])


def _ref_encoder(x, params, nhead):
    x = x @ params['in_w'] + params['in_b'][0]
    for layer in params['layers']:
        x = _ref_encoder_layer(x, layer, nhead)
    return x


def bidirectional_transformer_ref(x, pf, pr, ln_g, ln_b, nhead):
    a = _ref_encoder(x, pf, nhead)
    b = _ref_encoder(jnp.flip(x, axis=1), pr, nhead)
    return _ln_ref(a + b, ln_g[0], ln_b[0])


# -------------------------------- param init ----------------------------------

def init_encoder_params(key, cin, cout, num_layers, dff):
    def w(k, shape, scale=0.05):
        return jax.random.normal(k, shape, jnp.float32) * scale

    keys = jax.random.split(key, num_layers + 1)
    k_in, k_bin = jax.random.split(keys[0])
    params = {'in_w': w(k_in, (cin, cout)), 'in_b': w(k_bin, (1, cout))}
    layers = []
    for i in range(num_layers):
        ks = jax.random.split(keys[i + 1], 12)
        layers.append(dict(
            wq=w(ks[0], (cout, cout)), bq=w(ks[1], (1, cout)),
            wk=w(ks[2], (cout, cout)), bk=w(ks[3], (1, cout)),
            wv=w(ks[4], (cout, cout)), bv=w(ks[5], (1, cout)),
            wo=w(ks[6], (cout, cout)), bo=w(ks[7], (1, cout)),
            g1=jnp.ones((1, cout), jnp.float32), be1=jnp.zeros((1, cout), jnp.float32),
            w1=w(ks[8], (cout, dff)), b1=w(ks[9], (1, dff)),
            w2=w(ks[10], (dff, cout)), b2=w(ks[11], (1, cout)),
            g2=jnp.ones((1, cout), jnp.float32), be2=jnp.zeros((1, cout), jnp.float32),
        ))
    params['layers'] = layers
    return params


# ----------------------------------- main --------------------------------------

if __name__ == "__main__":
    B, S = 2, 8
    in_channels, out_channels = 16, 32
    num_layers, nhead, dff = 2, 4, 64

    key = jax.random.PRNGKey(0)
    k_x, k_fwd, k_rev = jax.random.split(key, 3)

    x = jax.random.normal(k_x, (B, S, in_channels), jnp.float32)

    params_fwd = init_encoder_params(k_fwd, in_channels, out_channels, num_layers, dff)
    params_rev = init_encoder_params(k_rev, in_channels, out_channels, num_layers, dff)
    ln_g = jnp.ones((1, out_channels), jnp.float32)
    ln_b = jnp.zeros((1, out_channels), jnp.float32)

    out = bidirectional_transformer_pallas(x, params_fwd, params_rev, ln_g, ln_b,
                                           nhead=nhead)
    out = jax.block_until_ready(out)

    ref = jax.block_until_ready(
        bidirectional_transformer_ref(x, params_fwd, params_rev, ln_g, ln_b, nhead))

    assert out.shape == (B, S, out_channels)
    assert bool(jnp.all(jnp.isfinite(out)))
    assert jnp.allclose(out, ref, rtol=5e-2, atol=5e-2), float(jnp.max(jnp.abs(out - ref)))

    print("KERNEL_OK")
</pallas_src>

<mosaic_0001>
module attributes {stable_mosaic.version = 11 : i64} {
  func.func @_fused_kernel(%arg0: i32, %arg1: memref<16x16xf32, #tpu.memory_space<vmem>>, %arg2: memref<16x16xf32, #tpu.memory_space<vmem>>, %arg3: memref<16x32xbf16, #tpu.memory_space<vmem>>, %arg4: memref<1x32xf32, #tpu.memory_space<vmem>>, %arg5: memref<2x32x96xbf16, #tpu.memory_space<vmem>>, %arg6: memref<2x1x96xf32, #tpu.memory_space<vmem>>, %arg7: memref<2x32x32xbf16, #tpu.memory_space<vmem>>, %arg8: memref<2x32x64xbf16, #tpu.memory_space<vmem>>, %arg9: memref<2x1x64xf32, #tpu.memory_space<vmem>>, %arg10: memref<2x64x32xbf16, #tpu.memory_space<vmem>>, %arg11: memref<2x6x32xf32, #tpu.memory_space<vmem>>, %arg12: memref<16x32xbf16, #tpu.memory_space<vmem>>, %arg13: memref<1x32xf32, #tpu.memory_space<vmem>>, %arg14: memref<2x32x96xbf16, #tpu.memory_space<vmem>>, %arg15: memref<2x1x96xf32, #tpu.memory_space<vmem>>, %arg16: memref<2x32x32xbf16, #tpu.memory_space<vmem>>, %arg17: memref<2x32x64xbf16, #tpu.memory_space<vmem>>, %arg18: memref<2x1x64xf32, #tpu.memory_space<vmem>>, %arg19: memref<2x64x32xbf16, #tpu.memory_space<vmem>>, %arg20: memref<2x6x32xf32, #tpu.memory_space<vmem>>, %arg21: memref<2x32xf32, #tpu.memory_space<vmem>>, %arg22: memref<16x32xf32, #tpu.memory_space<vmem>>) attributes {dimension_semantics = [#tpu.dimension_semantics<parallel>], iteration_bounds = array<i64: 1>, scalar_prefetch = 0 : i64, scratch_operands = 0 : i64, tpu.core_type = #tpu.core_type<tc>, window_params = [{transform_indices = @transform_0, window_bounds = array<i64: 16, 16>}, {transform_indices = @transform_1, window_bounds = array<i64: 16, 16>}, {pipeline_mode = #tpu.pipeline_mode<synchronous>, transform_indices = @transform_2, window_bounds = array<i64: 16, 32>}, {pipeline_mode = #tpu.pipeline_mode<synchronous>, transform_indices = @transform_3, window_bounds = array<i64: 1, 32>}, {pipeline_mode = #tpu.pipeline_mode<synchronous>, transform_indices = @transform_4, window_bounds = array<i64: 2, 32, 96>}, {pipeline_mode = #tpu.pipeline_mode<synchronous>, transform_indices = @transform_5, window_bounds = array<i64: 2, 1, 96>}, {pipeline_mode = #tpu.pipeline_mode<synchronous>, transform_indices = @transform_6, window_bounds = array<i64: 2, 32, 32>}, {pipeline_mode = #tpu.pipeline_mode<synchronous>, transform_indices = @transform_7, window_bounds = array<i64: 2, 32, 64>}, {pipeline_mode = #tpu.pipeline_mode<synchronous>, transform_indices = @transform_8, window_bounds = array<i64: 2, 1, 64>}, {pipeline_mode = #tpu.pipeline_mode<synchronous>, transform_indices = @transform_9, window_bounds = array<i64: 2, 64, 32>}, {pipeline_mode = #tpu.pipeline_mode<synchronous>, transform_indices = @transform_10, window_bounds = array<i64: 2, 6, 32>}, {pipeline_mode = #tpu.pipeline_mode<synchronous>, transform_indices = @transform_11, window_bounds = array<i64: 16, 32>}, {pipeline_mode = #tpu.pipeline_mode<synchronous>, transform_indices = @transform_12, window_bounds = array<i64: 1, 32>}, {pipeline_mode = #tpu.pipeline_mode<synchronous>, transform_indices = @transform_13, window_bounds = array<i64: 2, 32, 96>}, {pipeline_mode = #tpu.pipeline_mode<synchronous>, transform_indices = @transform_14, window_bounds = array<i64: 2, 1, 96>}, {pipeline_mode = #tpu.pipeline_mode<synchronous>, transform_indices = @transform_15, window_bounds = array<i64: 2, 32, 32>}, {pipeline_mode = #tpu.pipeline_mode<synchronous>, transform_indices = @transform_16, window_bounds = array<i64: 2, 32, 64>}, {pipeline_mode = #tpu.pipeline_mode<synchronous>, transform_indices = @transform_17, window_bounds = array<i64: 2, 1, 64>}, {pipeline_mode = #tpu.pipeline_mode<synchronous>, transform_indices = @transform_18, window_bounds = array<i64: 2, 64, 32>}, {pipeline_mode = #tpu.pipeline_mode<synchronous>, transform_indices = @transform_19, window_bounds = array<i64: 2, 6, 32>}, {pipeline_mode = #tpu.pipeline_mode<synchronous>, transform_indices = @transform_20, window_bounds = array<i64: 2, 32>}, {transform_indices = @transform_21, window_bounds = array<i64: 16, 32>}]} {
    %c0 = arith.constant 0 : index
    %c0_0 = arith.constant 0 : index
    %0 = vector.load %arg1[%c0, %c0_0] : memref<16x16xf32, #tpu.memory_space<vmem>>, vector<16x16xf32>
    %1 = arith.truncf %0 : vector<16x16xf32> to vector<16x16xbf16>
    %c0_1 = arith.constant 0 : index
    %c0_2 = arith.constant 0 : index
    %2 = vector.load %arg3[%c0_1, %c0_2] : memref<16x32xbf16, #tpu.memory_space<vmem>>, vector<16x32xbf16>
    %cst = arith.constant dense<0.000000e+00> : vector<16x32xf32>
    %3 = tpu.matmul %1, %2, %cst {dimension_numbers = #tpu.dot_dimension_numbers<[1], [0], [0], [1], [0, 0, 1, 1], [], []>} : vector<16x16xbf16>, vector<16x32xbf16>, vector<16x32xf32> -> vector<16x32xf32>
    %c0_3 = arith.constant 0 : index
    %c0_4 = arith.constant 0 : index
    %4 = vector.load %arg4[%c0_3, %c0_4] : memref<1x32xf32, #tpu.memory_space<vmem>>, vector<1x32xf32>
    %5 = vector.broadcast %4 : vector<1x32xf32> to vector<16x32xf32>
    %6 = arith.addf %3, %5 : vector<16x32xf32>
    %c0_5 = arith.constant 0 : index
    %c0_6 = arith.constant 0 : index
    %c0_7 = arith.constant 0 : index
    %7 = vector.load %arg5[%c0_5, %c0_6, %c0_7] : memref<2x32x96xbf16, #tpu.memory_space<vmem>>, vector<1x32x96xbf16>
    %8 = vector.shape_cast %7 : vector<1x32x96xbf16> to vector<32x96xbf16>
    %c0_8 = arith.constant 0 : index
    %c0_9 = arith.constant 0 : index
    %c0_10 = arith.constant 0 : index
    %9 = vector.load %arg6[%c0_8, %c0_9, %c0_10] : memref<2x1x96xf32, #tpu.memory_space<vmem>>, vector<1x1x96xf32>
    %10 = vector.shape_cast %9 : vector<1x1x96xf32> to vector<1x96xf32>
    %c0_11 = arith.constant 0 : index
    %c0_12 = arith.constant 0 : index
    %c0_13 = arith.constant 0 : index
    %11 = vector.load %arg7[%c0_11, %c0_12, %c0_13] : memref<2x32x32xbf16, #tpu.memory_space<vmem>>, vector<1x32x32xbf16>
    %12 = vector.shape_cast %11 : vector<1x32x32xbf16> to vector<32x32xbf16>
    %c0_14 = arith.constant 0 : index
    %c0_15 = arith.constant 0 : index
    %c0_16 = arith.constant 0 : index
    %13 = vector.load %arg8[%c0_14, %c0_15, %c0_16] : memref<2x32x64xbf16, #tpu.memory_space<vmem>>, vector<1x32x64xbf16>
    %14 = vector.shape_cast %13 : vector<1x32x64xbf16> to vector<32x64xbf16>
    %c0_17 = arith.constant 0 : index
    %c0_18 = arith.constant 0 : index
    %c0_19 = arith.constant 0 : index
    %15 = vector.load %arg9[%c0_17, %c0_18, %c0_19] : memref<2x1x64xf32, #tpu.memory_space<vmem>>, vector<1x1x64xf32>
    %16 = vector.shape_cast %15 : vector<1x1x64xf32> to vector<1x64xf32>
    %c0_20 = arith.constant 0 : index
    %c0_21 = arith.constant 0 : index
    %c0_22 = arith.constant 0 : index
    %17 = vector.load %arg10[%c0_20, %c0_21, %c0_22] : memref<2x64x32xbf16, #tpu.memory_space<vmem>>, vector<1x64x32xbf16>
    %18 = vector.shape_cast %17 : vector<1x64x32xbf16> to vector<64x32xbf16>
    %c0_23 = arith.constant 0 : index
    %c0_24 = arith.constant 0 : index
    %c0_25 = arith.constant 0 : index
    %19 = vector.load %arg11[%c0_23, %c0_24, %c0_25] : memref<2x6x32xf32, #tpu.memory_space<vmem>>, vector<1x6x32xf32>
    %20 = vector.shape_cast %19 : vector<1x6x32xf32> to vector<6x32xf32>
    %21 = arith.truncf %6 : vector<16x32xf32> to vector<16x32xbf16>
    %cst_26 = arith.constant dense<0.000000e+00> : vector<16x96xf32>
    %22 = tpu.matmul %21, %8, %cst_26 {dimension_numbers = #tpu.dot_dimension_numbers<[1], [0], [0], [1], [0, 0, 1, 1], [], []>} : vector<16x32xbf16>, vector<32x96xbf16>, vector<16x96xf32> -> vector<16x96xf32>
    %23 = vector.broadcast %10 : vector<1x96xf32> to vector<16x96xf32>
    %24 = arith.addf %22, %23 : vector<16x96xf32>
    %25 = vector.extract_strided_slice %24 {offsets = [0, 0], sizes = [16, 32], strides = [1, 1]} : vector<16x96xf32> to vector<16x32xf32>
    %26 = arith.truncf %25 : vector<16x32xf32> to vector<16x32xbf16>
    %27 = vector.extract_strided_slice %24 {offsets = [0, 32], sizes = [16, 32], strides = [1, 1]} : vector<16x96xf32> to vector<16x32xf32>
    %28 = arith.truncf %27 : vector<16x32xf32> to vector<16x32xbf16>
    %29 = vector.extract_strided_slice %24 {offsets = [0, 64], sizes = [16, 32], strides = [1, 1]} : vector<16x96xf32> to vector<16x32xf32>
    %30 = arith.truncf %29 : vector<16x32xf32> to vector<16x32xbf16>
    %31 = vector.extract_strided_slice %26 {offsets = [0, 0], sizes = [8, 32], strides = [1, 1]} : vector<16x32xbf16> to vector<8x32xbf16>
    %32 = vector.extract_strided_slice %28 {offsets = [0, 0], sizes = [8, 32], strides = [1, 1]} : vector<16x32xbf16> to vector<8x32xbf16>
    %33 = vector.extract_strided_slice %30 {offsets = [0, 0], sizes = [8, 32], strides = [1, 1]} : vector<16x32xbf16> to vector<8x32xbf16>
    %34 = vector.extract_strided_slice %31 {offsets = [0, 0], sizes = [8, 8], strides = [1, 1]} : vector<8x32xbf16> to vector<8x8xbf16>
    %35 = vector.extract_strided_slice %32 {offsets = [0, 0], sizes = [8, 8], strides = [1, 1]} : vector<8x32xbf16> to vector<8x8xbf16>
    %cst_27 = arith.constant dense<0.000000e+00> : vector<8x8xf32>
    %36 = tpu.matmul %34, %35, %cst_27 {dimension_numbers = #tpu.dot_dimension_numbers<[1], [1], [0], [0], [0, 0, 1, 0], [], []>} : vector<8x8xbf16>, vector<8x8xbf16>, vector<8x8xf32> -> vector<8x8xf32>
    %cst_28 = arith.constant dense<0xFF800000> : vector<8xf32>
    %37 = vector.multi_reduction <maximumf>, %36, %cst_28 [1] : vector<8x8xf32> to vector<8xf32>
    %38 = vector.shape_cast %37 : vector<8xf32> to vector<8x1xf32>
    %39 = vector.broadcast %38 : vector<8x1xf32> to vector<8x8xf32>
    %40 = arith.subf %36, %39 : vector<8x8xf32>
    %41 = math.exp %40 : vector<8x8xf32>
    %cst_29 = arith.constant dense<0.000000e+00> : vector<8xf32>
    %42 = vector.multi_reduction <add>, %41, %cst_29 [1] : vector<8x8xf32> to vector<8xf32>
    %43 = vector.shape_cast %42 : vector<8xf32> to vector<8x1xf32>
    %44 = tpu.reciprocal %43 {approx = true} : vector<8x1xf32> -> vector<8x1xf32>
    %45 = vector.broadcast %44 : vector<8x1xf32> to vector<8x8xf32>
    %46 = arith.mulf %41, %45 : vector<8x8xf32>
    %47 = arith.truncf %46 : vector<8x8xf32> to vector<8x8xbf16>
    %48 = vector.extract_strided_slice %33 {offsets = [0, 0], sizes = [8, 8], strides = [1, 1]} : vector<8x32xbf16> to vector<8x8xbf16>
    %cst_30 = arith.constant dense<0.000000e+00> : vector<8x8xf32>
    %49 = tpu.matmul %47, %48, %cst_30 {dimension_numbers = #tpu.dot_dimension_numbers<[1], [0], [0], [1], [0, 0, 1, 1], [], []>} : vector<8x8xbf16>, vector<8x8xbf16>, vector<8x8xf32> -> vector<8x8xf32>
    %50 = vector.extract_strided_slice %31 {offsets = [0, 8], sizes = [8, 8], strides = [1, 1]} : vector<8x32xbf16> to vector<8x8xbf16>
    %51 = vector.extract_strided_slice %32 {offsets = [0, 8], sizes = [8, 8], strides = [1, 1]} : vector<8x32xbf16> to vector<8x8xbf16>
    %cst_31 = arith.constant dense<0.000000e+00> : vector<8x8xf32>
    %52 = tpu.matmul %50, %51, %cst_31 {dimension_numbers = #tpu.dot_dimension_numbers<[1], [1], [0], [0], [0, 0, 1, 0], [], []>} : vector<8x8xbf16>, vector<8x8xbf16>, vector<8x8xf32> -> vector<8x8xf32>
    %cst_32 = arith.constant dense<0xFF800000> : vector<8xf32>
    %53 = vector.multi_reduction <maximumf>, %52, %cst_32 [1] : vector<8x8xf32> to vector<8xf32>
    %54 = vector.shape_cast %53 : vector<8xf32> to vector<8x1xf32>
    %55 = vector.broadcast %54 : vector<8x1xf32> to vector<8x8xf32>
    %56 = arith.subf %52, %55 : vector<8x8xf32>
    %57 = math.exp %56 : vector<8x8xf32>
    %cst_33 = arith.constant dense<0.000000e+00> : vector<8xf32>
    %58 = vector.multi_reduction <add>, %57, %cst_33 [1] : vector<8x8xf32> to vector<8xf32>
    %59 = vector.shape_cast %58 : vector<8xf32> to vector<8x1xf32>
    %60 = tpu.reciprocal %59 {approx = true} : vector<8x1xf32> -> vector<8x1xf32>
    %61 = vector.broadcast %60 : vector<8x1xf32> to vector<8x8xf32>
    %62 = arith.mulf %57, %61 : vector<8x8xf32>
    %63 = arith.truncf %62 : vector<8x8xf32> to vector<8x8xbf16>
    %64 = vector.extract_strided_slice %33 {offsets = [0, 8], sizes = [8, 8], strides = [1, 1]} : vector<8x32xbf16> to vector<8x8xbf16>
    %cst_34 = arith.constant dense<0.000000e+00> : vector<8x8xf32>
    %65 = tpu.matmul %63, %64, %cst_34 {dimension_numbers = #tpu.dot_dimension_numbers<[1], [0], [0], [1], [0, 0, 1, 1], [], []>} : vector<8x8xbf16>, vector<8x8xbf16>, vector<8x8xf32> -> vector<8x8xf32>
    %66 = vector.extract_strided_slice %31 {offsets = [0, 16], sizes = [8, 8], strides = [1, 1]} : vector<8x32xbf16> to vector<8x8xbf16>
    %67 = vector.extract_strided_slice %32 {offsets = [0, 16], sizes = [8, 8], strides = [1, 1]} : vector<8x32xbf16> to vector<8x8xbf16>
    %cst_35 = arith.constant dense<0.000000e+00> : vector<8x8xf32>
    %68 = tpu.matmul %66, %67, %cst_35 {dimension_numbers = #tpu.dot_dimension_numbers<[1], [1], [0], [0], [0, 0, 1, 0], [], []>} : vector<8x8xbf16>, vector<8x8xbf16>, vector<8x8xf32> -> vector<8x8xf32>
    %cst_36 = arith.constant dense<0xFF800000> : vector<8xf32>
    %69 = vector.multi_reduction <maximumf>, %68, %cst_36 [1] : vector<8x8xf32> to vector<8xf32>
    %70 = vector.shape_cast %69 : vector<8xf32> to vector<8x1xf32>
    %71 = vector.broadcast %70 : vector<8x1xf32> to vector<8x8xf32>
    %72 = arith.subf %68, %71 : vector<8x8xf32>
    %73 = math.exp %72 : vector<8x8xf32>
    %cst_37 = arith.constant dense<0.000000e+00> : vector<8xf32>
    %74 = vector.multi_reduction <add>, %73, %cst_37 [1] : vector<8x8xf32> to vector<8xf32>
    %75 = vector.shape_cast %74 : vector<8xf32> to vector<8x1xf32>
    %76 = tpu.reciprocal %75 {approx = true} : vector<8x1xf32> -> vector<8x1xf32>
    %77 = vector.broadcast %76 : vector<8x1xf32> to vector<8x8xf32>
    %78 = arith.mulf %73, %77 : vector<8x8xf32>
    %79 = arith.truncf %78 : vector<8x8xf32> to vector<8x8xbf16>
    %80 = vector.extract_strided_slice %33 {offsets = [0, 16], sizes = [8, 8], strides = [1, 1]} : vector<8x32xbf16> to vector<8x8xbf16>
    %cst_38 = arith.constant dense<0.000000e+00> : vector<8x8xf32>
    %81 = tpu.matmul %79, %80, %cst_38 {dimension_numbers = #tpu.dot_dimension_numbers<[1], [0], [0], [1], [0, 0, 1, 1], [], []>} : vector<8x8xbf16>, vector<8x8xbf16>, vector<8x8xf32> -> vector<8x8xf32>
    %82 = vector.extract_strided_slice %31 {offsets = [0, 24], sizes = [8, 8], strides = [1, 1]} : vector<8x32xbf16> to vector<8x8xbf16>
    %83 = vector.extract_strided_slice %32 {offsets = [0, 24], sizes = [8, 8], strides = [1, 1]} : vector<8x32xbf16> to vector<8x8xbf16>
    %cst_39 = arith.constant dense<0.000000e+00> : vector<8x8xf32>
    %84 = tpu.matmul %82, %83, %cst_39 {dimension_numbers = #tpu.dot_dimension_numbers<[1], [1], [0], [0], [0, 0, 1, 0], [], []>} : vector<8x8xbf16>, vector<8x8xbf16>, vector<8x8xf32> -> vector<8x8xf32>
    %cst_40 = arith.constant dense<0xFF800000> : vector<8xf32>
    %85 = vector.multi_reduction <maximumf>, %84, %cst_40 [1] : vector<8x8xf32> to vector<8xf32>
    %86 = vector.shape_cast %85 : vector<8xf32> to vector<8x1xf32>
    %87 = vector.broadcast %86 : vector<8x1xf32> to vector<8x8xf32>
    %88 = arith.subf %84, %87 : vector<8x8xf32>
    %89 = math.exp %88 : vector<8x8xf32>
    %cst_41 = arith.constant dense<0.000000e+00> : vector<8xf32>
    %90 = vector.multi_reduction <add>, %89, %cst_41 [1] : vector<8x8xf32> to vector<8xf32>
    %91 = vector.shape_cast %90 : vector<8xf32> to vector<8x1xf32>
    %92 = tpu.reciprocal %91 {approx = true} : vector<8x1xf32> -> vector<8x1xf32>
    %93 = vector.broadcast %92 : vector<8x1xf32> to vector<8x8xf32>
    %94 = arith.mulf %89, %93 : vector<8x8xf32>
    %95 = arith.truncf %94 : vector<8x8xf32> to vector<8x8xbf16>
    %96 = vector.extract_strided_slice %33 {offsets = [0, 24], sizes = [8, 8], strides = [1, 1]} : vector<8x32xbf16> to vector<8x8xbf16>
    %cst_42 = arith.constant dense<0.000000e+00> : vector<8x8xf32>
    %97 = tpu.matmul %95, %96, %cst_42 {dimension_numbers = #tpu.dot_dimension_numbers<[1], [0], [0], [1], [0, 0, 1, 1], [], []>} : vector<8x8xbf16>, vector<8x8xbf16>, vector<8x8xf32> -> vector<8x8xf32>
    %98 = tpu.concatenate %49, %65, %81, %97 in 1 : vector<8x8xf32>, vector<8x8xf32>, vector<8x8xf32>, vector<8x8xf32> -> vector<8x32xf32>
    %99 = vector.extract_strided_slice %26 {offsets = [8, 0], sizes = [8, 32], strides = [1, 1]} : vector<16x32xbf16> to vector<8x32xbf16>
    %100 = vector.extract_strided_slice %28 {offsets = [8, 0], sizes = [8, 32], strides = [1, 1]} : vector<16x32xbf16> to vector<8x32xbf16>
    %101 = vector.extract_strided_slice %30 {offsets = [8, 0], sizes = [8, 32], strides = [1, 1]} : vector<16x32xbf16> to vector<8x32xbf16>
    %102 = vector.extract_strided_slice %99 {offsets = [0, 0], sizes = [8, 8], strides = [1, 1]} : vector<8x32xbf16> to vector<8x8xbf16>
    %103 = vector.extract_strided_slice %100 {offsets = [0, 0], sizes = [8, 8], strides = [1, 1]} : vector<8x32xbf16> to vector<8x8xbf16>
    %cst_43 = arith.constant dense<0.000000e+00> : vector<8x8xf32>
    %104 = tpu.matmul %102, %103, %cst_43 {dimension_numbers = #tpu.dot_dimension_numbers<[1], [1], [0], [0], [0, 0, 1, 0], [], []>} : vector<8x8xbf16>, vector<8x8xbf16>, vector<8x8xf32> -> vector<8x8xf32>
    %cst_44 = arith.constant dense<0xFF800000> : vector<8xf32>
    %105 = vector.multi_reduction <maximumf>, %104, %cst_44 [1] : vector<8x8xf32> to vector<8xf32>
    %106 = vector.shape_cast %105 : vector<8xf32> to vector<8x1xf32>
    %107 = vector.broadcast %106 : vector<8x1xf32> to vector<8x8xf32>
    %108 = arith.subf %104, %107 : vector<8x8xf32>
    %109 = math.exp %108 : vector<8x8xf32>
    %cst_45 = arith.constant dense<0.000000e+00> : vector<8xf32>
    %110 = vector.multi_reduction <add>, %109, %cst_45 [1] : vector<8x8xf32> to vector<8xf32>
    %111 = vector.shape_cast %110 : vector<8xf32> to vector<8x1xf32>
    %112 = tpu.reciprocal %111 {approx = true} : vector<8x1xf32> -> vector<8x1xf32>
    %113 = vector.broadcast %112 : vector<8x1xf32> to vector<8x8xf32>
    %114 = arith.mulf %109, %113 : vector<8x8xf32>
    %115 = arith.truncf %114 : vector<8x8xf32> to vector<8x8xbf16>
    %116 = vector.extract_strided_slice %101 {offsets = [0, 0], sizes = [8, 8], strides = [1, 1]} : vector<8x32xbf16> to vector<8x8xbf16>
    %cst_46 = arith.constant dense<0.000000e+00> : vector<8x8xf32>
    %117 = tpu.matmul %115, %116, %cst_46 {dimension_numbers = #tpu.dot_dimension_numbers<[1], [0], [0], [1], [0, 0, 1, 1], [], []>} : vector<8x8xbf16>, vector<8x8xbf16>, vector<8x8xf32> -> vector<8x8xf32>
    %118 = vector.extract_strided_slice %99 {offsets = [0, 8], sizes = [8, 8], strides = [1, 1]} : vector<8x32xbf16> to vector<8x8xbf16>
    %119 = vector.extract_strided_slice %100 {offsets = [0, 8], sizes = [8, 8], strides = [1, 1]} : vector<8x32xbf16> to vector<8x8xbf16>
    %cst_47 = arith.constant dense<0.000000e+00> : vector<8x8xf32>
    %120 = tpu.matmul %118, %119, %cst_47 {dimension_numbers = #tpu.dot_dimension_numbers<[1], [1], [0], [0], [0, 0, 1, 0], [], []>} : vector<8x8xbf16>, vector<8x8xbf16>, vector<8x8xf32> -> vector<8x8xf32>
    %cst_48 = arith.constant dense<0xFF800000> : vector<8xf32>
    %121 = vector.multi_reduction <maximumf>, %120, %cst_48 [1] : vector<8x8xf32> to vector<8xf32>
    %122 = vector.shape_cast %121 : vector<8xf32> to vector<8x1xf32>
    %123 = vector.broadcast %122 : vector<8x1xf32> to vector<8x8xf32>
    %124 = arith.subf %120, %123 : vector<8x8xf32>
    %125 = math.exp %124 : vector<8x8xf32>
    %cst_49 = arith.constant dense<0.000000e+00> : vector<8xf32>
    %126 = vector.multi_reduction <add>, %125, %cst_49 [1] : vector<8x8xf32> to vector<8xf32>
    %127 = vector.shape_cast %126 : vector<8xf32> to vector<8x1xf32>
    %128 = tpu.reciprocal %127 {approx = true} : vector<8x1xf32> -> vector<8x1xf32>
    %129 = vector.broadcast %128 : vector<8x1xf32> to vector<8x8xf32>
    %130 = arith.mulf %125, %129 : vector<8x8xf32>
    %131 = arith.truncf %130 : vector<8x8xf32> to vector<8x8xbf16>
    %132 = vector.extract_strided_slice %101 {offsets = [0, 8], sizes = [8, 8], strides = [1, 1]} : vector<8x32xbf16> to vector<8x8xbf16>
    %cst_50 = arith.constant dense<0.000000e+00> : vector<8x8xf32>
    %133 = tpu.matmul %131, %132, %cst_50 {dimension_numbers = #tpu.dot_dimension_numbers<[1], [0], [0], [1], [0, 0, 1, 1], [], []>} : vector<8x8xbf16>, vector<8x8xbf16>, vector<8x8xf32> -> vector<8x8xf32>
    %134 = vector.extract_strided_slice %99 {offsets = [0, 16], sizes = [8, 8], strides = [1, 1]} : vector<8x32xbf16> to vector<8x8xbf16>
    %135 = vector.extract_strided_slice %100 {offsets = [0, 16], sizes = [8, 8], strides = [1, 1]} : vector<8x32xbf16> to vector<8x8xbf16>
    %cst_51 = arith.constant dense<0.000000e+00> : vector<8x8xf32>
    %136 = tpu.matmul %134, %135, %cst_51 {dimension_numbers = #tpu.dot_dimension_numbers<[1], [1], [0], [0], [0, 0, 1, 0], [], []>} : vector<8x8xbf16>, vector<8x8xbf16>, vector<8x8xf32> -> vector<8x8xf32>
    %cst_52 = arith.constant dense<0xFF800000> : vector<8xf32>
    %137 = vector.multi_reduction <maximumf>, %136, %cst_52 [1] : vector<8x8xf32> to vector<8xf32>
    %138 = vector.shape_cast %137 : vector<8xf32> to vector<8x1xf32>
    %139 = vector.broadcast %138 : vector<8x1xf32> to vector<8x8xf32>
    %140 = arith.subf %136, %139 : vector<8x8xf32>
    %141 = math.exp %140 : vector<8x8xf32>
    %cst_53 = arith.constant dense<0.000000e+00> : vector<8xf32>
    %142 = vector.multi_reduction <add>, %141, %cst_53 [1] : vector<8x8xf32> to vector<8xf32>
    %143 = vector.shape_cast %142 : vector<8xf32> to vector<8x1xf32>
    %144 = tpu.reciprocal %143 {approx = true} : vector<8x1xf32> -> vector<8x1xf32>
    %145 = vector.broadcast %144 : vector<8x1xf32> to vector<8x8xf32>
    %146 = arith.mulf %141, %145 : vector<8x8xf32>
    %147 = arith.truncf %146 : vector<8x8xf32> to vector<8x8xbf16>
    %148 = vector.extract_strided_slice %101 {offsets = [0, 16], sizes = [8, 8], strides = [1, 1]} : vector<8x32xbf16> to vector<8x8xbf16>
    %cst_54 = arith.constant dense<0.000000e+00> : vector<8x8xf32>
    %149 = tpu.matmul %147, %148, %cst_54 {dimension_numbers = #tpu.dot_dimension_numbers<[1], [0], [0], [1], [0, 0, 1, 1], [], []>} : vector<8x8xbf16>, vector<8x8xbf16>, vector<8x8xf32> -> vector<8x8xf32>
    %150 = vector.extract_strided_slice %99 {offsets = [0, 24], sizes = [8, 8], strides = [1, 1]} : vector<8x32xbf16> to vector<8x8xbf16>
    %151 = vector.extract_strided_slice %100 {offsets = [0, 24], sizes = [8, 8], strides = [1, 1]} : vector<8x32xbf16> to vector<8x8xbf16>
    %cst_55 = arith.constant dense<0.000000e+00> : vector<8x8xf32>
    %152 = tpu.matmul %150, %151, %cst_55 {dimension_numbers = #tpu.dot_dimension_numbers<[1], [1], [0], [0], [0, 0, 1, 0], [], []>} : vector<8x8xbf16>, vector<8x8xbf16>, vector<8x8xf32> -> vector<8x8xf32>
    %cst_56 = arith.constant dense<0xFF800000> : vector<8xf32>
    %153 = vector.multi_reduction <maximumf>, %152, %cst_56 [1] : vector<8x8xf32> to vector<8xf32>
    %154 = vector.shape_cast %153 : vector<8xf32> to vector<8x1xf32>
    %155 = vector.broadcast %154 : vector<8x1xf32> to vector<8x8xf32>
    %156 = arith.subf %152, %155 : vector<8x8xf32>
    %157 = math.exp %156 : vector<8x8xf32>
    %cst_57 = arith.constant dense<0.000000e+00> : vector<8xf32>
    %158 = vector.multi_reduction <add>, %157, %cst_57 [1] : vector<8x8xf32> to vector<8xf32>
    %159 = vector.shape_cast %158 : vector<8xf32> to vector<8x1xf32>
    %160 = tpu.reciprocal %159 {approx = true} : vector<8x1xf32> -> vector<8x1xf32>
    %161 = vector.broadcast %160 : vector<8x1xf32> to vector<8x8xf32>
    %162 = arith.mulf %157, %161 : vector<8x8xf32>
    %163 = arith.truncf %162 : vector<8x8xf32> to vector<8x8xbf16>
    %164 = vector.extract_strided_slice %101 {offsets = [0, 24], sizes = [8, 8], strides = [1, 1]} : vector<8x32xbf16> to vector<8x8xbf16>
    %cst_58 = arith.constant dense<0.000000e+00> : vector<8x8xf32>
    %165 = tpu.matmul %163, %164, %cst_58 {dimension_numbers = #tpu.dot_dimension_numbers<[1], [0], [0], [1], [0, 0, 1, 1], [], []>} : vector<8x8xbf16>, vector<8x8xbf16>, vector<8x8xf32> -> vector<8x8xf32>
    %166 = tpu.concatenate %117, %133, %149, %165 in 1 : vector<8x8xf32>, vector<8x8xf32>, vector<8x8xf32>, vector<8x8xf32> -> vector<8x32xf32>
    %167 = tpu.concatenate %98, %166 in 0 : vector<8x32xf32>, vector<8x32xf32> -> vector<16x32xf32>
    %168 = arith.truncf %167 : vector<16x32xf32> to vector<16x32xbf16>
    %cst_59 = arith.constant dense<0.000000e+00> : vector<16x32xf32>
    %169 = tpu.matmul %168, %12, %cst_59 {dimension_numbers = #tpu.dot_dimension_numbers<[1], [0], [0], [1], [0, 0, 1, 1], [], []>} : vector<16x32xbf16>, vector<32x32xbf16>, vector<16x32xf32> -> vector<16x32xf32>
    %170 = vector.extract_strided_slice %20 {offsets = [0, 0], sizes = [1, 32], strides = [1, 1]} : vector<6x32xf32> to vector<1x32xf32>
    %171 = vector.broadcast %170 : vector<1x32xf32> to vector<16x32xf32>
    %172 = arith.addf %169, %171 : vector<16x32xf32>
    %173 = arith.addf %6, %172 : vector<16x32xf32>
    %174 = vector.extract_strided_slice %20 {offsets = [1, 0], sizes = [1, 32], strides = [1, 1]} : vector<6x32xf32> to vector<1x32xf32>
    %175 = vector.extract_strided_slice %20 {offsets = [2, 0], sizes = [1, 32], strides = [1, 1]} : vector<6x32xf32> to vector<1x32xf32>
    %cst_60 = arith.constant dense<0.000000e+00> : vector<16xf32>
    %176 = vector.multi_reduction <add>, %173, %cst_60 [1] : vector<16x32xf32> to vector<16xf32>
    %177 = vector.shape_cast %176 : vector<16xf32> to vector<16x1xf32>
    %cst_61 = arith.constant 3.200000e+01 : f32
    %178 = vector.broadcast %cst_61 : f32 to vector<16x1xf32>
    %179 = arith.divf %177, %178 : vector<16x1xf32>
    %180 = vector.broadcast %179 : vector<16x1xf32> to vector<16x32xf32>
    %181 = arith.subf %173, %180 : vector<16x32xf32>
    %182 = arith.mulf %181, %181 : vector<16x32xf32>
    %cst_62 = arith.constant dense<0.000000e+00> : vector<16xf32>
    %183 = vector.multi_reduction <add>, %182, %cst_62 [1] : vector<16x32xf32> to vector<16xf32>
    %184 = vector.shape_cast %183 : vector<16xf32> to vector<16x1xf32>
    %cst_63 = arith.constant 3.200000e+01 : f32
    %185 = vector.broadcast %cst_63 : f32 to vector<16x1xf32>
    %186 = arith.divf %184, %185 : vector<16x1xf32>
    %187 = vector.broadcast %179 : vector<16x1xf32> to vector<16x32xf32>
    %188 = arith.subf %173, %187 : vector<16x32xf32>
    %cst_64 = arith.constant 9.99999974E-6 : f32
    %189 = vector.broadcast %cst_64 : f32 to vector<16x1xf32>
    %190 = arith.addf %186, %189 : vector<16x1xf32>
    %191 = math.rsqrt %190 : vector<16x1xf32>
    %192 = vector.broadcast %191 : vector<16x1xf32> to vector<16x32xf32>
    %193 = arith.mulf %188, %192 : vector<16x32xf32>
    %194 = vector.broadcast %174 : vector<1x32xf32> to vector<16x32xf32>
    %195 = arith.mulf %193, %194 : vector<16x32xf32>
    %196 = vector.broadcast %175 : vector<1x32xf32> to vector<16x32xf32>
    %197 = arith.addf %195, %196 : vector<16x32xf32>
    %198 = arith.truncf %197 : vector<16x32xf32> to vector<16x32xbf16>
    %cst_65 = arith.constant dense<0.000000e+00> : vector<16x64xf32>
    %199 = tpu.matmul %198, %14, %cst_65 {dimension_numbers = #tpu.dot_dimension_numbers<[1], [0], [0], [1], [0, 0, 1, 1], [], []>} : vector<16x32xbf16>, vector<32x64xbf16>, vector<16x64xf32> -> vector<16x64xf32>
    %200 = vector.broadcast %16 : vector<1x64xf32> to vector<16x64xf32>
    %201 = arith.addf %199, %200 : vector<16x64xf32>
    %cst_66 = arith.constant 0.000000e+00 : f32
    %202 = vector.broadcast %cst_66 : f32 to vector<16x64xf32>
    %203 = arith.maximumf %201, %202 : vector<16x64xf32>
    %204 = arith.truncf %203 : vector<16x64xf32> to vector<16x64xbf16>
    %cst_67 = arith.constant dense<0.000000e+00> : vector<16x32xf32>
    %205 = tpu.matmul %204, %18, %cst_67 {dimension_numbers = #tpu.dot_dimension_numbers<[1], [0], [0], [1], [0, 0, 1, 1], [], []>} : vector<16x64xbf16>, vector<64x32xbf16>, vector<16x32xf32> -> vector<16x32xf32>
    %206 = vector.extract_strided_slice %20 {offsets = [3, 0], sizes = [1, 32], strides = [1, 1]} : vector<6x32xf32> to vector<1x32xf32>
    %207 = vector.broadcast %206 : vector<1x32xf32> to vector<16x32xf32>
    %208 = arith.addf %205, %207 : vector<16x32xf32>
    %209 = arith.addf %197, %208 : vector<16x32xf32>
    %210 = vector.extract_strided_slice %20 {offsets = [4, 0], sizes = [1, 32], strides = [1, 1]} : vector<6x32xf32> to vector<1x32xf32>
    %211 = vector.extract_strided_slice %20 {offsets = [5, 0], sizes = [1, 32], strides = [1, 1]} : vector<6x32xf32> to vector<1x32xf32>
    %cst_68 = arith.constant dense<0.000000e+00> : vector<16xf32>
    %212 = vector.multi_reduction <add>, %209, %cst_68 [1] : vector<16x32xf32> to vector<16xf32>
    %213 = vector.shape_cast %212 : vector<16xf32> to vector<16x1xf32>
    %cst_69 = arith.constant 3.200000e+01 : f32
    %214 = vector.broadcast %cst_69 : f32 to vector<16x1xf32>
    %215 = arith.divf %213, %214 : vector<16x1xf32>
    %216 = vector.broadcast %215 : vector<16x1xf32> to vector<16x32xf32>
    %217 = arith.subf %209, %216 : vector<16x32xf32>
    %218 = arith.mulf %217, %217 : vector<16x32xf32>
    %cst_70 = arith.constant dense<0.000000e+00> : vector<16xf32>
    %219 = vector.multi_reduction <add>, %218, %cst_70 [1] : vector<16x32xf32> to vector<16xf32>
    %220 = vector.shape_cast %219 : vector<16xf32> to vector<16x1xf32>
    %cst_71 = arith.constant 3.200000e+01 : f32
    %221 = vector.broadcast %cst_71 : f32 to vector<16x1xf32>
    %222 = arith.divf %220, %221 : vector<16x1xf32>
    %223 = vector.broadcast %215 : vector<16x1xf32> to vector<16x32xf32>
    %224 = arith.subf %209, %223 : vector<16x32xf32>
    %cst_72 = arith.constant 9.99999974E-6 : f32
    %225 = vector.broadcast %cst_72 : f32 to vector<16x1xf32>
    %226 = arith.addf %222, %225 : vector<16x1xf32>
    %227 = math.rsqrt %226 : vector<16x1xf32>
    %228 = vector.broadcast %227 : vector<16x1xf32> to vector<16x32xf32>
    %229 = arith.mulf %224, %228 : vector<16x32xf32>
    %230 = vector.broadcast %210 : vector<1x32xf32> to vector<16x32xf32>
    %231 = arith.mulf %229, %230 : vector<16x32xf32>
    %232 = vector.broadcast %211 : vector<1x32xf32> to vector<16x32xf32>
    %233 = arith.addf %231, %232 : vector<16x32xf32>
    %c1 = arith.constant 1 : index
    %c0_73 = arith.constant 0 : index
    %c0_74 = arith.constant 0 : index
    %234 = vector.load %arg5[%c1, %c0_73, %c0_74] : memref<2x32x96xbf16, #tpu.memory_space<vmem>>, vector<1x32x96xbf16>
    %235 = vector.shape_cast %234 : vector<1x32x96xbf16> to vector<32x96xbf16>
    %c1_75 = arith.constant 1 : index
    %c0_76 = arith.constant 0 : index
    %c0_77 = arith.constant 0 : index
    %236 = vector.load %arg6[%c1_75, %c0_76, %c0_77] : memref<2x1x96xf32, #tpu.memory_space<vmem>>, vector<1x1x96xf32>
    %237 = vector.shape_cast %236 : vector<1x1x96xf32> to vector<1x96xf32>
    %c1_78 = arith.constant 1 : index
    %c0_79 = arith.constant 0 : index
    %c0_80 = arith.constant 0 : index
    %238 = vector.load %arg7[%c1_78, %c0_79, %c0_80] : memref<2x32x32xbf16, #tpu.memory_space<vmem>>, vector<1x32x32xbf16>
    %239 = vector.shape_cast %238 : vector<1x32x32xbf16> to vector<32x32xbf16>
    %c1_81 = arith.constant 1 : index
    %c0_82 = arith.constant 0 : index
    %c0_83 = arith.constant 0 : index
    %240 = vector.load %arg8[%c1_81, %c0_82, %c0_83] : memref<2x32x64xbf16, #tpu.memory_space<vmem>>, vector<1x32x64xbf16>
    %241 = vector.shape_cast %240 : vector<1x32x64xbf16> to vector<32x64xbf16>
    %c1_84 = arith.constant 1 : index
    %c0_85 = arith.constant 0 : index
    %c0_86 = arith.constant 0 : index
    %242 = vector.load %arg9[%c1_84, %c0_85, %c0_86] : memref<2x1x64xf32, #tpu.memory_space<vmem>>, vector<1x1x64xf32>
    %243 = vector.shape_cast %242 : vector<1x1x64xf32> to vector<1x64xf32>
    %c1_87 = arith.constant 1 : index
    %c0_88 = arith.constant 0 : index
    %c0_89 = arith.constant 0 : index
    %244 = vector.load %arg10[%c1_87, %c0_88, %c0_89] : memref<2x64x32xbf16, #tpu.memory_space<vmem>>, vector<1x64x32xbf16>
    %245 = vector.shape_cast %244 : vector<1x64x32xbf16> to vector<64x32xbf16>
    %c1_90 = arith.constant 1 : index
    %c0_91 = arith.constant 0 : index
    %c0_92 = arith.constant 0 : index
    %246 = vector.load %arg11[%c1_90, %c0_91, %c0_92] : memref<2x6x32xf32, #tpu.memory_space<vmem>>, vector<1x6x32xf32>
    %247 = vector.shape_cast %246 : vector<1x6x32xf32> to vector<6x32xf32>
    %248 = arith.truncf %233 : vector<16x32xf32> to vector<16x32xbf16>
    %cst_93 = arith.constant dense<0.000000e+00> : vector<16x96xf32>
    %249 = tpu.matmul %248, %235, %cst_93 {dimension_numbers = #tpu.dot_dimension_numbers<[1], [0], [0], [1], [0, 0, 1, 1], [], []>} : vector<16x32xbf16>, vector<32x96xbf16>, vector<16x96xf32> -> vector<16x96xf32>
    %250 = vector.broadcast %237 : vector<1x96xf32> to vector<16x96xf32>
    %251 = arith.addf %249, %250 : vector<16x96xf32>
    %252 = vector.extract_strided_slice %251 {offsets = [0, 0], sizes = [16, 32], strides = [1, 1]} : vector<16x96xf32> to vector<16x32xf32>
    %253 = arith.truncf %252 : vector<16x32xf32> to vector<16x32xbf16>
    %254 = vector.extract_strided_slice %251 {offsets = [0, 32], sizes = [16, 32], strides = [1, 1]} : vector<16x96xf32> to vector<16x32xf32>
    %255 = arith.truncf %254 : vector<16x32xf32> to vector<16x32xbf16>
    %256 = vector.extract_strided_slice %251 {offsets = [0, 64], sizes = [16, 32], strides = [1, 1]} : vector<16x96xf32> to vector<16x32xf32>
    %257 = arith.truncf %256 : vector<16x32xf32> to vector<16x32xbf16>
    %258 = vector.extract_strided_slice %253 {offsets = [0, 0], sizes = [8, 32], strides = [1, 1]} : vector<16x32xbf16> to vector<8x32xbf16>
    %259 = vector.extract_strided_slice %255 {offsets = [0, 0], sizes = [8, 32], strides = [1, 1]} : vector<16x32xbf16> to vector<8x32xbf16>
    %260 = vector.extract_strided_slice %257 {offsets = [0, 0], sizes = [8, 32], strides = [1, 1]} : vector<16x32xbf16> to vector<8x32xbf16>
    %261 = vector.extract_strided_slice %258 {offsets = [0, 0], sizes = [8, 8], strides = [1, 1]} : vector<8x32xbf16> to vector<8x8xbf16>
    %262 = vector.extract_strided_slice %259 {offsets = [0, 0], sizes = [8, 8], strides = [1, 1]} : vector<8x32xbf16> to vector<8x8xbf16>
    %cst_94 = arith.constant dense<0.000000e+00> : vector<8x8xf32>
    %263 = tpu.matmul %261, %262, %cst_94 {dimension_numbers = #tpu.dot_dimension_numbers<[1], [1], [0], [0], [0, 0, 1, 0], [], []>} : vector<8x8xbf16>, vector<8x8xbf16>, vector<8x8xf32> -> vector<8x8xf32>
    %cst_95 = arith.constant dense<0xFF800000> : vector<8xf32>
    %264 = vector.multi_reduction <maximumf>, %263, %cst_95 [1] : vector<8x8xf32> to vector<8xf32>
    %265 = vector.shape_cast %264 : vector<8xf32> to vector<8x1xf32>
    %266 = vector.broadcast %265 : vector<8x1xf32> to vector<8x8xf32>
    %267 = arith.subf %263, %266 : vector<8x8xf32>
    %268 = math.exp %267 : vector<8x8xf32>
    %cst_96 = arith.constant dense<0.000000e+00> : vector<8xf32>
    %269 = vector.multi_reduction <add>, %268, %cst_96 [1] : vector<8x8xf32> to vector<8xf32>
    %270 = vector.shape_cast %269 : vector<8xf32> to vector<8x1xf32>
    %271 = tpu.reciprocal %270 {approx = true} : vector<8x1xf32> -> vector<8x1xf32>
    %272 = vector.broadcast %271 : vector<8x1xf32> to vector<8x8xf32>
    %273 = arith.mulf %268, %272 : vector<8x8xf32>
    %274 = arith.truncf %273 : vector<8x8xf32> to vector<8x8xbf16>
    %275 = vector.extract_strided_slice %260 {offsets = [0, 0], sizes = [8, 8], strides = [1, 1]} : vector<8x32xbf16> to vector<8x8xbf16>
    %cst_97 = arith.constant dense<0.000000e+00> : vector<8x8xf32>
    %276 = tpu.matmul %274, %275, %cst_97 {dimension_numbers = #tpu.dot_dimension_numbers<[1], [0], [0], [1], [0, 0, 1, 1], [], []>} : vector<8x8xbf16>, vector<8x8xbf16>, vector<8x8xf32> -> vector<8x8xf32>
    %277 = vector.extract_strided_slice %258 {offsets = [0, 8], sizes = [8, 8], strides = [1, 1]} : vector<8x32xbf16> to vector<8x8xbf16>
    %278 = vector.extract_strided_slice %259 {offsets = [0, 8], sizes = [8, 8], strides = [1, 1]} : vector<8x32xbf16> to vector<8x8xbf16>
    %cst_98 = arith.constant dense<0.000000e+00> : vector<8x8xf32>
    %279 = tpu.matmul %277, %278, %cst_98 {dimension_numbers = #tpu.dot_dimension_numbers<[1], [1], [0], [0], [0, 0, 1, 0], [], []>} : vector<8x8xbf16>, vector<8x8xbf16>, vector<8x8xf32> -> vector<8x8xf32>
    %cst_99 = arith.constant dense<0xFF800000> : vector<8xf32>
    %280 = vector.multi_reduction <maximumf>, %279, %cst_99 [1] : vector<8x8xf32> to vector<8xf32>
    %281 = vector.shape_cast %280 : vector<8xf32> to vector<8x1xf32>
    %282 = vector.broadcast %281 : vector<8x1xf32> to vector<8x8xf32>
    %283 = arith.subf %279, %282 : vector<8x8xf32>
    %284 = math.exp %283 : vector<8x8xf32>
    %cst_100 = arith.constant dense<0.000000e+00> : vector<8xf32>
    %285 = vector.multi_reduction <add>, %284, %cst_100 [1] : vector<8x8xf32> to vector<8xf32>
    %286 = vector.shape_cast %285 : vector<8xf32> to vector<8x1xf32>
    %287 = tpu.reciprocal %286 {approx = true} : vector<8x1xf32> -> vector<8x1xf32>
    %288 = vector.broadcast %287 : vector<8x1xf32> to vector<8x8xf32>
    %289 = arith.mulf %284, %288 : vector<8x8xf32>
    %290 = arith.truncf %289 : vector<8x8xf32> to vector<8x8xbf16>
    %291 = vector.extract_strided_slice %260 {offsets = [0, 8], sizes = [8, 8], strides = [1, 1]} : vector<8x32xbf16> to vector<8x8xbf16>
    %cst_101 = arith.constant dense<0.000000e+00> : vector<8x8xf32>
    %292 = tpu.matmul %290, %291, %cst_101 {dimension_numbers = #tpu.dot_dimension_numbers<[1], [0], [0], [1], [0, 0, 1, 1], [], []>} : vector<8x8xbf16>, vector<8x8xbf16>, vector<8x8xf32> -> vector<8x8xf32>
    %293 = vector.extract_strided_slice %258 {offsets = [0, 16], sizes = [8, 8], strides = [1, 1]} : vector<8x32xbf16> to vector<8x8xbf16>
    %294 = vector.extract_strided_slice %259 {offsets = [0, 16], sizes = [8, 8], strides = [1, 1]} : vector<8x32xbf16> to vector<8x8xbf16>
    %cst_102 = arith.constant dense<0.000000e+00> : vector<8x8xf32>
    %295 = tpu.matmul %293, %294, %cst_102 {dimension_numbers = #tpu.dot_dimension_numbers<[1], [1], [0], [0], [0, 0, 1, 0], [], []>} : vector<8x8xbf16>, vector<8x8xbf16>, vector<8x8xf32> -> vector<8x8xf32>
    %cst_103 = arith.constant dense<0xFF800000> : vector<8xf32>
    %296 = vector.multi_reduction <maximumf>, %295, %cst_103 [1] : vector<8x8xf32> to vector<8xf32>
    %297 = vector.shape_cast %296 : vector<8xf32> to vector<8x1xf32>
    %298 = vector.broadcast %297 : vector<8x1xf32> to vector<8x8xf32>
    %299 = arith.subf %295, %298 : vector<8x8xf32>
    %300 = math.exp %299 : vector<8x8xf32>
    %cst_104 = arith.constant dense<0.000000e+00> : vector<8xf32>
    %301 = vector.multi_reduction <add>, %300, %cst_104 [1] : vector<8x8xf32> to vector<8xf32>
    %302 = vector.shape_cast %301 : vector<8xf32> to vector<8x1xf32>
    %303 = tpu.reciprocal %302 {approx = true} : vector<8x1xf32> -> vector<8x1xf32>
    %304 = vector.broadcast %303 : vector<8x1xf32> to vector<8x8xf32>
    %305 = arith.mulf %300, %304 : vector<8x8xf32>
    %306 = arith.truncf %305 : vector<8x8xf32> to vector<8x8xbf16>
    %307 = vector.extract_strided_slice %260 {offsets = [0, 16], sizes = [8, 8], strides = [1, 1]} : vector<8x32xbf16> to vector<8x8xbf16>
    %cst_105 = arith.constant dense<0.000000e+00> : vector<8x8xf32>
    %308 = tpu.matmul %306, %307, %cst_105 {dimension_numbers = #tpu.dot_dimension_numbers<[1], [0], [0], [1], [0, 0, 1, 1], [], []>} : vector<8x8xbf16>, vector<8x8xbf16>, vector<8x8xf32> -> vector<8x8xf32>
    %309 = vector.extract_strided_slice %258 {offsets = [0, 24], sizes = [8, 8], strides = [1, 1]} : vector<8x32xbf16> to vector<8x8xbf16>
    %310 = vector.extract_strided_slice %259 {offsets = [0, 24], sizes = [8, 8], strides = [1, 1]} : vector<8x32xbf16> to vector<8x8xbf16>
    %cst_106 = arith.constant dense<0.000000e+00> : vector<8x8xf32>
    %311 = tpu.matmul %309, %310, %cst_106 {dimension_numbers = #tpu.dot_dimension_numbers<[1], [1], [0], [0], [0, 0, 1, 0], [], []>} : vector<8x8xbf16>, vector<8x8xbf16>, vector<8x8xf32> -> vector<8x8xf32>
    %cst_107 = arith.constant dense<0xFF800000> : vector<8xf32>
    %312 = vector.multi_reduction <maximumf>, %311, %cst_107 [1] : vector<8x8xf32> to vector<8xf32>
    %313 = vector.shape_cast %312 : vector<8xf32> to vector<8x1xf32>
    %314 = vector.broadcast %313 : vector<8x1xf32> to vector<8x8xf32>
    %315 = arith.subf %311, %314 : vector<8x8xf32>
    %316 = math.exp %315 : vector<8x8xf32>
    %cst_108 = arith.constant dense<0.000000e+00> : vector<8xf32>
    %317 = vector.multi_reduction <add>, %316, %cst_108 [1] : vector<8x8xf32> to vector<8xf32>
    %318 = vector.shape_cast %317 : vector<8xf32> to vector<8x1xf32>
    %319 = tpu.reciprocal %318 {approx = true} : vector<8x1xf32> -> vector<8x1xf32>
    %320 = vector.broadcast %319 : vector<8x1xf32> to vector<8x8xf32>
    %321 = arith.mulf %316, %320 : vector<8x8xf32>
    %322 = arith.truncf %321 : vector<8x8xf32> to vector<8x8xbf16>
    %323 = vector.extract_strided_slice %260 {offsets = [0, 24], sizes = [8, 8], strides = [1, 1]} : vector<8x32xbf16> to vector<8x8xbf16>
    %cst_109 = arith.constant dense<0.000000e+00> : vector<8x8xf32>
    %324 = tpu.matmul %322, %323, %cst_109 {dimension_numbers = #tpu.dot_dimension_numbers<[1], [0], [0], [1], [0, 0, 1, 1], [], []>} : vector<8x8xbf16>, vector<8x8xbf16>, vector<8x8xf32> -> vector<8x8xf32>
    %325 = tpu.concatenate %276, %292, %308, %324 in 1 : vector<8x8xf32>, vector<8x8xf32>, vector<8x8xf32>, vector<8x8xf32> -> vector<8x32xf32>
    %326 = vector.extract_strided_slice %253 {offsets = [8, 0], sizes = [8, 32], strides = [1, 1]} : vector<16x32xbf16> to vector<8x32xbf16>
    %327 = vector.extract_strided_slice %255 {offsets = [8, 0], sizes = [8, 32], strides = [1, 1]} : vector<16x32xbf16> to vector<8x32xbf16>
    %328 = vector.extract_strided_slice %257 {offsets = [8, 0], sizes = [8, 32], strides = [1, 1]} : vector<16x32xbf16> to vector<8x32xbf16>
    %329 = vector.extract_strided_slice %326 {offsets = [0, 0], sizes = [8, 8], strides = [1, 1]} : vector<8x32xbf16> to vector<8x8xbf16>
    %330 = vector.extract_strided_slice %327 {offsets = [0, 0], sizes = [8, 8], strides = [1, 1]} : vector<8x32xbf16> to vector<8x8xbf16>
    %cst_110 = arith.constant dense<0.000000e+00> : vector<8x8xf32>
    %331 = tpu.matmul %329, %330, %cst_110 {dimension_numbers = #tpu.dot_dimension_numbers<[1], [1], [0], [0], [0, 0, 1, 0], [], []>} : vector<8x8xbf16>, vector<8x8xbf16>, vector<8x8xf32> -> vector<8x8xf32>
    %cst_111 = arith.constant dense<0xFF800000> : vector<8xf32>
    %332 = vector.multi_reduction <maximumf>, %331, %cst_111 [1] : vector<8x8xf32> to vector<8xf32>
    %333 = vector.shape_cast %332 : vector<8xf32> to vector<8x1xf32>
    %334 = vector.broadcast %333 : vector<8x1xf32> to vector<8x8xf32>
    %335 = arith.subf %331, %334 : vector<8x8xf32>
    %336 = math.exp %335 : vector<8x8xf32>
    %cst_112 = arith.constant dense<0.000000e+00> : vector<8xf32>
    %337 = vector.multi_reduction <add>, %336, %cst_112 [1] : vector<8x8xf32> to vector<8xf32>
    %338 = vector.shape_cast %337 : vector<8xf32> to vector<8x1xf32>
    %339 = tpu.reciprocal %338 {approx = true} : vector<8x1xf32> -> vector<8x1xf32>
    %340 = vector.broadcast %339 : vector<8x1xf32> to vector<8x8xf32>
    %341 = arith.mulf %336, %340 : vector<8x8xf32>
    %342 = arith.truncf %341 : vector<8x8xf32> to vector<8x8xbf16>
    %343 = vector.extract_strided_slice %328 {offsets = [0, 0], sizes = [8, 8], strides = [1, 1]} : vector<8x32xbf16> to vector<8x8xbf16>
    %cst_113 = arith.constant dense<0.000000e+00> : vector<8x8xf32>
    %344 = tpu.matmul %342, %343, %cst_113 {dimension_numbers = #tpu.dot_dimension_numbers<[1], [0], [0], [1], [0, 0, 1, 1], [], []>} : vector<8x8xbf16>, vector<8x8xbf16>, vector<8x8xf32> -> vector<8x8xf32>
    %345 = vector.extract_strided_slice %326 {offsets = [0, 8], sizes = [8, 8], strides = [1, 1]} : vector<8x32xbf16> to vector<8x8xbf16>
    %346 = vector.extract_strided_slice %327 {offsets = [0, 8], sizes = [8, 8], strides = [1, 1]} : vector<8x32xbf16> to vector<8x8xbf16>
    %cst_114 = arith.constant dense<0.000000e+00> : vector<8x8xf32>
    %347 = tpu.matmul %345, %346, %cst_114 {dimension_numbers = #tpu.dot_dimension_numbers<[1], [1], [0], [0], [0, 0, 1, 0], [], []>} : vector<8x8xbf16>, vector<8x8xbf16>, vector<8x8xf32> -> vector<8x8xf32>
    %cst_115 = arith.constant dense<0xFF800000> : vector<8xf32>
    %348 = vector.multi_reduction <maximumf>, %347, %cst_115 [1] : vector<8x8xf32> to vector<8xf32>
    %349 = vector.shape_cast %348 : vector<8xf32> to vector<8x1xf32>
    %350 = vector.broadcast %349 : vector<8x1xf32> to vector<8x8xf32>
    %351 = arith.subf %347, %350 : vector<8x8xf32>
    %352 = math.exp %351 : vector<8x8xf32>
    %cst_116 = arith.constant dense<0.000000e+00> : vector<8xf32>
    %353 = vector.multi_reduction <add>, %352, %cst_116 [1] : vector<8x8xf32> to vector<8xf32>
    %354 = vector.shape_cast %353 : vector<8xf32> to vector<8x1xf32>
    %355 = tpu.reciprocal %354 {approx = true} : vector<8x1xf32> -> vector<8x1xf32>
    %356 = vector.broadcast %355 : vector<8x1xf32> to vector<8x8xf32>
    %357 = arith.mulf %352, %356 : vector<8x8xf32>
    %358 = arith.truncf %357 : vector<8x8xf32> to vector<8x8xbf16>
    %359 = vector.extract_strided_slice %328 {offsets = [0, 8], sizes = [8, 8], strides = [1, 1]} : vector<8x32xbf16> to vector<8x8xbf16>
    %cst_117 = arith.constant dense<0.000000e+00> : vector<8x8xf32>
    %360 = tpu.matmul %358, %359, %cst_117 {dimension_numbers = #tpu.dot_dimension_numbers<[1], [0], [0], [1], [0, 0, 1, 1], [], []>} : vector<8x8xbf16>, vector<8x8xbf16>, vector<8x8xf32> -> vector<8x8xf32>
    %361 = vector.extract_strided_slice %326 {offsets = [0, 16], sizes = [8, 8], strides = [1, 1]} : vector<8x32xbf16> to vector<8x8xbf16>
    %362 = vector.extract_strided_slice %327 {offsets = [0, 16], sizes = [8, 8], strides = [1, 1]} : vector<8x32xbf16> to vector<8x8xbf16>
    %cst_118 = arith.constant dense<0.000000e+00> : vector<8x8xf32>
    %363 = tpu.matmul %361, %362, %cst_118 {dimension_numbers = #tpu.dot_dimension_numbers<[1], [1], [0], [0], [0, 0, 1, 0], [], []>} : vector<8x8xbf16>, vector<8x8xbf16>, vector<8x8xf32> -> vector<8x8xf32>
    %cst_119 = arith.constant dense<0xFF800000> : vector<8xf32>
    %364 = vector.multi_reduction <maximumf>, %363, %cst_119 [1] : vector<8x8xf32> to vector<8xf32>
    %365 = vector.shape_cast %364 : vector<8xf32> to vector<8x1xf32>
    %366 = vector.broadcast %365 : vector<8x1xf32> to vector<8x8xf32>
    %367 = arith.subf %363, %366 : vector<8x8xf32>
    %368 = math.exp %367 : vector<8x8xf32>
    %cst_120 = arith.constant dense<0.000000e+00> : vector<8xf32>
    %369 = vector.multi_reduction <add>, %368, %cst_120 [1] : vector<8x8xf32> to vector<8xf32>
    %370 = vector.shape_cast %369 : vector<8xf32> to vector<8x1xf32>
    %371 = tpu.reciprocal %370 {approx = true} : vector<8x1xf32> -> vector<8x1xf32>
    %372 = vector.broadcast %371 : vector<8x1xf32> to vector<8x8xf32>
    %373 = arith.mulf %368, %372 : vector<8x8xf32>
    %374 = arith.truncf %373 : vector<8x8xf32> to vector<8x8xbf16>
    %375 = vector.extract_strided_slice %328 {offsets = [0, 16], sizes = [8, 8], strides = [1, 1]} : vector<8x32xbf16> to vector<8x8xbf16>
    %cst_121 = arith.constant dense<0.000000e+00> : vector<8x8xf32>
    %376 = tpu.matmul %374, %375, %cst_121 {dimension_numbers = #tpu.dot_dimension_numbers<[1], [0], [0], [1], [0, 0, 1, 1], [], []>} : vector<8x8xbf16>, vector<8x8xbf16>, vector<8x8xf32> -> vector<8x8xf32>
    %377 = vector.extract_strided_slice %326 {offsets = [0, 24], sizes = [8, 8], strides = [1, 1]} : vector<8x32xbf16> to vector<8x8xbf16>
    %378 = vector.extract_strided_slice %327 {offsets = [0, 24], sizes = [8, 8], strides = [1, 1]} : vector<8x32xbf16> to vector<8x8xbf16>
    %cst_122 = arith.constant dense<0.000000e+00> : vector<8x8xf32>
    %379 = tpu.matmul %377, %378, %cst_122 {dimension_numbers = #tpu.dot_dimension_numbers<[1], [1], [0], [0], [0, 0, 1, 0], [], []>} : vector<8x8xbf16>, vector<8x8xbf16>, vector<8x8xf32> -> vector<8x8xf32>
    %cst_123 = arith.constant dense<0xFF800000> : vector<8xf32>
    %380 = vector.multi_reduction <maximumf>, %379, %cst_123 [1] : vector<8x8xf32> to vector<8xf32>
    %381 = vector.shape_cast %380 : vector<8xf32> to vector<8x1xf32>
    %382 = vector.broadcast %381 : vector<8x1xf32> to vector<8x8xf32>
    %383 = arith.subf %379, %382 : vector<8x8xf32>
    %384 = math.exp %383 : vector<8x8xf32>
    %cst_124 = arith.constant dense<0.000000e+00> : vector<8xf32>
    %385 = vector.multi_reduction <add>, %384, %cst_124 [1] : vector<8x8xf32> to vector<8xf32>
    %386 = vector.shape_cast %385 : vector<8xf32> to vector<8x1xf32>
    %387 = tpu.reciprocal %386 {approx = true} : vector<8x1xf32> -> vector<8x1xf32>
    %388 = vector.broadcast %387 : vector<8x1xf32> to vector<8x8xf32>
    %389 = arith.mulf %384, %388 : vector<8x8xf32>
    %390 = arith.truncf %389 : vector<8x8xf32> to vector<8x8xbf16>
    %391 = vector.extract_strided_slice %328 {offsets = [0, 24], sizes = [8, 8], strides = [1, 1]} : vector<8x32xbf16> to vector<8x8xbf16>
    %cst_125 = arith.constant dense<0.000000e+00> : vector<8x8xf32>
    %392 = tpu.matmul %390, %391, %cst_125 {dimension_numbers = #tpu.dot_dimension_numbers<[1], [0], [0], [1], [0, 0, 1, 1], [], []>} : vector<8x8xbf16>, vector<8x8xbf16>, vector<8x8xf32> -> vector<8x8xf32>
    %393 = tpu.concatenate %344, %360, %376, %392 in 1 : vector<8x8xf32>, vector<8x8xf32>, vector<8x8xf32>, vector<8x8xf32> -> vector<8x32xf32>
    %394 = tpu.concatenate %325, %393 in 0 : vector<8x32xf32>, vector<8x32xf32> -> vector<16x32xf32>
    %395 = arith.truncf %394 : vector<16x32xf32> to vector<16x32xbf16>
    %cst_126 = arith.constant dense<0.000000e+00> : vector<16x32xf32>
    %396 = tpu.matmul %395, %239, %cst_126 {dimension_numbers = #tpu.dot_dimension_numbers<[1], [0], [0], [1], [0, 0, 1, 1], [], []>} : vector<16x32xbf16>, vector<32x32xbf16>, vector<16x32xf32> -> vector<16x32xf32>
    %397 = vector.extract_strided_slice %247 {offsets = [0, 0], sizes = [1, 32], strides = [1, 1]} : vector<6x32xf32> to vector<1x32xf32>
    %398 = vector.broadcast %397 : vector<1x32xf32> to vector<16x32xf32>
    %399 = arith.addf %396, %398 : vector<16x32xf32>
    %400 = arith.addf %233, %399 : vector<16x32xf32>
    %401 = vector.extract_strided_slice %247 {offsets = [1, 0], sizes = [1, 32], strides = [1, 1]} : vector<6x32xf32> to vector<1x32xf32>
    %402 = vector.extract_strided_slice %247 {offsets = [2, 0], sizes = [1, 32], strides = [1, 1]} : vector<6x32xf32> to vector<1x32xf32>
    %cst_127 = arith.constant dense<0.000000e+00> : vector<16xf32>
    %403 = vector.multi_reduction <add>, %400, %cst_127 [1] : vector<16x32xf32> to vector<16xf32>
    %404 = vector.shape_cast %403 : vector<16xf32> to vector<16x1xf32>
    %cst_128 = arith.constant 3.200000e+01 : f32
    %405 = vector.broadcast %cst_128 : f32 to vector<16x1xf32>
    %406 = arith.divf %404, %405 : vector<16x1xf32>
    %407 = vector.broadcast %406 : vector<16x1xf32> to vector<16x32xf32>
    %408 = arith.subf %400, %407 : vector<16x32xf32>
    %409 = arith.mulf %408, %408 : vector<16x32xf32>
    %cst_129 = arith.constant dense<0.000000e+00> : vector<16xf32>
    %410 = vector.multi_reduction <add>, %409, %cst_129 [1] : vector<16x32xf32> to vector<16xf32>
    %411 = vector.shape_cast %410 : vector<16xf32> to vector<16x1xf32>
    %cst_130 = arith.constant 3.200000e+01 : f32
    %412 = vector.broadcast %cst_130 : f32 to vector<16x1xf32>
    %413 = arith.divf %411, %412 : vector<16x1xf32>
    %414 = vector.broadcast %406 : vector<16x1xf32> to vector<16x32xf32>
    %415 = arith.subf %400, %414 : vector<16x32xf32>
    %cst_131 = arith.constant 9.99999974E-6 : f32
    %416 = vector.broadcast %cst_131 : f32 to vector<16x1xf32>
    %417 = arith.addf %413, %416 : vector<16x1xf32>
    %418 = math.rsqrt %417 : vector<16x1xf32>
    %419 = vector.broadcast %418 : vector<16x1xf32> to vector<16x32xf32>
    %420 = arith.mulf %415, %419 : vector<16x32xf32>
    %421 = vector.broadcast %401 : vector<1x32xf32> to vector<16x32xf32>
    %422 = arith.mulf %420, %421 : vector<16x32xf32>
    %423 = vector.broadcast %402 : vector<1x32xf32> to vector<16x32xf32>
    %424 = arith.addf %422, %423 : vector<16x32xf32>
    %425 = arith.truncf %424 : vector<16x32xf32> to vector<16x32xbf16>
    %cst_132 = arith.constant dense<0.000000e+00> : vector<16x64xf32>
    %426 = tpu.matmul %425, %241, %cst_132 {dimension_numbers = #tpu.dot_dimension_numbers<[1], [0], [0], [1], [0, 0, 1, 1], [], []>} : vector<16x32xbf16>, vector<32x64xbf16>, vector<16x64xf32> -> vector<16x64xf32>
    %427 = vector.broadcast %243 : vector<1x64xf32> to vector<16x64xf32>
    %428 = arith.addf %426, %427 : vector<16x64xf32>
    %cst_133 = arith.constant 0.000000e+00 : f32
    %429 = vector.broadcast %cst_133 : f32 to vector<16x64xf32>
    %430 = arith.maximumf %428, %429 : vector<16x64xf32>
    %431 = arith.truncf %430 : vector<16x64xf32> to vector<16x64xbf16>
    %cst_134 = arith.constant dense<0.000000e+00> : vector<16x32xf32>
    %432 = tpu.matmul %431, %245, %cst_134 {dimension_numbers = #tpu.dot_dimension_numbers<[1], [0], [0], [1], [0, 0, 1, 1], [], []>} : vector<16x64xbf16>, vector<64x32xbf16>, vector<16x32xf32> -> vector<16x32xf32>
    %433 = vector.extract_strided_slice %247 {offsets = [3, 0], sizes = [1, 32], strides = [1, 1]} : vector<6x32xf32> to vector<1x32xf32>
    %434 = vector.broadcast %433 : vector<1x32xf32> to vector<16x32xf32>
    %435 = arith.addf %432, %434 : vector<16x32xf32>
    %436 = arith.addf %424, %435 : vector<16x32xf32>
    %437 = vector.extract_strided_slice %247 {offsets = [4, 0], sizes = [1, 32], strides = [1, 1]} : vector<6x32xf32> to vector<1x32xf32>
    %438 = vector.extract_strided_slice %247 {offsets = [5, 0], sizes = [1, 32], strides = [1, 1]} : vector<6x32xf32> to vector<1x32xf32>
    %cst_135 = arith.constant dense<0.000000e+00> : vector<16xf32>
    %439 = vector.multi_reduction <add>, %436, %cst_135 [1] : vector<16x32xf32> to vector<16xf32>
    %440 = vector.shape_cast %439 : vector<16xf32> to vector<16x1xf32>
    %cst_136 = arith.constant 3.200000e+01 : f32
    %441 = vector.broadcast %cst_136 : f32 to vector<16x1xf32>
    %442 = arith.divf %440, %441 : vector<16x1xf32>
    %443 = vector.broadcast %442 : vector<16x1xf32> to vector<16x32xf32>
    %444 = arith.subf %436, %443 : vector<16x32xf32>
    %445 = arith.mulf %444, %444 : vector<16x32xf32>
    %cst_137 = arith.constant dense<0.000000e+00> : vector<16xf32>
    %446 = vector.multi_reduction <add>, %445, %cst_137 [1] : vector<16x32xf32> to vector<16xf32>
    %447 = vector.shape_cast %446 : vector<16xf32> to vector<16x1xf32>
    %cst_138 = arith.constant 3.200000e+01 : f32
    %448 = vector.broadcast %cst_138 : f32 to vector<16x1xf32>
    %449 = arith.divf %447, %448 : vector<16x1xf32>
    %450 = vector.broadcast %442 : vector<16x1xf32> to vector<16x32xf32>
    %451 = arith.subf %436, %450 : vector<16x32xf32>
    %cst_139 = arith.constant 9.99999974E-6 : f32
    %452 = vector.broadcast %cst_139 : f32 to vector<16x1xf32>
    %453 = arith.addf %449, %452 : vector<16x1xf32>
    %454 = math.rsqrt %453 : vector<16x1xf32>
    %455 = vector.broadcast %454 : vector<16x1xf32> to vector<16x32xf32>
    %456 = arith.mulf %451, %455 : vector<16x32xf32>
    %457 = vector.broadcast %437 : vector<1x32xf32> to vector<16x32xf32>
    %458 = arith.mulf %456, %457 : vector<16x32xf32>
    %459 = vector.broadcast %438 : vector<1x32xf32> to vector<16x32xf32>
    %460 = arith.addf %458, %459 : vector<16x32xf32>
    %c0_140 = arith.constant 0 : index
    %c0_141 = arith.constant 0 : index
    %461 = vector.load %arg2[%c0_140, %c0_141] : memref<16x16xf32, #tpu.memory_space<vmem>>, vector<16x16xf32>
    %462 = arith.truncf %461 : vector<16x16xf32> to vector<16x16xbf16>
    %c0_142 = arith.constant 0 : index
    %c0_143 = arith.constant 0 : index
    %463 = vector.load %arg12[%c0_142, %c0_143] : memref<16x32xbf16, #tpu.memory_space<vmem>>, vector<16x32xbf16>
    %cst_144 = arith.constant dense<0.000000e+00> : vector<16x32xf32>
    %464 = tpu.matmul %462, %463, %cst_144 {dimension_numbers = #tpu.dot_dimension_numbers<[1], [0], [0], [1], [0, 0, 1, 1], [], []>} : vector<16x16xbf16>, vector<16x32xbf16>, vector<16x32xf32> -> vector<16x32xf32>
    %c0_145 = arith.constant 0 : index
    %c0_146 = arith.constant 0 : index
    %465 = vector.load %arg13[%c0_145, %c0_146] : memref<1x32xf32, #tpu.memory_space<vmem>>, vector<1x32xf32>
    %466 = vector.broadcast %465 : vector<1x32xf32> to vector<16x32xf32>
    %467 = arith.addf %464, %466 : vector<16x32xf32>
    %c0_147 = arith.constant 0 : index
    %c0_148 = arith.constant 0 : index
    %c0_149 = arith.constant 0 : index
    %468 = vector.load %arg14[%c0_147, %c0_148, %c0_149] : memref<2x32x96xbf16, #tpu.memory_space<vmem>>, vector<1x32x96xbf16>
    %469 = vector.shape_cast %468 : vector<1x32x96xbf16> to vector<32x96xbf16>
    %c0_150 = arith.constant 0 : index
    %c0_151 = arith.constant 0 : index
    %c0_152 = arith.constant 0 : index
    %470 = vector.load %arg15[%c0_150, %c0_151, %c0_152] : memref<2x1x96xf32, #tpu.memory_space<vmem>>, vector<1x1x96xf32>
    %471 = vector.shape_cast %470 : vector<1x1x96xf32> to vector<1x96xf32>
    %c0_153 = arith.constant 0 : index
    %c0_154 = arith.constant 0 : index
    %c0_155 = arith.constant 0 : index
    %472 = vector.load %arg16[%c0_153, %c0_154, %c0_155] : memref<2x32x32xbf16, #tpu.memory_space<vmem>>, vector<1x32x32xbf16>
    %473 = vector.shape_cast %472 : vector<1x32x32xbf16> to vector<32x32xbf16>
    %c0_156 = arith.constant 0 : index
    %c0_157 = arith.constant 0 : index
    %c0_158 = arith.constant 0 : index
    %474 = vector.load %arg17[%c0_156, %c0_157, %c0_158] : memref<2x32x64xbf16, #tpu.memory_space<vmem>>, vector<1x32x64xbf16>
    %475 = vector.shape_cast %474 : vector<1x32x64xbf16> to vector<32x64xbf16>
    %c0_159 = arith.constant 0 : index
    %c0_160 = arith.constant 0 : index
    %c0_161 = arith.constant 0 : index
    %476 = vector.load %arg18[%c0_159, %c0_160, %c0_161] : memref<2x1x64xf32, #tpu.memory_space<vmem>>, vector<1x1x64xf32>
    %477 = vector.shape_cast %476 : vector<1x1x64xf32> to vector<1x64xf32>
    %c0_162 = arith.constant 0 : index
    %c0_163 = arith.constant 0 : index
    %c0_164 = arith.constant 0 : index
    %478 = vector.load %arg19[%c0_162, %c0_163, %c0_164] : memref<2x64x32xbf16, #tpu.memory_space<vmem>>, vector<1x64x32xbf16>
    %479 = vector.shape_cast %478 : vector<1x64x32xbf16> to vector<64x32xbf16>
    %c0_165 = arith.constant 0 : index
    %c0_166 = arith.constant 0 : index
    %c0_167 = arith.constant 0 : index
    %480 = vector.load %arg20[%c0_165, %c0_166, %c0_167] : memref<2x6x32xf32, #tpu.memory_space<vmem>>, vector<1x6x32xf32>
    %481 = vector.shape_cast %480 : vector<1x6x32xf32> to vector<6x32xf32>
    %482 = arith.truncf %467 : vector<16x32xf32> to vector<16x32xbf16>
    %cst_168 = arith.constant dense<0.000000e+00> : vector<16x96xf32>
    %483 = tpu.matmul %482, %469, %cst_168 {dimension_numbers = #tpu.dot_dimension_numbers<[1], [0], [0], [1], [0, 0, 1, 1], [], []>} : vector<16x32xbf16>, vector<32x96xbf16>, vector<16x96xf32> -> vector<16x96xf32>
    %484 = vector.broadcast %471 : vector<1x96xf32> to vector<16x96xf32>
    %485 = arith.addf %483, %484 : vector<16x96xf32>
    %486 = vector.extract_strided_slice %485 {offsets = [0, 0], sizes = [16, 32], strides = [1, 1]} : vector<16x96xf32> to vector<16x32xf32>
    %487 = arith.truncf %486 : vector<16x32xf32> to vector<16x32xbf16>
    %488 = vector.extract_strided_slice %485 {offsets = [0, 32], sizes = [16, 32], strides = [1, 1]} : vector<16x96xf32> to vector<16x32xf32>
    %489 = arith.truncf %488 : vector<16x32xf32> to vector<16x32xbf16>
    %490 = vector.extract_strided_slice %485 {offsets = [0, 64], sizes = [16, 32], strides = [1, 1]} : vector<16x96xf32> to vector<16x32xf32>
    %491 = arith.truncf %490 : vector<16x32xf32> to vector<16x32xbf16>
    %492 = vector.extract_strided_slice %487 {offsets = [0, 0], sizes = [8, 32], strides = [1, 1]} : vector<16x32xbf16> to vector<8x32xbf16>
    %493 = vector.extract_strided_slice %489 {offsets = [0, 0], sizes = [8, 32], strides = [1, 1]} : vector<16x32xbf16> to vector<8x32xbf16>
    %494 = vector.extract_strided_slice %491 {offsets = [0, 0], sizes = [8, 32], strides = [1, 1]} : vector<16x32xbf16> to vector<8x32xbf16>
    %495 = vector.extract_strided_slice %492 {offsets = [0, 0], sizes = [8, 8], strides = [1, 1]} : vector<8x32xbf16> to vector<8x8xbf16>
    %496 = vector.extract_strided_slice %493 {offsets = [0, 0], sizes = [8, 8], strides = [1, 1]} : vector<8x32xbf16> to vector<8x8xbf16>
    %cst_169 = arith.constant dense<0.000000e+00> : vector<8x8xf32>
    %497 = tpu.matmul %495, %496, %cst_169 {dimension_numbers = #tpu.dot_dimension_numbers<[1], [1], [0], [0], [0, 0, 1, 0], [], []>} : vector<8x8xbf16>, vector<8x8xbf16>, vector<8x8xf32> -> vector<8x8xf32>
    %cst_170 = arith.constant dense<0xFF800000> : vector<8xf32>
    %498 = vector.multi_reduction <maximumf>, %497, %cst_170 [1] : vector<8x8xf32> to vector<8xf32>
    %499 = vector.shape_cast %498 : vector<8xf32> to vector<8x1xf32>
    %500 = vector.broadcast %499 : vector<8x1xf32> to vector<8x8xf32>
    %501 = arith.subf %497, %500 : vector<8x8xf32>
    %502 = math.exp %501 : vector<8x8xf32>
    %cst_171 = arith.constant dense<0.000000e+00> : vector<8xf32>
    %503 = vector.multi_reduction <add>, %502, %cst_171 [1] : vector<8x8xf32> to vector<8xf32>
    %504 = vector.shape_cast %503 : vector<8xf32> to vector<8x1xf32>
    %505 = tpu.reciprocal %504 {approx = true} : vector<8x1xf32> -> vector<8x1xf32>
    %506 = vector.broadcast %505 : vector<8x1xf32> to vector<8x8xf32>
    %507 = arith.mulf %502, %506 : vector<8x8xf32>
    %508 = arith.truncf %507 : vector<8x8xf32> to vector<8x8xbf16>
    %509 = vector.extract_strided_slice %494 {offsets = [0, 0], sizes = [8, 8], strides = [1, 1]} : vector<8x32xbf16> to vector<8x8xbf16>
    %cst_172 = arith.constant dense<0.000000e+00> : vector<8x8xf32>
    %510 = tpu.matmul %508, %509, %cst_172 {dimension_numbers = #tpu.dot_dimension_numbers<[1], [0], [0], [1], [0, 0, 1, 1], [], []>} : vector<8x8xbf16>, vector<8x8xbf16>, vector<8x8xf32> -> vector<8x8xf32>
    %511 = vector.extract_strided_slice %492 {offsets = [0, 8], sizes = [8, 8], strides = [1, 1]} : vector<8x32xbf16> to vector<8x8xbf16>
    %512 = vector.extract_strided_slice %493 {offsets = [0, 8], sizes = [8, 8], strides = [1, 1]} : vector<8x32xbf16> to vector<8x8xbf16>
    %cst_173 = arith.constant dense<0.000000e+00> : vector<8x8xf32>
    %513 = tpu.matmul %511, %512, %cst_173 {dimension_numbers = #tpu.dot_dimension_numbers<[1], [1], [0], [0], [0, 0, 1, 0], [], []>} : vector<8x8xbf16>, vector<8x8xbf16>, vector<8x8xf32> -> vector<8x8xf32>
    %cst_174 = arith.constant dense<0xFF800000> : vector<8xf32>
    %514 = vector.multi_reduction <maximumf>, %513, %cst_174 [1] : vector<8x8xf32> to vector<8xf32>
    %515 = vector.shape_cast %514 : vector<8xf32> to vector<8x1xf32>
    %516 = vector.broadcast %515 : vector<8x1xf32> to vector<8x8xf32>
    %517 = arith.subf %513, %516 : vector<8x8xf32>
    %518 = math.exp %517 : vector<8x8xf32>
    %cst_175 = arith.constant dense<0.000000e+00> : vector<8xf32>
    %519 = vector.multi_reduction <add>, %518, %cst_175 [1] : vector<8x8xf32> to vector<8xf32>
    %520 = vector.shape_cast %519 : vector<8xf32> to vector<8x1xf32>
    %521 = tpu.reciprocal %520 {approx = true} : vector<8x1xf32> -> vector<8x1xf32>
    %522 = vector.broadcast %521 : vector<8x1xf32> to vector<8x8xf32>
    %523 = arith.mulf %518, %522 : vector<8x8xf32>
    %524 = arith.truncf %523 : vector<8x8xf32> to vector<8x8xbf16>
    %525 = vector.extract_strided_slice %494 {offsets = [0, 8], sizes = [8, 8], strides = [1, 1]} : vector<8x32xbf16> to vector<8x8xbf16>
    %cst_176 = arith.constant dense<0.000000e+00> : vector<8x8xf32>
    %526 = tpu.matmul %524, %525, %cst_176 {dimension_numbers = #tpu.dot_dimension_numbers<[1], [0], [0], [1], [0, 0, 1, 1], [], []>} : vector<8x8xbf16>, vector<8x8xbf16>, vector<8x8xf32> -> vector<8x8xf32>
    %527 = vector.extract_strided_slice %492 {offsets = [0, 16], sizes = [8, 8], strides = [1, 1]} : vector<8x32xbf16> to vector<8x8xbf16>
    %528 = vector.extract_strided_slice %493 {offsets = [0, 16], sizes = [8, 8], strides = [1, 1]} : vector<8x32xbf16> to vector<8x8xbf16>
    %cst_177 = arith.constant dense<0.000000e+00> : vector<8x8xf32>
    %529 = tpu.matmul %527, %528, %cst_177 {dimension_numbers = #tpu.dot_dimension_numbers<[1], [1], [0], [0], [0, 0, 1, 0], [], []>} : vector<8x8xbf16>, vector<8x8xbf16>, vector<8x8xf32> -> vector<8x8xf32>
    %cst_178 = arith.constant dense<0xFF800000> : vector<8xf32>
    %530 = vector.multi_reduction <maximumf>, %529, %cst_178 [1] : vector<8x8xf32> to vector<8xf32>
    %531 = vector.shape_cast %530 : vector<8xf32> to vector<8x1xf32>
    %532 = vector.broadcast %531 : vector<8x1xf32> to vector<8x8xf32>
    %533 = arith.subf %529, %532 : vector<8x8xf32>
    %534 = math.exp %533 : vector<8x8xf32>
    %cst_179 = arith.constant dense<0.000000e+00> : vector<8xf32>
    %535 = vector.multi_reduction <add>, %534, %cst_179 [1] : vector<8x8xf32> to vector<8xf32>
    %536 = vector.shape_cast %535 : vector<8xf32> to vector<8x1xf32>
    %537 = tpu.reciprocal %536 {approx = true} : vector<8x1xf32> -> vector<8x1xf32>
    %538 = vector.broadcast %537 : vector<8x1xf32> to vector<8x8xf32>
    %539 = arith.mulf %534, %538 : vector<8x8xf32>
    %540 = arith.truncf %539 : vector<8x8xf32> to vector<8x8xbf16>
    %541 = vector.extract_strided_slice %494 {offsets = [0, 16], sizes = [8, 8], strides = [1, 1]} : vector<8x32xbf16> to vector<8x8xbf16>
    %cst_180 = arith.constant dense<0.000000e+00> : vector<8x8xf32>
    %542 = tpu.matmul %540, %541, %cst_180 {dimension_numbers = #tpu.dot_dimension_numbers<[1], [0], [0], [1], [0, 0, 1, 1], [], []>} : vector<8x8xbf16>, vector<8x8xbf16>, vector<8x8xf32> -> vector<8x8xf32>
    %543 = vector.extract_strided_slice %492 {offsets = [0, 24], sizes = [8, 8], strides = [1, 1]} : vector<8x32xbf16> to vector<8x8xbf16>
    %544 = vector.extract_strided_slice %493 {offsets = [0, 24], sizes = [8, 8], strides = [1, 1]} : vector<8x32xbf16> to vector<8x8xbf16>
    %cst_181 = arith.constant dense<0.000000e+00> : vector<8x8xf32>
    %545 = tpu.matmul %543, %544, %cst_181 {dimension_numbers = #tpu.dot_dimension_numbers<[1], [1], [0], [0], [0, 0, 1, 0], [], []>} : vector<8x8xbf16>, vector<8x8xbf16>, vector<8x8xf32> -> vector<8x8xf32>
    %cst_182 = arith.constant dense<0xFF800000> : vector<8xf32>
    %546 = vector.multi_reduction <maximumf>, %545, %cst_182 [1] : vector<8x8xf32> to vector<8xf32>
    %547 = vector.shape_cast %546 : vector<8xf32> to vector<8x1xf32>
    %548 = vector.broadcast %547 : vector<8x1xf32> to vector<8x8xf32>
    %549 = arith.subf %545, %548 : vector<8x8xf32>
    %550 = math.exp %549 : vector<8x8xf32>
    %cst_183 = arith.constant dense<0.000000e+00> : vector<8xf32>
    %551 = vector.multi_reduction <add>, %550, %cst_183 [1] : vector<8x8xf32> to vector<8xf32>
    %552 = vector.shape_cast %551 : vector<8xf32> to vector<8x1xf32>
    %553 = tpu.reciprocal %552 {approx = true} : vector<8x1xf32> -> vector<8x1xf32>
    %554 = vector.broadcast %553 : vector<8x1xf32> to vector<8x8xf32>
    %555 = arith.mulf %550, %554 : vector<8x8xf32>
    %556 = arith.truncf %555 : vector<8x8xf32> to vector<8x8xbf16>
    %557 = vector.extract_strided_slice %494 {offsets = [0, 24], sizes = [8, 8], strides = [1, 1]} : vector<8x32xbf16> to vector<8x8xbf16>
    %cst_184 = arith.constant dense<0.000000e+00> : vector<8x8xf32>
    %558 = tpu.matmul %556, %557, %cst_184 {dimension_numbers = #tpu.dot_dimension_numbers<[1], [0], [0], [1], [0, 0, 1, 1], [], []>} : vector<8x8xbf16>, vector<8x8xbf16>, vector<8x8xf32> -> vector<8x8xf32>
    %559 = tpu.concatenate %510, %526, %542, %558 in 1 : vector<8x8xf32>, vector<8x8xf32>, vector<8x8xf32>, vector<8x8xf32> -> vector<8x32xf32>
    %560 = vector.extract_strided_slice %487 {offsets = [8, 0], sizes = [8, 32], strides = [1, 1]} : vector<16x32xbf16> to vector<8x32xbf16>
    %561 = vector.extract_strided_slice %489 {offsets = [8, 0], sizes = [8, 32], strides = [1, 1]} : vector<16x32xbf16> to vector<8x32xbf16>
    %562 = vector.extract_strided_slice %491 {offsets = [8, 0], sizes = [8, 32], strides = [1, 1]} : vector<16x32xbf16> to vector<8x32xbf16>
    %563 = vector.extract_strided_slice %560 {offsets = [0, 0], sizes = [8, 8], strides = [1, 1]} : vector<8x32xbf16> to vector<8x8xbf16>
    %564 = vector.extract_strided_slice %561 {offsets = [0, 0], sizes = [8, 8], strides = [1, 1]} : vector<8x32xbf16> to vector<8x8xbf16>
    %cst_185 = arith.constant dense<0.000000e+00> : vector<8x8xf32>
    %565 = tpu.matmul %563, %564, %cst_185 {dimension_numbers = #tpu.dot_dimension_numbers<[1], [1], [0], [0], [0, 0, 1, 0], [], []>} : vector<8x8xbf16>, vector<8x8xbf16>, vector<8x8xf32> -> vector<8x8xf32>
    %cst_186 = arith.constant dense<0xFF800000> : vector<8xf32>
    %566 = vector.multi_reduction <maximumf>, %565, %cst_186 [1] : vector<8x8xf32> to vector<8xf32>
    %567 = vector.shape_cast %566 : vector<8xf32> to vector<8x1xf32>
    %568 = vector.broadcast %567 : vector<8x1xf32> to vector<8x8xf32>
    %569 = arith.subf %565, %568 : vector<8x8xf32>
    %570 = math.exp %569 : vector<8x8xf32>
    %cst_187 = arith.constant dense<0.000000e+00> : vector<8xf32>
    %571 = vector.multi_reduction <add>, %570, %cst_187 [1] : vector<8x8xf32> to vector<8xf32>
    %572 = vector.shape_cast %571 : vector<8xf32> to vector<8x1xf32>
    %573 = tpu.reciprocal %572 {approx = true} : vector<8x1xf32> -> vector<8x1xf32>
    %574 = vector.broadcast %573 : vector<8x1xf32> to vector<8x8xf32>
    %575 = arith.mulf %570, %574 : vector<8x8xf32>
    %576 = arith.truncf %575 : vector<8x8xf32> to vector<8x8xbf16>
    %577 = vector.extract_strided_slice %562 {offsets = [0, 0], sizes = [8, 8], strides = [1, 1]} : vector<8x32xbf16> to vector<8x8xbf16>
    %cst_188 = arith.constant dense<0.000000e+00> : vector<8x8xf32>
    %578 = tpu.matmul %576, %577, %cst_188 {dimension_numbers = #tpu.dot_dimension_numbers<[1], [0], [0], [1], [0, 0, 1, 1], [], []>} : vector<8x8xbf16>, vector<8x8xbf16>, vector<8x8xf32> -> vector<8x8xf32>
    %579 = vector.extract_strided_slice %560 {offsets = [0, 8], sizes = [8, 8], strides = [1, 1]} : vector<8x32xbf16> to vector<8x8xbf16>
    %580 = vector.extract_strided_slice %561 {offsets = [0, 8], sizes = [8, 8], strides = [1, 1]} : vector<8x32xbf16> to vector<8x8xbf16>
    %cst_189 = arith.constant dense<0.000000e+00> : vector<8x8xf32>
    %581 = tpu.matmul %579, %580, %cst_189 {dimension_numbers = #tpu.dot_dimension_numbers<[1], [1], [0], [0], [0, 0, 1, 0], [], []>} : vector<8x8xbf16>, vector<8x8xbf16>, vector<8x8xf32> -> vector<8x8xf32>
    %cst_190 = arith.constant dense<0xFF800000> : vector<8xf32>
    %582 = vector.multi_reduction <maximumf>, %581, %cst_190 [1] : vector<8x8xf32> to vector<8xf32>
    %583 = vector.shape_cast %582 : vector<8xf32> to vector<8x1xf32>
    %584 = vector.broadcast %583 : vector<8x1xf32> to vector<8x8xf32>
    %585 = arith.subf %581, %584 : vector<8x8xf32>
    %586 = math.exp %585 : vector<8x8xf32>
    %cst_191 = arith.constant dense<0.000000e+00> : vector<8xf32>
    %587 = vector.multi_reduction <add>, %586, %cst_191 [1] : vector<8x8xf32> to vector<8xf32>
    %588 = vector.shape_cast %587 : vector<8xf32> to vector<8x1xf32>
    %589 = tpu.reciprocal %588 {approx = true} : vector<8x1xf32> -> vector<8x1xf32>
    %590 = vector.broadcast %589 : vector<8x1xf32> to vector<8x8xf32>
    %591 = arith.mulf %586, %590 : vector<8x8xf32>
    %592 = arith.truncf %591 : vector<8x8xf32> to vector<8x8xbf16>
    %593 = vector.extract_strided_slice %562 {offsets = [0, 8], sizes = [8, 8], strides = [1, 1]} : vector<8x32xbf16> to vector<8x8xbf16>
    %cst_192 = arith.constant dense<0.000000e+00> : vector<8x8xf32>
    %594 = tpu.matmul %592, %593, %cst_192 {dimension_numbers = #tpu.dot_dimension_numbers<[1], [0], [0], [1], [0, 0, 1, 1], [], []>} : vector<8x8xbf16>, vector<8x8xbf16>, vector<8x8xf32> -> vector<8x8xf32>
    %595 = vector.extract_strided_slice %560 {offsets = [0, 16], sizes = [8, 8], strides = [1, 1]} : vector<8x32xbf16> to vector<8x8xbf16>
    %596 = vector.extract_strided_slice %561 {offsets = [0, 16], sizes = [8, 8], strides = [1, 1]} : vector<8x32xbf16> to vector<8x8xbf16>
    %cst_193 = arith.constant dense<0.000000e+00> : vector<8x8xf32>
    %597 = tpu.matmul %595, %596, %cst_193 {dimension_numbers = #tpu.dot_dimension_numbers<[1], [1], [0], [0], [0, 0, 1, 0], [], []>} : vector<8x8xbf16>, vector<8x8xbf16>, vector<8x8xf32> -> vector<8x8xf32>
    %cst_194 = arith.constant dense<0xFF800000> : vector<8xf32>
    %598 = vector.multi_reduction <maximumf>, %597, %cst_194 [1] : vector<8x8xf32> to vector<8xf32>
    %599 = vector.shape_cast %598 : vector<8xf32> to vector<8x1xf32>
    %600 = vector.broadcast %599 : vector<8x1xf32> to vector<8x8xf32>
    %601 = arith.subf %597, %600 : vector<8x8xf32>
    %602 = math.exp %601 : vector<8x8xf32>
    %cst_195 = arith.constant dense<0.000000e+00> : vector<8xf32>
    %603 = vector.multi_reduction <add>, %602, %cst_195 [1] : vector<8x8xf32> to vector<8xf32>
    %604 = vector.shape_cast %603 : vector<8xf32> to vector<8x1xf32>
    %605 = tpu.reciprocal %604 {approx = true} : vector<8x1xf32> -> vector<8x1xf32>
    %606 = vector.broadcast %605 : vector<8x1xf32> to vector<8x8xf32>
    %607 = arith.mulf %602, %606 : vector<8x8xf32>
    %608 = arith.truncf %607 : vector<8x8xf32> to vector<8x8xbf16>
    %609 = vector.extract_strided_slice %562 {offsets = [0, 16], sizes = [8, 8], strides = [1, 1]} : vector<8x32xbf16> to vector<8x8xbf16>
    %cst_196 = arith.constant dense<0.000000e+00> : vector<8x8xf32>
    %610 = tpu.matmul %608, %609, %cst_196 {dimension_numbers = #tpu.dot_dimension_numbers<[1], [0], [0], [1], [0, 0, 1, 1], [], []>} : vector<8x8xbf16>, vector<8x8xbf16>, vector<8x8xf32> -> vector<8x8xf32>
    %611 = vector.extract_strided_slice %560 {offsets = [0, 24], sizes = [8, 8], strides = [1, 1]} : vector<8x32xbf16> to vector<8x8xbf16>
    %612 = vector.extract_strided_slice %561 {offsets = [0, 24], sizes = [8, 8], strides = [1, 1]} : vector<8x32xbf16> to vector<8x8xbf16>
    %cst_197 = arith.constant dense<0.000000e+00> : vector<8x8xf32>
    %613 = tpu.matmul %611, %612, %cst_197 {dimension_numbers = #tpu.dot_dimension_numbers<[1], [1], [0], [0], [0, 0, 1, 0], [], []>} : vector<8x8xbf16>, vector<8x8xbf16>, vector<8x8xf32> -> vector<8x8xf32>
    %cst_198 = arith.constant dense<0xFF800000> : vector<8xf32>
    %614 = vector.multi_reduction <maximumf>, %613, %cst_198 [1] : vector<8x8xf32> to vector<8xf32>
    %615 = vector.shape_cast %614 : vector<8xf32> to vector<8x1xf32>
    %616 = vector.broadcast %615 : vector<8x1xf32> to vector<8x8xf32>
    %617 = arith.subf %613, %616 : vector<8x8xf32>
    %618 = math.exp %617 : vector<8x8xf32>
    %cst_199 = arith.constant dense<0.000000e+00> : vector<8xf32>
    %619 = vector.multi_reduction <add>, %618, %cst_199 [1] : vector<8x8xf32> to vector<8xf32>
    %620 = vector.shape_cast %619 : vector<8xf32> to vector<8x1xf32>
    %621 = tpu.reciprocal %620 {approx = true} : vector<8x1xf32> -> vector<8x1xf32>
    %622 = vector.broadcast %621 : vector<8x1xf32> to vector<8x8xf32>
    %623 = arith.mulf %618, %622 : vector<8x8xf32>
    %624 = arith.truncf %623 : vector<8x8xf32> to vector<8x8xbf16>
    %625 = vector.extract_strided_slice %562 {offsets = [0, 24], sizes = [8, 8], strides = [1, 1]} : vector<8x32xbf16> to vector<8x8xbf16>
    %cst_200 = arith.constant dense<0.000000e+00> : vector<8x8xf32>
    %626 = tpu.matmul %624, %625, %cst_200 {dimension_numbers = #tpu.dot_dimension_numbers<[1], [0], [0], [1], [0, 0, 1, 1], [], []>} : vector<8x8xbf16>, vector<8x8xbf16>, vector<8x8xf32> -> vector<8x8xf32>
    %627 = tpu.concatenate %578, %594, %610, %626 in 1 : vector<8x8xf32>, vector<8x8xf32>, vector<8x8xf32>, vector<8x8xf32> -> vector<8x32xf32>
    %628 = tpu.concatenate %559, %627 in 0 : vector<8x32xf32>, vector<8x32xf32> -> vector<16x32xf32>
    %629 = arith.truncf %628 : vector<16x32xf32> to vector<16x32xbf16>
    %cst_201 = arith.constant dense<0.000000e+00> : vector<16x32xf32>
    %630 = tpu.matmul %629, %473, %cst_201 {dimension_numbers = #tpu.dot_dimension_numbers<[1], [0], [0], [1], [0, 0, 1, 1], [], []>} : vector<16x32xbf16>, vector<32x32xbf16>, vector<16x32xf32> -> vector<16x32xf32>
    %631 = vector.extract_strided_slice %481 {offsets = [0, 0], sizes = [1, 32], strides = [1, 1]} : vector<6x32xf32> to vector<1x32xf32>
    %632 = vector.broadcast %631 : vector<1x32xf32> to vector<16x32xf32>
    %633 = arith.addf %630, %632 : vector<16x32xf32>
    %634 = arith.addf %467, %633 : vector<16x32xf32>
    %635 = vector.extract_strided_slice %481 {offsets = [1, 0], sizes = [1, 32], strides = [1, 1]} : vector<6x32xf32> to vector<1x32xf32>
    %636 = vector.extract_strided_slice %481 {offsets = [2, 0], sizes = [1, 32], strides = [1, 1]} : vector<6x32xf32> to vector<1x32xf32>
    %cst_202 = arith.constant dense<0.000000e+00> : vector<16xf32>
    %637 = vector.multi_reduction <add>, %634, %cst_202 [1] : vector<16x32xf32> to vector<16xf32>
    %638 = vector.shape_cast %637 : vector<16xf32> to vector<16x1xf32>
    %cst_203 = arith.constant 3.200000e+01 : f32
    %639 = vector.broadcast %cst_203 : f32 to vector<16x1xf32>
    %640 = arith.divf %638, %639 : vector<16x1xf32>
    %641 = vector.broadcast %640 : vector<16x1xf32> to vector<16x32xf32>
    %642 = arith.subf %634, %641 : vector<16x32xf32>
    %643 = arith.mulf %642, %642 : vector<16x32xf32>
    %cst_204 = arith.constant dense<0.000000e+00> : vector<16xf32>
    %644 = vector.multi_reduction <add>, %643, %cst_204 [1] : vector<16x32xf32> to vector<16xf32>
    %645 = vector.shape_cast %644 : vector<16xf32> to vector<16x1xf32>
    %cst_205 = arith.constant 3.200000e+01 : f32
    %646 = vector.broadcast %cst_205 : f32 to vector<16x1xf32>
    %647 = arith.divf %645, %646 : vector<16x1xf32>
    %648 = vector.broadcast %640 : vector<16x1xf32> to vector<16x32xf32>
    %649 = arith.subf %634, %648 : vector<16x32xf32>
    %cst_206 = arith.constant 9.99999974E-6 : f32
    %650 = vector.broadcast %cst_206 : f32 to vector<16x1xf32>
    %651 = arith.addf %647, %650 : vector<16x1xf32>
    %652 = math.rsqrt %651 : vector<16x1xf32>
    %653 = vector.broadcast %652 : vector<16x1xf32> to vector<16x32xf32>
    %654 = arith.mulf %649, %653 : vector<16x32xf32>
    %655 = vector.broadcast %635 : vector<1x32xf32> to vector<16x32xf32>
    %656 = arith.mulf %654, %655 : vector<16x32xf32>
    %657 = vector.broadcast %636 : vector<1x32xf32> to vector<16x32xf32>
    %658 = arith.addf %656, %657 : vector<16x32xf32>
    %659 = arith.truncf %658 : vector<16x32xf32> to vector<16x32xbf16>
    %cst_207 = arith.constant dense<0.000000e+00> : vector<16x64xf32>
    %660 = tpu.matmul %659, %475, %cst_207 {dimension_numbers = #tpu.dot_dimension_numbers<[1], [0], [0], [1], [0, 0, 1, 1], [], []>} : vector<16x32xbf16>, vector<32x64xbf16>, vector<16x64xf32> -> vector<16x64xf32>
    %661 = vector.broadcast %477 : vector<1x64xf32> to vector<16x64xf32>
    %662 = arith.addf %660, %661 : vector<16x64xf32>
    %cst_208 = arith.constant 0.000000e+00 : f32
    %663 = vector.broadcast %cst_208 : f32 to vector<16x64xf32>
    %664 = arith.maximumf %662, %663 : vector<16x64xf32>
    %665 = arith.truncf %664 : vector<16x64xf32> to vector<16x64xbf16>
    %cst_209 = arith.constant dense<0.000000e+00> : vector<16x32xf32>
    %666 = tpu.matmul %665, %479, %cst_209 {dimension_numbers = #tpu.dot_dimension_numbers<[1], [0], [0], [1], [0, 0, 1, 1], [], []>} : vector<16x64xbf16>, vector<64x32xbf16>, vector<16x32xf32> -> vector<16x32xf32>
    %667 = vector.extract_strided_slice %481 {offsets = [3, 0], sizes = [1, 32], strides = [1, 1]} : vector<6x32xf32> to vector<1x32xf32>
    %668 = vector.broadcast %667 : vector<1x32xf32> to vector<16x32xf32>
    %669 = arith.addf %666, %668 : vector<16x32xf32>
    %670 = arith.addf %658, %669 : vector<16x32xf32>
    %671 = vector.extract_strided_slice %481 {offsets = [4, 0], sizes = [1, 32], strides = [1, 1]} : vector<6x32xf32> to vector<1x32xf32>
    %672 = vector.extract_strided_slice %481 {offsets = [5, 0], sizes = [1, 32], strides = [1, 1]} : vector<6x32xf32> to vector<1x32xf32>
    %cst_210 = arith.constant dense<0.000000e+00> : vector<16xf32>
    %673 = vector.multi_reduction <add>, %670, %cst_210 [1] : vector<16x32xf32> to vector<16xf32>
    %674 = vector.shape_cast %673 : vector<16xf32> to vector<16x1xf32>
    %cst_211 = arith.constant 3.200000e+01 : f32
    %675 = vector.broadcast %cst_211 : f32 to vector<16x1xf32>
    %676 = arith.divf %674, %675 : vector<16x1xf32>
    %677 = vector.broadcast %676 : vector<16x1xf32> to vector<16x32xf32>
    %678 = arith.subf %670, %677 : vector<16x32xf32>
    %679 = arith.mulf %678, %678 : vector<16x32xf32>
    %cst_212 = arith.constant dense<0.000000e+00> : vector<16xf32>
    %680 = vector.multi_reduction <add>, %679, %cst_212 [1] : vector<16x32xf32> to vector<16xf32>
    %681 = vector.shape_cast %680 : vector<16xf32> to vector<16x1xf32>
    %cst_213 = arith.constant 3.200000e+01 : f32
    %682 = vector.broadcast %cst_213 : f32 to vector<16x1xf32>
    %683 = arith.divf %681, %682 : vector<16x1xf32>
    %684 = vector.broadcast %676 : vector<16x1xf32> to vector<16x32xf32>
    %685 = arith.subf %670, %684 : vector<16x32xf32>
    %cst_214 = arith.constant 9.99999974E-6 : f32
    %686 = vector.broadcast %cst_214 : f32 to vector<16x1xf32>
    %687 = arith.addf %683, %686 : vector<16x1xf32>
    %688 = math.rsqrt %687 : vector<16x1xf32>
    %689 = vector.broadcast %688 : vector<16x1xf32> to vector<16x32xf32>
    %690 = arith.mulf %685, %689 : vector<16x32xf32>
    %691 = vector.broadcast %671 : vector<1x32xf32> to vector<16x32xf32>
    %692 = arith.mulf %690, %691 : vector<16x32xf32>
    %693 = vector.broadcast %672 : vector<1x32xf32> to vector<16x32xf32>
    %694 = arith.addf %692, %693 : vector<16x32xf32>
    %c1_215 = arith.constant 1 : index
    %c0_216 = arith.constant 0 : index
    %c0_217 = arith.constant 0 : index
    %695 = vector.load %arg14[%c1_215, %c0_216, %c0_217] : memref<2x32x96xbf16, #tpu.memory_space<vmem>>, vector<1x32x96xbf16>
    %696 = vector.shape_cast %695 : vector<1x32x96xbf16> to vector<32x96xbf16>
    %c1_218 = arith.constant 1 : index
    %c0_219 = arith.constant 0 : index
    %c0_220 = arith.constant 0 : index
    %697 = vector.load %arg15[%c1_218, %c0_219, %c0_220] : memref<2x1x96xf32, #tpu.memory_space<vmem>>, vector<1x1x96xf32>
    %698 = vector.shape_cast %697 : vector<1x1x96xf32> to vector<1x96xf32>
    %c1_221 = arith.constant 1 : index
    %c0_222 = arith.constant 0 : index
    %c0_223 = arith.constant 0 : index
    %699 = vector.load %arg16[%c1_221, %c0_222, %c0_223] : memref<2x32x32xbf16, #tpu.memory_space<vmem>>, vector<1x32x32xbf16>
    %700 = vector.shape_cast %699 : vector<1x32x32xbf16> to vector<32x32xbf16>
    %c1_224 = arith.constant 1 : index
    %c0_225 = arith.constant 0 : index
    %c0_226 = arith.constant 0 : index
    %701 = vector.load %arg17[%c1_224, %c0_225, %c0_226] : memref<2x32x64xbf16, #tpu.memory_space<vmem>>, vector<1x32x64xbf16>
    %702 = vector.shape_cast %701 : vector<1x32x64xbf16> to vector<32x64xbf16>
    %c1_227 = arith.constant 1 : index
    %c0_228 = arith.constant 0 : index
    %c0_229 = arith.constant 0 : index
    %703 = vector.load %arg18[%c1_227, %c0_228, %c0_229] : memref<2x1x64xf32, #tpu.memory_space<vmem>>, vector<1x1x64xf32>
    %704 = vector.shape_cast %703 : vector<1x1x64xf32> to vector<1x64xf32>
    %c1_230 = arith.constant 1 : index
    %c0_231 = arith.constant 0 : index
    %c0_232 = arith.constant 0 : index
    %705 = vector.load %arg19[%c1_230, %c0_231, %c0_232] : memref<2x64x32xbf16, #tpu.memory_space<vmem>>, vector<1x64x32xbf16>
    %706 = vector.shape_cast %705 : vector<1x64x32xbf16> to vector<64x32xbf16>
    %c1_233 = arith.constant 1 : index
    %c0_234 = arith.constant 0 : index
    %c0_235 = arith.constant 0 : index
    %707 = vector.load %arg20[%c1_233, %c0_234, %c0_235] : memref<2x6x32xf32, #tpu.memory_space<vmem>>, vector<1x6x32xf32>
    %708 = vector.shape_cast %707 : vector<1x6x32xf32> to vector<6x32xf32>
    %709 = arith.truncf %694 : vector<16x32xf32> to vector<16x32xbf16>
    %cst_236 = arith.constant dense<0.000000e+00> : vector<16x96xf32>
    %710 = tpu.matmul %709, %696, %cst_236 {dimension_numbers = #tpu.dot_dimension_numbers<[1], [0], [0], [1], [0, 0, 1, 1], [], []>} : vector<16x32xbf16>, vector<32x96xbf16>, vector<16x96xf32> -> vector<16x96xf32>
    %711 = vector.broadcast %698 : vector<1x96xf32> to vector<16x96xf32>
    %712 = arith.addf %710, %711 : vector<16x96xf32>
    %713 = vector.extract_strided_slice %712 {offsets = [0, 0], sizes = [16, 32], strides = [1, 1]} : vector<16x96xf32> to vector<16x32xf32>
    %714 = arith.truncf %713 : vector<16x32xf32> to vector<16x32xbf16>
    %715 = vector.extract_strided_slice %712 {offsets = [0, 32], sizes = [16, 32], strides = [1, 1]} : vector<16x96xf32> to vector<16x32xf32>
    %716 = arith.truncf %715 : vector<16x32xf32> to vector<16x32xbf16>
    %717 = vector.extract_strided_slice %712 {offsets = [0, 64], sizes = [16, 32], strides = [1, 1]} : vector<16x96xf32> to vector<16x32xf32>
    %718 = arith.truncf %717 : vector<16x32xf32> to vector<16x32xbf16>
    %719 = vector.extract_strided_slice %714 {offsets = [0, 0], sizes = [8, 32], strides = [1, 1]} : vector<16x32xbf16> to vector<8x32xbf16>
    %720 = vector.extract_strided_slice %716 {offsets = [0, 0], sizes = [8, 32], strides = [1, 1]} : vector<16x32xbf16> to vector<8x32xbf16>
    %721 = vector.extract_strided_slice %718 {offsets = [0, 0], sizes = [8, 32], strides = [1, 1]} : vector<16x32xbf16> to vector<8x32xbf16>
    %722 = vector.extract_strided_slice %719 {offsets = [0, 0], sizes = [8, 8], strides = [1, 1]} : vector<8x32xbf16> to vector<8x8xbf16>
    %723 = vector.extract_strided_slice %720 {offsets = [0, 0], sizes = [8, 8], strides = [1, 1]} : vector<8x32xbf16> to vector<8x8xbf16>
    %cst_237 = arith.constant dense<0.000000e+00> : vector<8x8xf32>
    %724 = tpu.matmul %722, %723, %cst_237 {dimension_numbers = #tpu.dot_dimension_numbers<[1], [1], [0], [0], [0, 0, 1, 0], [], []>} : vector<8x8xbf16>, vector<8x8xbf16>, vector<8x8xf32> -> vector<8x8xf32>
    %cst_238 = arith.constant dense<0xFF800000> : vector<8xf32>
    %725 = vector.multi_reduction <maximumf>, %724, %cst_238 [1] : vector<8x8xf32> to vector<8xf32>
    %726 = vector.shape_cast %725 : vector<8xf32> to vector<8x1xf32>
    %727 = vector.broadcast %726 : vector<8x1xf32> to vector<8x8xf32>
    %728 = arith.subf %724, %727 : vector<8x8xf32>
    %729 = math.exp %728 : vector<8x8xf32>
    %cst_239 = arith.constant dense<0.000000e+00> : vector<8xf32>
    %730 = vector.multi_reduction <add>, %729, %cst_239 [1] : vector<8x8xf32> to vector<8xf32>
    %731 = vector.shape_cast %730 : vector<8xf32> to vector<8x1xf32>
    %732 = tpu.reciprocal %731 {approx = true} : vector<8x1xf32> -> vector<8x1xf32>
    %733 = vector.broadcast %732 : vector<8x1xf32> to vector<8x8xf32>
    %734 = arith.mulf %729, %733 : vector<8x8xf32>
    %735 = arith.truncf %734 : vector<8x8xf32> to vector<8x8xbf16>
    %736 = vector.extract_strided_slice %721 {offsets = [0, 0], sizes = [8, 8], strides = [1, 1]} : vector<8x32xbf16> to vector<8x8xbf16>
    %cst_240 = arith.constant dense<0.000000e+00> : vector<8x8xf32>
    %737 = tpu.matmul %735, %736, %cst_240 {dimension_numbers = #tpu.dot_dimension_numbers<[1], [0], [0], [1], [0, 0, 1, 1], [], []>} : vector<8x8xbf16>, vector<8x8xbf16>, vector<8x8xf32> -> vector<8x8xf32>
    %738 = vector.extract_strided_slice %719 {offsets = [0, 8], sizes = [8, 8], strides = [1, 1]} : vector<8x32xbf16> to vector<8x8xbf16>
    %739 = vector.extract_strided_slice %720 {offsets = [0, 8], sizes = [8, 8], strides = [1, 1]} : vector<8x32xbf16> to vector<8x8xbf16>
    %cst_241 = arith.constant dense<0.000000e+00> : vector<8x8xf32>
    %740 = tpu.matmul %738, %739, %cst_241 {dimension_numbers = #tpu.dot_dimension_numbers<[1], [1], [0], [0], [0, 0, 1, 0], [], []>} : vector<8x8xbf16>, vector<8x8xbf16>, vector<8x8xf32> -> vector<8x8xf32>
    %cst_242 = arith.constant dense<0xFF800000> : vector<8xf32>
    %741 = vector.multi_reduction <maximumf>, %740, %cst_242 [1] : vector<8x8xf32> to vector<8xf32>
    %742 = vector.shape_cast %741 : vector<8xf32> to vector<8x1xf32>
    %743 = vector.broadcast %742 : vector<8x1xf32> to vector<8x8xf32>
    %744 = arith.subf %740, %743 : vector<8x8xf32>
    %745 = math.exp %744 : vector<8x8xf32>
    %cst_243 = arith.constant dense<0.000000e+00> : vector<8xf32>
    %746 = vector.multi_reduction <add>, %745, %cst_243 [1] : vector<8x8xf32> to vector<8xf32>
    %747 = vector.shape_cast %746 : vector<8xf32> to vector<8x1xf32>
    %748 = tpu.reciprocal %747 {approx = true} : vector<8x1xf32> -> vector<8x1xf32>
    %749 = vector.broadcast %748 : vector<8x1xf32> to vector<8x8xf32>
    %750 = arith.mulf %745, %749 : vector<8x8xf32>
    %751 = arith.truncf %750 : vector<8x8xf32> to vector<8x8xbf16>
    %752 = vector.extract_strided_slice %721 {offsets = [0, 8], sizes = [8, 8], strides = [1, 1]} : vector<8x32xbf16> to vector<8x8xbf16>
    %cst_244 = arith.constant dense<0.000000e+00> : vector<8x8xf32>
    %753 = tpu.matmul %751, %752, %cst_244 {dimension_numbers = #tpu.dot_dimension_numbers<[1], [0], [0], [1], [0, 0, 1, 1], [], []>} : vector<8x8xbf16>, vector<8x8xbf16>, vector<8x8xf32> -> vector<8x8xf32>
    %754 = vector.extract_strided_slice %719 {offsets = [0, 16], sizes = [8, 8], strides = [1, 1]} : vector<8x32xbf16> to vector<8x8xbf16>
    %755 = vector.extract_strided_slice %720 {offsets = [0, 16], sizes = [8, 8], strides = [1, 1]} : vector<8x32xbf16> to vector<8x8xbf16>
    %cst_245 = arith.constant dense<0.000000e+00> : vector<8x8xf32>
    %756 = tpu.matmul %754, %755, %cst_245 {dimension_numbers = #tpu.dot_dimension_numbers<[1], [1], [0], [0], [0, 0, 1, 0], [], []>} : vector<8x8xbf16>, vector<8x8xbf16>, vector<8x8xf32> -> vector<8x8xf32>
    %cst_246 = arith.constant dense<0xFF800000> : vector<8xf32>
    %757 = vector.multi_reduction <maximumf>, %756, %cst_246 [1] : vector<8x8xf32> to vector<8xf32>
    %758 = vector.shape_cast %757 : vector<8xf32> to vector<8x1xf32>
    %759 = vector.broadcast %758 : vector<8x1xf32> to vector<8x8xf32>
    %760 = arith.subf %756, %759 : vector<8x8xf32>
    %761 = math.exp %760 : vector<8x8xf32>
    %cst_247 = arith.constant dense<0.000000e+00> : vector<8xf32>
    %762 = vector.multi_reduction <add>, %761, %cst_247 [1] : vector<8x8xf32> to vector<8xf32>
    %763 = vector.shape_cast %762 : vector<8xf32> to vector<8x1xf32>
    %764 = tpu.reciprocal %763 {approx = true} : vector<8x1xf32> -> vector<8x1xf32>
    %765 = vector.broadcast %764 : vector<8x1xf32> to vector<8x8xf32>
    %766 = arith.mulf %761, %765 : vector<8x8xf32>
    %767 = arith.truncf %766 : vector<8x8xf32> to vector<8x8xbf16>
    %768 = vector.extract_strided_slice %721 {offsets = [0, 16], sizes = [8, 8], strides = [1, 1]} : vector<8x32xbf16> to vector<8x8xbf16>
    %cst_248 = arith.constant dense<0.000000e+00> : vector<8x8xf32>
    %769 = tpu.matmul %767, %768, %cst_248 {dimension_numbers = #tpu.dot_dimension_numbers<[1], [0], [0], [1], [0, 0, 1, 1], [], []>} : vector<8x8xbf16>, vector<8x8xbf16>, vector<8x8xf32> -> vector<8x8xf32>
    %770 = vector.extract_strided_slice %719 {offsets = [0, 24], sizes = [8, 8], strides = [1, 1]} : vector<8x32xbf16> to vector<8x8xbf16>
    %771 = vector.extract_strided_slice %720 {offsets = [0, 24], sizes = [8, 8], strides = [1, 1]} : vector<8x32xbf16> to vector<8x8xbf16>
    %cst_249 = arith.constant dense<0.000000e+00> : vector<8x8xf32>
    %772 = tpu.matmul %770, %771, %cst_249 {dimension_numbers = #tpu.dot_dimension_numbers<[1], [1], [0], [0], [0, 0, 1, 0], [], []>} : vector<8x8xbf16>, vector<8x8xbf16>, vector<8x8xf32> -> vector<8x8xf32>
    %cst_250 = arith.constant dense<0xFF800000> : vector<8xf32>
    %773 = vector.multi_reduction <maximumf>, %772, %cst_250 [1] : vector<8x8xf32> to vector<8xf32>
    %774 = vector.shape_cast %773 : vector<8xf32> to vector<8x1xf32>
    %775 = vector.broadcast %774 : vector<8x1xf32> to vector<8x8xf32>
    %776 = arith.subf %772, %775 : vector<8x8xf32>
    %777 = math.exp %776 : vector<8x8xf32>
    %cst_251 = arith.constant dense<0.000000e+00> : vector<8xf32>
    %778 = vector.multi_reduction <add>, %777, %cst_251 [1] : vector<8x8xf32> to vector<8xf32>
    %779 = vector.shape_cast %778 : vector<8xf32> to vector<8x1xf32>
    %780 = tpu.reciprocal %779 {approx = true} : vector<8x1xf32> -> vector<8x1xf32>
    %781 = vector.broadcast %780 : vector<8x1xf32> to vector<8x8xf32>
    %782 = arith.mulf %777, %781 : vector<8x8xf32>
    %783 = arith.truncf %782 : vector<8x8xf32> to vector<8x8xbf16>
    %784 = vector.extract_strided_slice %721 {offsets = [0, 24], sizes = [8, 8], strides = [1, 1]} : vector<8x32xbf16> to vector<8x8xbf16>
    %cst_252 = arith.constant dense<0.000000e+00> : vector<8x8xf32>
    %785 = tpu.matmul %783, %784, %cst_252 {dimension_numbers = #tpu.dot_dimension_numbers<[1], [0], [0], [1], [0, 0, 1, 1], [], []>} : vector<8x8xbf16>, vector<8x8xbf16>, vector<8x8xf32> -> vector<8x8xf32>
    %786 = tpu.concatenate %737, %753, %769, %785 in 1 : vector<8x8xf32>, vector<8x8xf32>, vector<8x8xf32>, vector<8x8xf32> -> vector<8x32xf32>
    %787 = vector.extract_strided_slice %714 {offsets = [8, 0], sizes = [8, 32], strides = [1, 1]} : vector<16x32xbf16> to vector<8x32xbf16>
    %788 = vector.extract_strided_slice %716 {offsets = [8, 0], sizes = [8, 32], strides = [1, 1]} : vector<16x32xbf16> to vector<8x32xbf16>
    %789 = vector.extract_strided_slice %718 {offsets = [8, 0], sizes = [8, 32], strides = [1, 1]} : vector<16x32xbf16> to vector<8x32xbf16>
    %790 = vector.extract_strided_slice %787 {offsets = [0, 0], sizes = [8, 8], strides = [1, 1]} : vector<8x32xbf16> to vector<8x8xbf16>
    %791 = vector.extract_strided_slice %788 {offsets = [0, 0], sizes = [8, 8], strides = [1, 1]} : vector<8x32xbf16> to vector<8x8xbf16>
    %cst_253 = arith.constant dense<0.000000e+00> : vector<8x8xf32>
    %792 = tpu.matmul %790, %791, %cst_253 {dimension_numbers = #tpu.dot_dimension_numbers<[1], [1], [0], [0], [0, 0, 1, 0], [], []>} : vector<8x8xbf16>, vector<8x8xbf16>, vector<8x8xf32> -> vector<8x8xf32>
    %cst_254 = arith.constant dense<0xFF800000> : vector<8xf32>
    %793 = vector.multi_reduction <maximumf>, %792, %cst_254 [1] : vector<8x8xf32> to vector<8xf32>
    %794 = vector.shape_cast %793 : vector<8xf32> to vector<8x1xf32>
    %795 = vector.broadcast %794 : vector<8x1xf32> to vector<8x8xf32>
    %796 = arith.subf %792, %795 : vector<8x8xf32>
    %797 = math.exp %796 : vector<8x8xf32>
    %cst_255 = arith.constant dense<0.000000e+00> : vector<8xf32>
    %798 = vector.multi_reduction <add>, %797, %cst_255 [1] : vector<8x8xf32> to vector<8xf32>
    %799 = vector.shape_cast %798 : vector<8xf32> to vector<8x1xf32>
    %800 = tpu.reciprocal %799 {approx = true} : vector<8x1xf32> -> vector<8x1xf32>
    %801 = vector.broadcast %800 : vector<8x1xf32> to vector<8x8xf32>
    %802 = arith.mulf %797, %801 : vector<8x8xf32>
    %803 = arith.truncf %802 : vector<8x8xf32> to vector<8x8xbf16>
    %804 = vector.extract_strided_slice %789 {offsets = [0, 0], sizes = [8, 8], strides = [1, 1]} : vector<8x32xbf16> to vector<8x8xbf16>
    %cst_256 = arith.constant dense<0.000000e+00> : vector<8x8xf32>
    %805 = tpu.matmul %803, %804, %cst_256 {dimension_numbers = #tpu.dot_dimension_numbers<[1], [0], [0], [1], [0, 0, 1, 1], [], []>} : vector<8x8xbf16>, vector<8x8xbf16>, vector<8x8xf32> -> vector<8x8xf32>
    %806 = vector.extract_strided_slice %787 {offsets = [0, 8], sizes = [8, 8], strides = [1, 1]} : vector<8x32xbf16> to vector<8x8xbf16>
    %807 = vector.extract_strided_slice %788 {offsets = [0, 8], sizes = [8, 8], strides = [1, 1]} : vector<8x32xbf16> to vector<8x8xbf16>
    %cst_257 = arith.constant dense<0.000000e+00> : vector<8x8xf32>
    %808 = tpu.matmul %806, %807, %cst_257 {dimension_numbers = #tpu.dot_dimension_numbers<[1], [1], [0], [0], [0, 0, 1, 0], [], []>} : vector<8x8xbf16>, vector<8x8xbf16>, vector<8x8xf32> -> vector<8x8xf32>
    %cst_258 = arith.constant dense<0xFF800000> : vector<8xf32>
    %809 = vector.multi_reduction <maximumf>, %808, %cst_258 [1] : vector<8x8xf32> to vector<8xf32>
    %810 = vector.shape_cast %809 : vector<8xf32> to vector<8x1xf32>
    %811 = vector.broadcast %810 : vector<8x1xf32> to vector<8x8xf32>
    %812 = arith.subf %808, %811 : vector<8x8xf32>
    %813 = math.exp %812 : vector<8x8xf32>
    %cst_259 = arith.constant dense<0.000000e+00> : vector<8xf32>
    %814 = vector.multi_reduction <add>, %813, %cst_259 [1] : vector<8x8xf32> to vector<8xf32>
    %815 = vector.shape_cast %814 : vector<8xf32> to vector<8x1xf32>
    %816 = tpu.reciprocal %815 {approx = true} : vector<8x1xf32> -> vector<8x1xf32>
    %817 = vector.broadcast %816 : vector<8x1xf32> to vector<8x8xf32>
    %818 = arith.mulf %813, %817 : vector<8x8xf32>
    %819 = arith.truncf %818 : vector<8x8xf32> to vector<8x8xbf16>
    %820 = vector.extract_strided_slice %789 {offsets = [0, 8], sizes = [8, 8], strides = [1, 1]} : vector<8x32xbf16> to vector<8x8xbf16>
    %cst_260 = arith.constant dense<0.000000e+00> : vector<8x8xf32>
    %821 = tpu.matmul %819, %820, %cst_260 {dimension_numbers = #tpu.dot_dimension_numbers<[1], [0], [0], [1], [0, 0, 1, 1], [], []>} : vector<8x8xbf16>, vector<8x8xbf16>, vector<8x8xf32> -> vector<8x8xf32>
    %822 = vector.extract_strided_slice %787 {offsets = [0, 16], sizes = [8, 8], strides = [1, 1]} : vector<8x32xbf16> to vector<8x8xbf16>
    %823 = vector.extract_strided_slice %788 {offsets = [0, 16], sizes = [8, 8], strides = [1, 1]} : vector<8x32xbf16> to vector<8x8xbf16>
    %cst_261 = arith.constant dense<0.000000e+00> : vector<8x8xf32>
    %824 = tpu.matmul %822, %823, %cst_261 {dimension_numbers = #tpu.dot_dimension_numbers<[1], [1], [0], [0], [0, 0, 1, 0], [], []>} : vector<8x8xbf16>, vector<8x8xbf16>, vector<8x8xf32> -> vector<8x8xf32>
    %cst_262 = arith.constant dense<0xFF800000> : vector<8xf32>
    %825 = vector.multi_reduction <maximumf>, %824, %cst_262 [1] : vector<8x8xf32> to vector<8xf32>
    %826 = vector.shape_cast %825 : vector<8xf32> to vector<8x1xf32>
    %827 = vector.broadcast %826 : vector<8x1xf32> to vector<8x8xf32>
    %828 = arith.subf %824, %827 : vector<8x8xf32>
    %829 = math.exp %828 : vector<8x8xf32>
    %cst_263 = arith.constant dense<0.000000e+00> : vector<8xf32>
    %830 = vector.multi_reduction <add>, %829, %cst_263 [1] : vector<8x8xf32> to vector<8xf32>
    %831 = vector.shape_cast %830 : vector<8xf32> to vector<8x1xf32>
    %832 = tpu.reciprocal %831 {approx = true} : vector<8x1xf32> -> vector<8x1xf32>
    %833 = vector.broadcast %832 : vector<8x1xf32> to vector<8x8xf32>
    %834 = arith.mulf %829, %833 : vector<8x8xf32>
    %835 = arith.truncf %834 : vector<8x8xf32> to vector<8x8xbf16>
    %836 = vector.extract_strided_slice %789 {offsets = [0, 16], sizes = [8, 8], strides = [1, 1]} : vector<8x32xbf16> to vector<8x8xbf16>
    %cst_264 = arith.constant dense<0.000000e+00> : vector<8x8xf32>
    %837 = tpu.matmul %835, %836, %cst_264 {dimension_numbers = #tpu.dot_dimension_numbers<[1], [0], [0], [1], [0, 0, 1, 1], [], []>} : vector<8x8xbf16>, vector<8x8xbf16>, vector<8x8xf32> -> vector<8x8xf32>
    %838 = vector.extract_strided_slice %787 {offsets = [0, 24], sizes = [8, 8], strides = [1, 1]} : vector<8x32xbf16> to vector<8x8xbf16>
    %839 = vector.extract_strided_slice %788 {offsets = [0, 24], sizes = [8, 8], strides = [1, 1]} : vector<8x32xbf16> to vector<8x8xbf16>
    %cst_265 = arith.constant dense<0.000000e+00> : vector<8x8xf32>
    %840 = tpu.matmul %838, %839, %cst_265 {dimension_numbers = #tpu.dot_dimension_numbers<[1], [1], [0], [0], [0, 0, 1, 0], [], []>} : vector<8x8xbf16>, vector<8x8xbf16>, vector<8x8xf32> -> vector<8x8xf32>
    %cst_266 = arith.constant dense<0xFF800000> : vector<8xf32>
    %841 = vector.multi_reduction <maximumf>, %840, %cst_266 [1] : vector<8x8xf32> to vector<8xf32>
    %842 = vector.shape_cast %841 : vector<8xf32> to vector<8x1xf32>
    %843 = vector.broadcast %842 : vector<8x1xf32> to vector<8x8xf32>
    %844 = arith.subf %840, %843 : vector<8x8xf32>
    %845 = math.exp %844 : vector<8x8xf32>
    %cst_267 = arith.constant dense<0.000000e+00> : vector<8xf32>
    %846 = vector.multi_reduction <add>, %845, %cst_267 [1] : vector<8x8xf32> to vector<8xf32>
    %847 = vector.shape_cast %846 : vector<8xf32> to vector<8x1xf32>
    %848 = tpu.reciprocal %847 {approx = true} : vector<8x1xf32> -> vector<8x1xf32>
    %849 = vector.broadcast %848 : vector<8x1xf32> to vector<8x8xf32>
    %850 = arith.mulf %845, %849 : vector<8x8xf32>
    %851 = arith.truncf %850 : vector<8x8xf32> to vector<8x8xbf16>
    %852 = vector.extract_strided_slice %789 {offsets = [0, 24], sizes = [8, 8], strides = [1, 1]} : vector<8x32xbf16> to vector<8x8xbf16>
    %cst_268 = arith.constant dense<0.000000e+00> : vector<8x8xf32>
    %853 = tpu.matmul %851, %852, %cst_268 {dimension_numbers = #tpu.dot_dimension_numbers<[1], [0], [0], [1], [0, 0, 1, 1], [], []>} : vector<8x8xbf16>, vector<8x8xbf16>, vector<8x8xf32> -> vector<8x8xf32>
    %854 = tpu.concatenate %805, %821, %837, %853 in 1 : vector<8x8xf32>, vector<8x8xf32>, vector<8x8xf32>, vector<8x8xf32> -> vector<8x32xf32>
    %855 = tpu.concatenate %786, %854 in 0 : vector<8x32xf32>, vector<8x32xf32> -> vector<16x32xf32>
    %856 = arith.truncf %855 : vector<16x32xf32> to vector<16x32xbf16>
    %cst_269 = arith.constant dense<0.000000e+00> : vector<16x32xf32>
    %857 = tpu.matmul %856, %700, %cst_269 {dimension_numbers = #tpu.dot_dimension_numbers<[1], [0], [0], [1], [0, 0, 1, 1], [], []>} : vector<16x32xbf16>, vector<32x32xbf16>, vector<16x32xf32> -> vector<16x32xf32>
    %858 = vector.extract_strided_slice %708 {offsets = [0, 0], sizes = [1, 32], strides = [1, 1]} : vector<6x32xf32> to vector<1x32xf32>
    %859 = vector.broadcast %858 : vector<1x32xf32> to vector<16x32xf32>
    %860 = arith.addf %857, %859 : vector<16x32xf32>
    %861 = arith.addf %694, %860 : vector<16x32xf32>
    %862 = vector.extract_strided_slice %708 {offsets = [1, 0], sizes = [1, 32], strides = [1, 1]} : vector<6x32xf32> to vector<1x32xf32>
    %863 = vector.extract_strided_slice %708 {offsets = [2, 0], sizes = [1, 32], strides = [1, 1]} : vector<6x32xf32> to vector<1x32xf32>
    %cst_270 = arith.constant dense<0.000000e+00> : vector<16xf32>
    %864 = vector.multi_reduction <add>, %861, %cst_270 [1] : vector<16x32xf32> to vector<16xf32>
    %865 = vector.shape_cast %864 : vector<16xf32> to vector<16x1xf32>
    %cst_271 = arith.constant 3.200000e+01 : f32
    %866 = vector.broadcast %cst_271 : f32 to vector<16x1xf32>
    %867 = arith.divf %865, %866 : vector<16x1xf32>
    %868 = vector.broadcast %867 : vector<16x1xf32> to vector<16x32xf32>
    %869 = arith.subf %861, %868 : vector<16x32xf32>
    %870 = arith.mulf %869, %869 : vector<16x32xf32>
    %cst_272 = arith.constant dense<0.000000e+00> : vector<16xf32>
    %871 = vector.multi_reduction <add>, %870, %cst_272 [1] : vector<16x32xf32> to vector<16xf32>
    %872 = vector.shape_cast %871 : vector<16xf32> to vector<16x1xf32>
    %cst_273 = arith.constant 3.200000e+01 : f32
    %873 = vector.broadcast %cst_273 : f32 to vector<16x1xf32>
    %874 = arith.divf %872, %873 : vector<16x1xf32>
    %875 = vector.broadcast %867 : vector<16x1xf32> to vector<16x32xf32>
    %876 = arith.subf %861, %875 : vector<16x32xf32>
    %cst_274 = arith.constant 9.99999974E-6 : f32
    %877 = vector.broadcast %cst_274 : f32 to vector<16x1xf32>
    %878 = arith.addf %874, %877 : vector<16x1xf32>
    %879 = math.rsqrt %878 : vector<16x1xf32>
    %880 = vector.broadcast %879 : vector<16x1xf32> to vector<16x32xf32>
    %881 = arith.mulf %876, %880 : vector<16x32xf32>
    %882 = vector.broadcast %862 : vector<1x32xf32> to vector<16x32xf32>
    %883 = arith.mulf %881, %882 : vector<16x32xf32>
    %884 = vector.broadcast %863 : vector<1x32xf32> to vector<16x32xf32>
    %885 = arith.addf %883, %884 : vector<16x32xf32>
    %886 = arith.truncf %885 : vector<16x32xf32> to vector<16x32xbf16>
    %cst_275 = arith.constant dense<0.000000e+00> : vector<16x64xf32>
    %887 = tpu.matmul %886, %702, %cst_275 {dimension_numbers = #tpu.dot_dimension_numbers<[1], [0], [0], [1], [0, 0, 1, 1], [], []>} : vector<16x32xbf16>, vector<32x64xbf16>, vector<16x64xf32> -> vector<16x64xf32>
    %888 = vector.broadcast %704 : vector<1x64xf32> to vector<16x64xf32>
    %889 = arith.addf %887, %888 : vector<16x64xf32>
    %cst_276 = arith.constant 0.000000e+00 : f32
    %890 = vector.broadcast %cst_276 : f32 to vector<16x64xf32>
    %891 = arith.maximumf %889, %890 : vector<16x64xf32>
    %892 = arith.truncf %891 : vector<16x64xf32> to vector<16x64xbf16>
    %cst_277 = arith.constant dense<0.000000e+00> : vector<16x32xf32>
    %893 = tpu.matmul %892, %706, %cst_277 {dimension_numbers = #tpu.dot_dimension_numbers<[1], [0], [0], [1], [0, 0, 1, 1], [], []>} : vector<16x64xbf16>, vector<64x32xbf16>, vector<16x32xf32> -> vector<16x32xf32>
    %894 = vector.extract_strided_slice %708 {offsets = [3, 0], sizes = [1, 32], strides = [1, 1]} : vector<6x32xf32> to vector<1x32xf32>
    %895 = vector.broadcast %894 : vector<1x32xf32> to vector<16x32xf32>
    %896 = arith.addf %893, %895 : vector<16x32xf32>
    %897 = arith.addf %885, %896 : vector<16x32xf32>
    %898 = vector.extract_strided_slice %708 {offsets = [4, 0], sizes = [1, 32], strides = [1, 1]} : vector<6x32xf32> to vector<1x32xf32>
    %899 = vector.extract_strided_slice %708 {offsets = [5, 0], sizes = [1, 32], strides = [1, 1]} : vector<6x32xf32> to vector<1x32xf32>
    %cst_278 = arith.constant dense<0.000000e+00> : vector<16xf32>
    %900 = vector.multi_reduction <add>, %897, %cst_278 [1] : vector<16x32xf32> to vector<16xf32>
    %901 = vector.shape_cast %900 : vector<16xf32> to vector<16x1xf32>
    %cst_279 = arith.constant 3.200000e+01 : f32
    %902 = vector.broadcast %cst_279 : f32 to vector<16x1xf32>
    %903 = arith.divf %901, %902 : vector<16x1xf32>
    %904 = vector.broadcast %903 : vector<16x1xf32> to vector<16x32xf32>
    %905 = arith.subf %897, %904 : vector<16x32xf32>
    %906 = arith.mulf %905, %905 : vector<16x32xf32>
    %cst_280 = arith.constant dense<0.000000e+00> : vector<16xf32>
    %907 = vector.multi_reduction <add>, %906, %cst_280 [1] : vector<16x32xf32> to vector<16xf32>
    %908 = vector.shape_cast %907 : vector<16xf32> to vector<16x1xf32>
    %cst_281 = arith.constant 3.200000e+01 : f32
    %909 = vector.broadcast %cst_281 : f32 to vector<16x1xf32>
    %910 = arith.divf %908, %909 : vector<16x1xf32>
    %911 = vector.broadcast %903 : vector<16x1xf32> to vector<16x32xf32>
    %912 = arith.subf %897, %911 : vector<16x32xf32>
    %cst_282 = arith.constant 9.99999974E-6 : f32
    %913 = vector.broadcast %cst_282 : f32 to vector<16x1xf32>
    %914 = arith.addf %910, %913 : vector<16x1xf32>
    %915 = math.rsqrt %914 : vector<16x1xf32>
    %916 = vector.broadcast %915 : vector<16x1xf32> to vector<16x32xf32>
    %917 = arith.mulf %912, %916 : vector<16x32xf32>
    %918 = vector.broadcast %898 : vector<1x32xf32> to vector<16x32xf32>
    %919 = arith.mulf %917, %918 : vector<16x32xf32>
    %920 = vector.broadcast %899 : vector<1x32xf32> to vector<16x32xf32>
    %921 = arith.addf %919, %920 : vector<16x32xf32>
    %922 = arith.addf %460, %921 : vector<16x32xf32>
    %c0_283 = arith.constant 0 : index
    %c0_284 = arith.constant 0 : index
    %923 = vector.load %arg21[%c0_283, %c0_284] : memref<2x32xf32, #tpu.memory_space<vmem>>, vector<1x32xf32>
    %c1_285 = arith.constant 1 : index
    %c0_286 = arith.constant 0 : index
    %924 = vector.load %arg21[%c1_285, %c0_286] : memref<2x32xf32, #tpu.memory_space<vmem>>, vector<1x32xf32>
    %cst_287 = arith.constant dense<0.000000e+00> : vector<16xf32>
    %925 = vector.multi_reduction <add>, %922, %cst_287 [1] : vector<16x32xf32> to vector<16xf32>
    %926 = vector.shape_cast %925 : vector<16xf32> to vector<16x1xf32>
    %cst_288 = arith.constant 3.200000e+01 : f32
    %927 = vector.broadcast %cst_288 : f32 to vector<16x1xf32>
    %928 = arith.divf %926, %927 : vector<16x1xf32>
    %929 = vector.broadcast %928 : vector<16x1xf32> to vector<16x32xf32>
    %930 = arith.subf %922, %929 : vector<16x32xf32>
    %931 = arith.mulf %930, %930 : vector<16x32xf32>
    %cst_289 = arith.constant dense<0.000000e+00> : vector<16xf32>
    %932 = vector.multi_reduction <add>, %931, %cst_289 [1] : vector<16x32xf32> to vector<16xf32>
    %933 = vector.shape_cast %932 : vector<16xf32> to vector<16x1xf32>
    %cst_290 = arith.constant 3.200000e+01 : f32
    %934 = vector.broadcast %cst_290 : f32 to vector<16x1xf32>
    %935 = arith.divf %933, %934 : vector<16x1xf32>
    %936 = vector.broadcast %928 : vector<16x1xf32> to vector<16x32xf32>
    %937 = arith.subf %922, %936 : vector<16x32xf32>
    %cst_291 = arith.constant 9.99999974E-6 : f32
    %938 = vector.broadcast %cst_291 : f32 to vector<16x1xf32>
    %939 = arith.addf %935, %938 : vector<16x1xf32>
    %940 = math.rsqrt %939 : vector<16x1xf32>
    %941 = vector.broadcast %940 : vector<16x1xf32> to vector<16x32xf32>
    %942 = arith.mulf %937, %941 : vector<16x32xf32>
    %943 = vector.broadcast %923 : vector<1x32xf32> to vector<16x32xf32>
    %944 = arith.mulf %942, %943 : vector<16x32xf32>
    %945 = vector.broadcast %924 : vector<1x32xf32> to vector<16x32xf32>
    %946 = arith.addf %944, %945 : vector<16x32xf32>
    %c0_292 = arith.constant 0 : index
    %c0_293 = arith.constant 0 : index
    %947 = vector.load %arg22[%c0_292, %c0_293] : memref<16x32xf32, #tpu.memory_space<vmem>>, vector<16x32xf32>
    tpu.vector_store %arg22[%c0_292, %c0_293], %946 {strides = array<i32>} : memref<16x32xf32, #tpu.memory_space<vmem>>, vector<16x32xf32>,
    return
  }
  func.func @transform_0(%arg0: i32) -> (i32, i32) {
    %c0_i32 = arith.constant 0 : i32
    %c0_i32_0 = arith.constant 0 : i32
    return %arg0, %c0_i32 : i32, i32
  }
  func.func @transform_1(%arg0: i32) -> (i32, i32) {
    %c0_i32 = arith.constant 0 : i32
    %c0_i32_0 = arith.constant 0 : i32
    return %arg0, %c0_i32 : i32, i32
  }
  func.func @transform_2(%arg0: i32) -> (i32, i32) {
    %c0_i32 = arith.constant 0 : i32
    %c0_i32_0 = arith.constant 0 : i32
    %c0_i32_1 = arith.constant 0 : i32
    return %c0_i32, %c0_i32_0 : i32, i32
  }
  func.func @transform_3(%arg0: i32) -> (i32, i32) {
    %c0_i32 = arith.constant 0 : i32
    %c0_i32_0 = arith.constant 0 : i32
    %c0_i32_1 = arith.constant 0 : i32
    return %c0_i32, %c0_i32_0 : i32, i32
  }
  func.func @transform_4(%arg0: i32) -> (i32, i32, i32) {
    %c0_i32 = arith.constant 0 : i32
    %c0_i32_0 = arith.constant 0 : i32
    %c0_i32_1 = arith.constant 0 : i32
    %c0_i32_2 = arith.constant 0 : i32
    return %c0_i32, %c0_i32_0, %c0_i32_1 : i32, i32, i32
  }
  func.func @transform_5(%arg0: i32) -> (i32, i32, i32) {
    %c0_i32 = arith.constant 0 : i32
    %c0_i32_0 = arith.constant 0 : i32
    %c0_i32_1 = arith.constant 0 : i32
    %c0_i32_2 = arith.constant 0 : i32
    return %c0_i32, %c0_i32_0, %c0_i32_1 : i32, i32, i32
  }
  func.func @transform_6(%arg0: i32) -> (i32, i32, i32) {
    %c0_i32 = arith.constant 0 : i32
    %c0_i32_0 = arith.constant 0 : i32
    %c0_i32_1 = arith.constant 0 : i32
    %c0_i32_2 = arith.constant 0 : i32
    return %c0_i32, %c0_i32_0, %c0_i32_1 : i32, i32, i32
  }
  func.func @transform_7(%arg0: i32) -> (i32, i32, i32) {
    %c0_i32 = arith.constant 0 : i32
    %c0_i32_0 = arith.constant 0 : i32
    %c0_i32_1 = arith.constant 0 : i32
    %c0_i32_2 = arith.constant 0 : i32
    return %c0_i32, %c0_i32_0, %c0_i32_1 : i32, i32, i32
  }
  func.func @transform_8(%arg0: i32) -> (i32, i32, i32) {
    %c0_i32 = arith.constant 0 : i32
    %c0_i32_0 = arith.constant 0 : i32
    %c0_i32_1 = arith.constant 0 : i32
    %c0_i32_2 = arith.constant 0 : i32
    return %c0_i32, %c0_i32_0, %c0_i32_1 : i32, i32, i32
  }
  func.func @transform_9(%arg0: i32) -> (i32, i32, i32) {
    %c0_i32 = arith.constant 0 : i32
    %c0_i32_0 = arith.constant 0 : i32
    %c0_i32_1 = arith.constant 0 : i32
    %c0_i32_2 = arith.constant 0 : i32
    return %c0_i32, %c0_i32_0, %c0_i32_1 : i32, i32, i32
  }
  func.func @transform_10(%arg0: i32) -> (i32, i32, i32) {
    %c0_i32 = arith.constant 0 : i32
    %c0_i32_0 = arith.constant 0 : i32
    %c0_i32_1 = arith.constant 0 : i32
    %c0_i32_2 = arith.constant 0 : i32
    return %c0_i32, %c0_i32_0, %c0_i32_1 : i32, i32, i32
  }
  func.func @transform_11(%arg0: i32) -> (i32, i32) {
    %c0_i32 = arith.constant 0 : i32
    %c0_i32_0 = arith.constant 0 : i32
    %c0_i32_1 = arith.constant 0 : i32
    return %c0_i32, %c0_i32_0 : i32, i32
  }
  func.func @transform_12(%arg0: i32) -> (i32, i32) {
    %c0_i32 = arith.constant 0 : i32
    %c0_i32_0 = arith.constant 0 : i32
    %c0_i32_1 = arith.constant 0 : i32
    return %c0_i32, %c0_i32_0 : i32, i32
  }
  func.func @transform_13(%arg0: i32) -> (i32, i32, i32) {
    %c0_i32 = arith.constant 0 : i32
    %c0_i32_0 = arith.constant 0 : i32
    %c0_i32_1 = arith.constant 0 : i32
    %c0_i32_2 = arith.constant 0 : i32
    return %c0_i32, %c0_i32_0, %c0_i32_1 : i32, i32, i32
  }
  func.func @transform_14(%arg0: i32) -> (i32, i32, i32) {
    %c0_i32 = arith.constant 0 : i32
    %c0_i32_0 = arith.constant 0 : i32
    %c0_i32_1 = arith.constant 0 : i32
    %c0_i32_2 = arith.constant 0 : i32
    return %c0_i32, %c0_i32_0, %c0_i32_1 : i32, i32, i32
  }
  func.func @transform_15(%arg0: i32) -> (i32, i32, i32) {
    %c0_i32 = arith.constant 0 : i32
    %c0_i32_0 = arith.constant 0 : i32
    %c0_i32_1 = arith.constant 0 : i32
    %c0_i32_2 = arith.constant 0 : i32
    return %c0_i32, %c0_i32_0, %c0_i32_1 : i32, i32, i32
  }
  func.func @transform_16(%arg0: i32) -> (i32, i32, i32) {
    %c0_i32 = arith.constant 0 : i32
    %c0_i32_0 = arith.constant 0 : i32
    %c0_i32_1 = arith.constant 0 : i32
    %c0_i32_2 = arith.constant 0 : i32
    return %c0_i32, %c0_i32_0, %c0_i32_1 : i32, i32, i32
  }
  func.func @transform_17(%arg0: i32) -> (i32, i32, i32) {
    %c0_i32 = arith.constant 0 : i32
    %c0_i32_0 = arith.constant 0 : i32
    %c0_i32_1 = arith.constant 0 : i32
    %c0_i32_2 = arith.constant 0 : i32
    return %c0_i32, %c0_i32_0, %c0_i32_1 : i32, i32, i32
  }
  func.func @transform_18(%arg0: i32) -> (i32, i32, i32) {
    %c0_i32 = arith.constant 0 : i32
    %c0_i32_0 = arith.constant 0 : i32
    %c0_i32_1 = arith.constant 0 : i32
    %c0_i32_2 = arith.constant 0 : i32
    return %c0_i32, %c0_i32_0, %c0_i32_1 : i32, i32, i32
  }
  func.func @transform_19(%arg0: i32) -> (i32, i32, i32) {
    %c0_i32 = arith.constant 0 : i32
    %c0_i32_0 = arith.constant 0 : i32
    %c0_i32_1 = arith.constant 0 : i32
    %c0_i32_2 = arith.constant 0 : i32
    return %c0_i32, %c0_i32_0, %c0_i32_1 : i32, i32, i32
  }
  func.func @transform_20(%arg0: i32) -> (i32, i32) {
    %c0_i32 = arith.constant 0 : i32
    %c0_i32_0 = arith.constant 0 : i32
    %c0_i32_1 = arith.constant 0 : i32
    return %c0_i32, %c0_i32_0 : i32, i32
  }
  func.func @transform_21(%arg0: i32) -> (i32, i32) {
    %c0_i32 = arith.constant 0 : i32
    %c0_i32_0 = arith.constant 0 : i32
    return %arg0, %c0_i32 : i32, i32
  }
}

</mosaic_0001>

<llo_original>
// kernel: bidirectional_transformer_pallas.1
$region0: #{bidirectional_transformer_pallas.1}
  #allocation0 [shape = 'u32[]', space=smem, size = 0x4, offset = 0x4, fixed_abs, tag = 'smem constant byte address 0x4 - core index']
  #allocation1 [shape = 'u32[72,128]{1,0:T(1,128)}', space=vmem, size = 0x9000, scoped, tag = 'internal scratch']
  %s0 = inlined_call_operand.vmem [shape: f32[16,16], index: 0, kind: input, shape index: {}]
  %s1 = inlined_call_operand.vmem [shape: f32[16,16], index: 1, kind: input, shape index: {}]
  %s2 = inlined_call_operand.vmem [shape: bf16[16,32], index: 2, kind: input, shape index: {}]
  %s3 = inlined_call_operand.vmem [shape: f32[1,32], index: 3, kind: input, shape index: {}]
  %s4 = inlined_call_operand.vmem [shape: bf16[2,32,96], index: 4, kind: input, shape index: {}]
  %s5 = inlined_call_operand.vmem [shape: f32[2,1,96], index: 5, kind: input, shape index: {}]
  %s6 = inlined_call_operand.vmem [shape: bf16[2,32,32], index: 6, kind: input, shape index: {}]
  %s7 = inlined_call_operand.vmem [shape: bf16[2,32,64], index: 7, kind: input, shape index: {}]
  %s8 = inlined_call_operand.vmem [shape: f32[2,1,64], index: 8, kind: input, shape index: {}]
  %s9 = inlined_call_operand.vmem [shape: bf16[2,64,32], index: 9, kind: input, shape index: {}]
  %s10 = inlined_call_operand.vmem [shape: f32[2,6,32], index: 10, kind: input, shape index: {}]
  %s11 = inlined_call_operand.vmem [shape: bf16[16,32], index: 11, kind: input, shape index: {}]
  %s12 = inlined_call_operand.vmem [shape: f32[1,32], index: 12, kind: input, shape index: {}]
  %s13 = inlined_call_operand.vmem [shape: bf16[2,32,96], index: 13, kind: input, shape index: {}]
  %s14 = inlined_call_operand.vmem [shape: f32[2,1,96], index: 14, kind: input, shape index: {}]
  %s15 = inlined_call_operand.vmem [shape: bf16[2,32,32], index: 15, kind: input, shape index: {}]
  %s16 = inlined_call_operand.vmem [shape: bf16[2,32,64], index: 16, kind: input, shape index: {}]
  %s17 = inlined_call_operand.vmem [shape: f32[2,1,64], index: 17, kind: input, shape index: {}]
  %s18 = inlined_call_operand.vmem [shape: bf16[2,64,32], index: 18, kind: input, shape index: {}]
  %s19 = inlined_call_operand.vmem [shape: f32[2,6,32], index: 19, kind: input, shape index: {}]
  %s20 = inlined_call_operand.vmem [shape: f32[2,32], index: 20, kind: input, shape index: {}]
  %s21 = inlined_call_operand.hbm [shape: f32[16,32], index: 21, kind: output, shape index: {}]
  %s22 = sld [smem:[#allocation0]]
  $region94: #{bidirectional_transformer_pallas.1} parent=0
    _
  %s24 = ssub.s32 1, %s22
  %s25 = scalar_select 0, %s24, %s22
  $region1: #{bidirectional_transformer_pallas.1} parent=0
    #allocation2 [shape = 'u8[8192]{0}', space=vmem, size = 0x2000, scoped, tag = 'output window, operand 0, single buffered']
    #allocation3 [shape = 's32[1]{0}', space=sflag, size = 0x4, scoped, tag = 'scoped memory for bidirectional_transformer_pallas.1']
    %26 = vsyncpa [#allocation3], 0
    // Predicated region
    $region2: #{bidirectional_transformer_pallas.1} parent=1 // pred_check
      _
    $region3: #{bidirectional_transformer_pallas.1} parent=1 // pred_check_branch
      %28 = sbr.rel (0) target = $region5
    $region4: #{bidirectional_transformer_pallas.1} parent=1 // pred_region
      _
    $region5: #{bidirectional_transformer_pallas.1} parent=1 // pred_fallthru
      _
    // Predicated region
    $region6: #{bidirectional_transformer_pallas.1} parent=1 // pred_check
      _
    $region7: #{bidirectional_transformer_pallas.1} parent=1 // pred_check_branch
      %30 = sbr.rel (0) target = $region9
    $region8: #{bidirectional_transformer_pallas.1} parent=1 // pred_region
      _
    $region9: #{bidirectional_transformer_pallas.1} parent=1 // pred_fallthru
      _
    // Predicated region
    $region10: #{bidirectional_transformer_pallas.1} parent=1 // pred_check
      _
    $region11: #{bidirectional_transformer_pallas.1} parent=1 // pred_check_branch
      %32 = sbr.rel (0) target = $region13
    $region12: #{bidirectional_transformer_pallas.1} parent=1 // pred_region
      _
    $region13: #{bidirectional_transformer_pallas.1} parent=1 // pred_fallthru
      _
    // Predicated region
    $region14: #{bidirectional_transformer_pallas.1} parent=1 // pred_check
      _
    $region15: #{bidirectional_transformer_pallas.1} parent=1 // pred_check_branch
      %34 = sbr.rel (0) target = $region17
    $region16: #{bidirectional_transformer_pallas.1} parent=1 // pred_region
      _
    $region17: #{bidirectional_transformer_pallas.1} parent=1 // pred_fallthru
      _
    // Predicated region
    $region18: #{bidirectional_transformer_pallas.1} parent=1 // pred_check
      _
    $region19: #{bidirectional_transformer_pallas.1} parent=1 // pred_check_branch
      %36 = sbr.rel (0) target = $region21
    $region20: #{bidirectional_transformer_pallas.1} parent=1 // pred_region
      _
    $region21: #{bidirectional_transformer_pallas.1} parent=1 // pred_fallthru
      _
    // Predicated region
    $region22: #{bidirectional_transformer_pallas.1} parent=1 // pred_check
      _
    $region23: #{bidirectional_transformer_pallas.1} parent=1 // pred_check_branch
      %38 = sbr.rel (0) target = $region25
    $region24: #{bidirectional_transformer_pallas.1} parent=1 // pred_region
      _
    $region25: #{bidirectional_transformer_pallas.1} parent=1 // pred_fallthru
      _
    // Predicated region
    $region26: #{bidirectional_transformer_pallas.1} parent=1 // pred_check
      _
    $region27: #{bidirectional_transformer_pallas.1} parent=1 // pred_check_branch
      %40 = sbr.rel (0) target = $region29
    $region28: #{bidirectional_transformer_pallas.1} parent=1 // pred_region
      _
    $region29: #{bidirectional_transformer_pallas.1} parent=1 // pred_fallthru
      _
    // Predicated region
    $region30: #{bidirectional_transformer_pallas.1} parent=1 // pred_check
      _
    $region31: #{bidirectional_transformer_pallas.1} parent=1 // pred_check_branch
      %42 = sbr.rel (0) target = $region33
    $region32: #{bidirectional_transformer_pallas.1} parent=1 // pred_region
      _
    $region33: #{bidirectional_transformer_pallas.1} parent=1 // pred_fallthru
      _
    // Predicated region
    $region34: #{bidirectional_transformer_pallas.1} parent=1 // pred_check
      _
    $region35: #{bidirectional_transformer_pallas.1} parent=1 // pred_check_branch
      %44 = sbr.rel (0) target = $region37
    $region36: #{bidirectional_transformer_pallas.1} parent=1 // pred_region
      _
    $region37: #{bidirectional_transformer_pallas.1} parent=1 // pred_fallthru
      _
    // Predicated region
    $region38: #{bidirectional_transformer_pallas.1} parent=1 // pred_check
      _
    $region39: #{bidirectional_transformer_pallas.1} parent=1 // pred_check_branch
      %46 = sbr.rel (0) target = $region41
    $region40: #{bidirectional_transformer_pallas.1} parent=1 // pred_region
      _
    $region41: #{bidirectional_transformer_pallas.1} parent=1 // pred_fallthru
      _
    // Predicated region
    $region42: #{bidirectional_transformer_pallas.1} parent=1 // pred_check
      _
    $region43: #{bidirectional_transformer_pallas.1} parent=1 // pred_check_branch
      %48 = sbr.rel (0) target = $region45
    $region44: #{bidirectional_transformer_pallas.1} parent=1 // pred_region
      _
    $region45: #{bidirectional_transformer_pallas.1} parent=1 // pred_fallthru
      _
    // Predicated region
    $region46: #{bidirectional_transformer_pallas.1} parent=1 // pred_check
      _
    $region47: #{bidirectional_transformer_pallas.1} parent=1 // pred_check_branch
      %50 = sbr.rel (0) target = $region49
    $region48: #{bidirectional_transformer_pallas.1} parent=1 // pred_region
      _
    $region49: #{bidirectional_transformer_pallas.1} parent=1 // pred_fallthru
      _
    // Predicated region
    $region50: #{bidirectional_transformer_pallas.1} parent=1 // pred_check
      _
    $region51: #{bidirectional_transformer_pallas.1} parent=1 // pred_check_branch
      %52 = sbr.rel (0) target = $region53
    $region52: #{bidirectional_transformer_pallas.1} parent=1 // pred_region
      _
    $region53: #{bidirectional_transformer_pallas.1} parent=1 // pred_fallthru
      _
    // Predicated region
    $region54: #{bidirectional_transformer_pallas.1} parent=1 // pred_check
      _
    $region55: #{bidirectional_transformer_pallas.1} parent=1 // pred_check_branch
      %54 = sbr.rel (0) target = $region57
    $region56: #{bidirectional_transformer_pallas.1} parent=1 // pred_region
      _
    $region57: #{bidirectional_transformer_pallas.1} parent=1 // pred_fallthru
      _
    // Predicated region
    $region58: #{bidirectional_transformer_pallas.1} parent=1 // pred_check
      _
    $region59: #{bidirectional_transformer_pallas.1} parent=1 // pred_check_branch
      %56 = sbr.rel (0) target = $region61
    $region60: #{bidirectional_transformer_pallas.1} parent=1 // pred_region
      _
    $region61: #{bidirectional_transformer_pallas.1} parent=1 // pred_fallthru
      _
    // Predicated region
    $region62: #{bidirectional_transformer_pallas.1} parent=1 // pred_check
      _
    $region63: #{bidirectional_transformer_pallas.1} parent=1 // pred_check_branch
      %58 = sbr.rel (0) target = $region65
    $region64: #{bidirectional_transformer_pallas.1} parent=1 // pred_region
      _
    $region65: #{bidirectional_transformer_pallas.1} parent=1 // pred_fallthru
      _
    // Predicated region
    $region66: #{bidirectional_transformer_pallas.1} parent=1 // pred_check
      _
    $region67: #{bidirectional_transformer_pallas.1} parent=1 // pred_check_branch
      %60 = sbr.rel (0) target = $region69
    $region68: #{bidirectional_transformer_pallas.1} parent=1 // pred_region
      _
    $region69: #{bidirectional_transformer_pallas.1} parent=1 // pred_fallthru
      _
    // Predicated region
    $region70: #{bidirectional_transformer_pallas.1} parent=1 // pred_check
      _
    $region71: #{bidirectional_transformer_pallas.1} parent=1 // pred_check_branch
      %62 = sbr.rel (0) target = $region73
    $region72: #{bidirectional_transformer_pallas.1} parent=1 // pred_region
      _
    $region73: #{bidirectional_transformer_pallas.1} parent=1 // pred_fallthru
      _
    // Predicated region
    $region74: #{bidirectional_transformer_pallas.1} parent=1 // pred_check
      _
    $region75: #{bidirectional_transformer_pallas.1} parent=1 // pred_check_branch
      %64 = sbr.rel (0) target = $region77
    $region76: #{bidirectional_transformer_pallas.1} parent=1 // pred_region
      _
    $region77: #{bidirectional_transformer_pallas.1} parent=1 // pred_fallthru
      _
    // Predicated region
    $region78: #{bidirectional_transformer_pallas.1} parent=1 // pred_check
      _
    $region79: #{bidirectional_transformer_pallas.1} parent=1 // pred_check_branch
      %66 = sbr.rel (0) target = $region81
    $region80: #{bidirectional_transformer_pallas.1} parent=1 // pred_region
      _
    $region81: #{bidirectional_transformer_pallas.1} parent=1 // pred_fallthru
      _
    // Predicated region
    $region82: #{bidirectional_transformer_pallas.1} parent=1 // pred_check
      _
    $region83: #{bidirectional_transformer_pallas.1} parent=1 // pred_check_branch
      %68 = sbr.rel (0) target = $region85
    $region84: #{bidirectional_transformer_pallas.1} parent=1 // pred_region
      _
    $region85: #{bidirectional_transformer_pallas.1} parent=1 // pred_fallthru
      _
    %v70 = vld [vmem:[%s0] sm:$0xff]
    %v71 = vld [vmem:[%s0 + $0x8] sm:$0xff]
    %v72 = vpack.c.bf16 %v71, %v70
    %v73 = vld [vmem:[%s2] sm:$0xf]
    %v74 = vld [vmem:[%s2 + $0x4] sm:$0xf]
    %v75 = vld [vmem:[%s3] sm:$0x1]
    %v77 = vperm.slane %v75, 0
    %v81 = vunpack.c.l.b16 %v73
    %v82 = vunpack.c.l.b16 %v74
    %v83 = vpack.c.b16 %v82, %v81
    %vm85 = vcmask 130048
    %v87 = vsel %vm85, %v72, 0
    %89 = vmatpush.bf16.msra.mxu0 0
    %90 = vmatpush.bf16.msra.mxu0 0
    %91 = vmatpush.bf16.msra.mxu0 0
    %92 = vmatpush.bf16.msra.mxu0 0
    %93 = vmatpush.bf16.msra.mxu0 0
    %94 = vmatpush.bf16.msra.mxu0 0
    %95 = vmatpush.bf16.msra.mxu0 0
    %96 = vmatpush.bf16.msra.mxu0 %v83
    %97 = vmatmul.bf16.gmra.mxu0 %v87
    %v98 = vpop.f32.mrf.mxu0
    %v99 = vadd.f32 %v77, %v98
    %v100 = vpop.f32.mrf.mxu0
    %v101 = vadd.f32 %v77, %v100
    %102 = vdwg.mxu0
    %v103 = vld [vmem:[%s4] sm:$0xf]
    %v104 = vld [vmem:[%s4 + $0x4] sm:$0xf]
    %v105 = vld [vmem:[%s4 + $0x8] sm:$0xf]
    %v106 = vld [vmem:[%s4 + $0xc] sm:$0xf]
    %v107 = vld [vmem:[%s5] sm:$0x1]
    %v108 = vld [vmem:[%s6] sm:$0xf]
    %v109 = vld [vmem:[%s6 + $0x4] sm:$0xf]
    %v110 = vld [vmem:[%s6 + $0x8] sm:$0xf]
    %v111 = vld [vmem:[%s6 + $0xc] sm:$0xf]
    %v112 = vld [vmem:[%s7] sm:$0xf]
    %v113 = vld [vmem:[%s7 + $0x4] sm:$0xf]
    %v114 = vld [vmem:[%s7 + $0x8] sm:$0xf]
    %v115 = vld [vmem:[%s7 + $0xc] sm:$0xf]
    %v116 = vld [vmem:[%s8] sm:$0x1]
    %v117 = vld [vmem:[%s9] sm:$0xf]
    %v118 = vld [vmem:[%s9 + $0x4] sm:$0xf]
    %v119 = vld [vmem:[%s9 + $0x8] sm:$0xf]
    %v120 = vld [vmem:[%s9 + $0xc] sm:$0xf]
    %v121 = vld [vmem:[%s9 + $0x10] sm:$0xf]
    %v122 = vld [vmem:[%s9 + $0x14] sm:$0xf]
    %v123 = vld [vmem:[%s9 + $0x18] sm:$0xf]
    %v124 = vld [vmem:[%s9 + $0x1c] sm:$0xf]
    %v125 = vld [vmem:[%s10] sm:$0x3f]
    %v126 = vpack.c.bf16 %v101, %v99
    %v128 = vperm.slane %v107, 0
    %v134 = vunpack.c.l.b16 %v103
    %v135 = vunpack.c.l.b16 %v104
    %v136 = vunpack.c.l.b16 %v105
    %v137 = vunpack.c.l.b16 %v106
    %v138 = vpack.c.b16 %v135, %v134
    %v139 = vpack.c.b16 %v137, %v136
    %vm142 = vcmask 261120
    %v144 = vsel %vm142, %v126, 0
    %146 = vmatpush.bf16.msra.mxu0 0
    %147 = vmatpush.bf16.msra.mxu0 0
    %148 = vmatpush.bf16.msra.mxu0 0
    %149 = vmatpush.bf16.msra.mxu0 0
    %150 = vmatpush.bf16.msra.mxu0 0
    %151 = vmatpush.bf16.msra.mxu0 0
    %152 = vmatpush.bf16.msra.mxu0 %v139
    %153 = vmatpush.bf16.msra.mxu0 %v138
    %154 = vmatmul.bf16.gmra.mxu0 %v144
    %v155 = vpop.f32.mrf.mxu0
    %v156 = vadd.f32 %v128, %v155
    %v157 = vpop.f32.mrf.mxu0
    %v158 = vadd.f32 %v128, %v157
    %159 = vdwg.mxu0
    %v160 = vpack.c.bf16 %v156, %v156
    %v161 = vpack.c.bf16 %v158, %v158
    %v163 = vunpack.c.l.b16 %v160
    %v164 = vpack.c.b16 %v163, %v163
    %165 = vrot.lane.b32.xlu0 %v164, 96
    %v166 = vpop.permute.xlu0 %165
    %vm167 = vcmask 64512
    %v169 = vsel %vm167, %v160, 0
    %v172 = vsel %vm167, %v166, 0
    %174 = vmatpush.bf16.xpose.msra.mxu0 0
    %175 = vmatpush.bf16.xpose.msra.mxu0 0
    %176 = vmatpush.bf16.xpose.msra.mxu0 0
    %177 = vmatpush.bf16.xpose.msra.mxu0 0
    %178 = vmatpush.bf16.xpose.msra.mxu0 0
    %179 = vmatpush.bf16.xpose.msra.mxu0 0
    %180 = vmatpush.bf16.xpose.msra.mxu0 0
    %181 = vmatpush.bf16.xpose.msra.mxu0 %v172
    %182 = vmatmul.bf16.gmra.mxu0 %v169
    %v183 = vpop.f32.mrf.mxu0
    %v184 = vadd.f32 0.0, %v183
    %v185 = vpop.f32.mrf.mxu0
    %186 = vdwg.mxu0
    %v187 = vsel %vm167, %v184, -inf
    %188 = vmax.xlane.f32.xlu0 %v187
    %v189 = vpop.xlane.xlu0 %188
    %v190 = vsub.f32 %v184, %v189
    %v191 = vmul.f32 %v190, 1.442695
    %v192 = vpow.pop %v191
    %v193 = vsel %vm167, %v192, 0.0
    %194 = vadd.xlane.f32.xlu0 %v193
    %v195 = vpop.xlane.xlu0 %194
    %v196 = vrcp.pop %v195
    %v197 = vmul.f32 %v192, %v196
    %v198 = vpack.c.bf16 %v197, %v197
    %199 = vrot.lane.b32.xlu0 %v164, 64
    %v200 = vpop.permute.xlu0 %199
    %v202 = vsel %vm167, %v198, 0
    %vm204 = vcmask 1043456
    %v206 = vsel %vm204, %v200, 0
    %208 = vmatpush.bf16.msra.mxu0 0
    %209 = vmatpush.bf16.msra.mxu0 0
    %210 = vmatpush.bf16.msra.mxu0 0
    %211 = vmatpush.bf16.msra.mxu0 0
    %212 = vmatpush.bf16.msra.mxu0 0
    %213 = vmatpush.bf16.msra.mxu0 0
    %214 = vmatpush.bf16.msra.mxu0 0
    %215 = vmatpush.bf16.msra.mxu0 %v206
    %216 = vmatmul.bf16.gmra.mxu0 %v202
    %v217 = vpop.f32.mrf.mxu0
    %v218 = vadd.f32 0.0, %v217
    %v219 = vpop.f32.mrf.mxu0
    %220 = vdwg.mxu0
    %221 = vrot.lane.b32.xlu0 %v164, 120
    %v222 = vpop.permute.xlu0 %221
    %223 = vrot.lane.b32.xlu0 %v164, 88
    %v224 = vpop.permute.xlu0 %223
    %v226 = vsel %vm167, %v222, 0
    %v229 = vsel %vm167, %v224, 0
    %231 = vmatpush.bf16.xpose.msra.mxu0 0
    %232 = vmatpush.bf16.xpose.msra.mxu0 0
    %233 = vmatpush.bf16.xpose.msra.mxu0 0
    %234 = vmatpush.bf16.xpose.msra.mxu0 0
    %235 = vmatpush.bf16.xpose.msra.mxu0 0
    %236 = vmatpush.bf16.xpose.msra.mxu0 0
    %237 = vmatpush.bf16.xpose.msra.mxu0 0
    %238 = vmatpush.bf16.xpose.msra.mxu0 %v229
    %239 = vmatmul.bf16.gmra.mxu0 %v226
    %v240 = vpop.f32.mrf.mxu0
    %v241 = vadd.f32 0.0, %v240
    %v242 = vpop.f32.mrf.mxu0
    %243 = vdwg.mxu0
    %v244 = vsel %vm167, %v241, -inf
    %245 = vmax.xlane.f32.xlu0 %v244
    %v246 = vpop.xlane.xlu0 %245
    %v247 = vsub.f32 %v241, %v246
    %v248 = vmul.f32 %v247, 1.442695
    %v249 = vpow.pop %v248
    %v250 = vsel %vm167, %v249, 0.0
    %251 = vadd.xlane.f32.xlu0 %v250
    %v252 = vpop.xlane.xlu0 %251
    %v253 = vrcp.pop %v252
    %v254 = vmul.f32 %v249, %v253
    %v255 = vpack.c.bf16 %v254, %v254
    %256 = vrot.lane.b32.xlu0 %v164, 56
    %v257 = vpop.permute.xlu0 %256
    %v259 = vsel %vm167, %v255, 0
    %v262 = vsel %vm204, %v257, 0
    %264 = vmatpush.bf16.msra.mxu0 0
    %265 = vmatpush.bf16.msra.mxu0 0
    %266 = vmatpush.bf16.msra.mxu0 0
    %267 = vmatpush.bf16.msra.mxu0 0
    %268 = vmatpush.bf16.msra.mxu0 0
    %269 = vmatpush.bf16.msra.mxu0 0
    %270 = vmatpush.bf16.msra.mxu0 0
    %271 = vmatpush.bf16.msra.mxu0 %v262
    %272 = vmatmul.bf16.gmra.mxu0 %v259
    %v273 = vpop.f32.mrf.mxu0
    %v274 = vadd.f32 0.0, %v273
    %v275 = vpop.f32.mrf.mxu0
    %276 = vdwg.mxu0
    %277 = vrot.lane.b32.xlu0 %v164, 112
    %v278 = vpop.permute.xlu0 %277
    %279 = vrot.lane.b32.xlu0 %v164, 80
    %v280 = vpop.permute.xlu0 %279
    %v282 = vsel %vm167, %v278, 0
    %v285 = vsel %vm167, %v280, 0
    %287 = vmatpush.bf16.xpose.msra.mxu0 0
    %288 = vmatpush.bf16.xpose.msra.mxu0 0
    %289 = vmatpush.bf16.xpose.msra.mxu0 0
    %290 = vmatpush.bf16.xpose.msra.mxu0 0
    %291 = vmatpush.bf16.xpose.msra.mxu0 0
    %292 = vmatpush.bf16.xpose.msra.mxu0 0
    %293 = vmatpush.bf16.xpose.msra.mxu0 0
    %294 = vmatpush.bf16.xpose.msra.mxu0 %v285
    %295 = vmatmul.bf16.gmra.mxu0 %v282
    %v296 = vpop.f32.mrf.mxu0
    %v297 = vadd.f32 0.0, %v296
    %v298 = vpop.f32.mrf.mxu0
    %299 = vdwg.mxu0
    %v300 = vsel %vm167, %v297, -inf
    %301 = vmax.xlane.f32.xlu0 %v300
    %v302 = vpop.xlane.xlu0 %301
    %v303 = vsub.f32 %v297, %v302
    %v304 = vmul.f32 %v303, 1.442695
    %v305 = vpow.pop %v304
    %v306 = vsel %vm167, %v305, 0.0
    %307 = vadd.xlane.f32.xlu0 %v306
    %v308 = vpop.xlane.xlu0 %307
    %v309 = vrcp.pop %v308
    %v310 = vmul.f32 %v305, %v309
    %v311 = vpack.c.bf16 %v310, %v310
    %312 = vrot.lane.b32.xlu0 %v164, 48
    %v313 = vpop.permute.xlu0 %312
    %v315 = vsel %vm167, %v311, 0
    %v318 = vsel %vm204, %v313, 0
    %320 = vmatpush.bf16.msra.mxu0 0
    %321 = vmatpush.bf16.msra.mxu0 0
    %322 = vmatpush.bf16.msra.mxu0 0
    %323 = vmatpush.bf16.msra.mxu0 0
    %324 = vmatpush.bf16.msra.mxu0 0
    %325 = vmatpush.bf16.msra.mxu0 0
    %326 = vmatpush.bf16.msra.mxu0 0
    %327 = vmatpush.bf16.msra.mxu0 %v318
    %328 = vmatmul.bf16.gmra.mxu0 %v315
    %v329 = vpop.f32.mrf.mxu0
    %v330 = vadd.f32 0.0, %v329
    %v331 = vpop.f32.mrf.mxu0
    %332 = vdwg.mxu0
    %333 = vrot.lane.b32.xlu0 %v164, 104
    %v334 = vpop.permute.xlu0 %333
    %335 = vrot.lane.b32.xlu0 %v164, 72
    %v336 = vpop.permute.xlu0 %335
    %v338 = vsel %vm167, %v334, 0
    %v341 = vsel %vm167, %v336, 0
    %343 = vmatpush.bf16.xpose.msra.mxu0 0
    %344 = vmatpush.bf16.xpose.msra.mxu0 0
    %345 = vmatpush.bf16.xpose.msra.mxu0 0
    %346 = vmatpush.bf16.xpose.msra.mxu0 0
    %347 = vmatpush.bf16.xpose.msra.mxu0 0
    %348 = vmatpush.bf16.xpose.msra.mxu0 0
    %349 = vmatpush.bf16.xpose.msra.mxu0 0
    %350 = vmatpush.bf16.xpose.msra.mxu0 %v341
    %351 = vmatmul.bf16.gmra.mxu0 %v338
    %v352 = vpop.f32.mrf.mxu0
    %v353 = vadd.f32 0.0, %v352
    %v354 = vpop.f32.mrf.mxu0
    %355 = vdwg.mxu0
    %v356 = vsel %vm167, %v353, -inf
    %357 = vmax.xlane.f32.xlu0 %v356
    %v358 = vpop.xlane.xlu0 %357
    %v359 = vsub.f32 %v353, %v358
    %v360 = vmul.f32 %v359, 1.442695
    %v361 = vpow.pop %v360
    %v362 = vsel %vm167, %v361, 0.0
    %363 = vadd.xlane.f32.xlu0 %v362
    %v364 = vpop.xlane.xlu0 %363
    %v365 = vrcp.pop %v364
    %v366 = vmul.f32 %v361, %v365
    %v367 = vpack.c.bf16 %v366, %v366
    %368 = vrot.lane.b32.xlu0 %v164, 40
    %v369 = vpop.permute.xlu0 %368
    %v371 = vsel %vm167, %v367, 0
    %v374 = vsel %vm204, %v369, 0
    %376 = vmatpush.bf16.msra.mxu0 0
    %377 = vmatpush.bf16.msra.mxu0 0
    %378 = vmatpush.bf16.msra.mxu0 0
    %379 = vmatpush.bf16.msra.mxu0 0
    %380 = vmatpush.bf16.msra.mxu0 0
    %381 = vmatpush.bf16.msra.mxu0 0
    %382 = vmatpush.bf16.msra.mxu0 0
    %383 = vmatpush.bf16.msra.mxu0 %v374
    %384 = vmatmul.bf16.gmra.mxu0 %v371
    %v385 = vpop.f32.mrf.mxu0
    %v386 = vadd.f32 0.0, %v385
    %v387 = vpop.f32.mrf.mxu0
    %388 = vdwg.mxu0
    %390 = vrot.lane.b32.xlu0 %v274, 8
    %v391 = vpop.permute.xlu0 %390
    %394 = vrot.lane.b32.xlu0 %v330, 16
    %v395 = vpop.permute.xlu0 %394
    %398 = vrot.lane.b32.xlu0 %v386, 24
    %v399 = vpop.permute.xlu0 %398
    %v401 = vsel %vm167, %v218, %v391
    %v402 = vsel %vm85, %v401, %v395
    %vm403 = vcmask 195584
    %v404 = vsel %vm403, %v402, %v399
    %v406 = vunpack.c.l.b16 %v161
    %v407 = vpack.c.b16 %v406, %v406
    %408 = vrot.lane.b32.xlu0 %v407, 96
    %v409 = vpop.permute.xlu0 %408
    %v411 = vsel %vm167, %v161, 0
    %v414 = vsel %vm167, %v409, 0
    %416 = vmatpush.bf16.xpose.msra.mxu0 0
    %417 = vmatpush.bf16.xpose.msra.mxu0 0
    %418 = vmatpush.bf16.xpose.msra.mxu0 0
    %419 = vmatpush.bf16.xpose.msra.mxu0 0
    %420 = vmatpush.bf16.xpose.msra.mxu0 0
    %421 = vmatpush.bf16.xpose.msra.mxu0 0
    %422 = vmatpush.bf16.xpose.msra.mxu0 0
    %423 = vmatpush.bf16.xpose.msra.mxu0 %v414
    %424 = vmatmul.bf16.gmra.mxu0 %v411
    %v425 = vpop.f32.mrf.mxu0
    %v426 = vadd.f32 0.0, %v425
    %v427 = vpop.f32.mrf.mxu0
    %428 = vdwg.mxu0
    %v429 = vsel %vm167, %v426, -inf
    %430 = vmax.xlane.f32.xlu0 %v429
    %v431 = vpop.xlane.xlu0 %430
    %v432 = vsub.f32 %v426, %v431
    %v433 = vmul.f32 %v432, 1.442695
    %v434 = vpow.pop %v433
    %v435 = vsel %vm167, %v434, 0.0
    %436 = vadd.xlane.f32.xlu0 %v435
    %v437 = vpop.xlane.xlu0 %436
    %v438 = vrcp.pop %v437
    %v439 = vmul.f32 %v434, %v438
    %v440 = vpack.c.bf16 %v439, %v439
    %441 = vrot.lane.b32.xlu0 %v407, 64
    %v442 = vpop.permute.xlu0 %441
    %v444 = vsel %vm167, %v440, 0
    %v447 = vsel %vm204, %v442, 0
    %449 = vmatpush.bf16.msra.mxu0 0
    %450 = vmatpush.bf16.msra.mxu0 0
    %451 = vmatpush.bf16.msra.mxu0 0
    %452 = vmatpush.bf16.msra.mxu0 0
    %453 = vmatpush.bf16.msra.mxu0 0
    %454 = vmatpush.bf16.msra.mxu0 0
    %455 = vmatpush.bf16.msra.mxu0 0
    %456 = vmatpush.bf16.msra.mxu0 %v447
    %457 = vmatmul.bf16.gmra.mxu0 %v444
    %v458 = vpop.f32.mrf.mxu0
    %v459 = vadd.f32 0.0, %v458
    %v460 = vpop.f32.mrf.mxu0
    %461 = vdwg.mxu0
    %462 = vrot.lane.b32.xlu0 %v407, 120
    %v463 = vpop.permute.xlu0 %462
    %464 = vrot.lane.b32.xlu0 %v407, 88
    %v465 = vpop.permute.xlu0 %464
    %v467 = vsel %vm167, %v463, 0
    %v470 = vsel %vm167, %v465, 0
    %472 = vmatpush.bf16.xpose.msra.mxu0 0
    %473 = vmatpush.bf16.xpose.msra.mxu0 0
    %474 = vmatpush.bf16.xpose.msra.mxu0 0
    %475 = vmatpush.bf16.xpose.msra.mxu0 0
    %476 = vmatpush.bf16.xpose.msra.mxu0 0
    %477 = vmatpush.bf16.xpose.msra.mxu0 0
    %478 = vmatpush.bf16.xpose.msra.mxu0 0
    %479 = vmatpush.bf16.xpose.msra.mxu0 %v470
    %480 = vmatmul.bf16.gmra.mxu0 %v467
    %v481 = vpop.f32.mrf.mxu0
    %v482 = vadd.f32 0.0, %v481
    %v483 = vpop.f32.mrf.mxu0
    %484 = vdwg.mxu0
    %v485 = vsel %vm167, %v482, -inf
    %486 = vmax.xlane.f32.xlu0 %v485
    %v487 = vpop.xlane.xlu0 %486
    %v488 = vsub.f32 %v482, %v487
    %v489 = vmul.f32 %v488, 1.442695
    %v490 = vpow.pop %v489
    %v491 = vsel %vm167, %v490, 0.0
    %492 = vadd.xlane.f32.xlu0 %v491
    %v493 = vpop.xlane.xlu0 %492
    %v494 = vrcp.pop %v493
    %v495 = vmul.f32 %v490, %v494
    %v496 = vpack.c.bf16 %v495, %v495
    %497 = vrot.lane.b32.xlu0 %v407, 56
    %v498 = vpop.permute.xlu0 %497
    %v500 = vsel %vm167, %v496, 0
    %v503 = vsel %vm204, %v498, 0
    %505 = vmatpush.bf16.msra.mxu0 0
    %506 = vmatpush.bf16.msra.mxu0 0
    %507 = vmatpush.bf16.msra.mxu0 0
    %508 = vmatpush.bf16.msra.mxu0 0
    %509 = vmatpush.bf16.msra.mxu0 0
    %510 = vmatpush.bf16.msra.mxu0 0
    %511 = vmatpush.bf16.msra.mxu0 0
    %512 = vmatpush.bf16.msra.mxu0 %v503
    %513 = vmatmul.bf16.gmra.mxu0 %v500
    %v514 = vpop.f32.mrf.mxu0
    %v515 = vadd.f32 0.0, %v514
    %v516 = vpop.f32.mrf.mxu0
    %517 = vdwg.mxu0
    %518 = vrot.lane.b32.xlu0 %v407, 112
    %v519 = vpop.permute.xlu0 %518
    %520 = vrot.lane.b32.xlu0 %v407, 80
    %v521 = vpop.permute.xlu0 %520
    %v523 = vsel %vm167, %v519, 0
    %v526 = vsel %vm167, %v521, 0
    %528 = vmatpush.bf16.xpose.msra.mxu0 0
    %529 = vmatpush.bf16.xpose.msra.mxu0 0
    %530 = vmatpush.bf16.xpose.msra.mxu0 0
    %531 = vmatpush.bf16.xpose.msra.mxu0 0
    %532 = vmatpush.bf16.xpose.msra.mxu0 0
    %533 = vmatpush.bf16.xpose.msra.mxu0 0
    %534 = vmatpush.bf16.xpose.msra.mxu0 0
    %535 = vmatpush.bf16.xpose.msra.mxu0 %v526
    %536 = vmatmul.bf16.gmra.mxu0 %v523
    %v537 = vpop.f32.mrf.mxu0
    %v538 = vadd.f32 0.0, %v537
    %v539 = vpop.f32.mrf.mxu0
    %540 = vdwg.mxu0
    %v541 = vsel %vm167, %v538, -inf
    %542 = vmax.xlane.f32.xlu0 %v541
    %v543 = vpop.xlane.xlu0 %542
    %v544 = vsub.f32 %v538, %v543
    %v545 = vmul.f32 %v544, 1.442695
    %v546 = vpow.pop %v545
    %v547 = vsel %vm167, %v546, 0.0
    %548 = vadd.xlane.f32.xlu0 %v547
    %v549 = vpop.xlane.xlu0 %548
    %v550 = vrcp.pop %v549
    %v551 = vmul.f32 %v546, %v550
    %v552 = vpack.c.bf16 %v551, %v551
    %553 = vrot.lane.b32.xlu0 %v407, 48
    %v554 = vpop.permute.xlu0 %553
    %v556 = vsel %vm167, %v552, 0
    %v559 = vsel %vm204, %v554, 0
    %561 = vmatpush.bf16.msra.mxu0 0
    %562 = vmatpush.bf16.msra.mxu0 0
    %563 = vmatpush.bf16.msra.mxu0 0
    %564 = vmatpush.bf16.msra.mxu0 0
    %565 = vmatpush.bf16.msra.mxu0 0
    %566 = vmatpush.bf16.msra.mxu0 0
    %567 = vmatpush.bf16.msra.mxu0 0
    %568 = vmatpush.bf16.msra.mxu0 %v559
    %569 = vmatmul.bf16.gmra.mxu0 %v556
    %v570 = vpop.f32.mrf.mxu0
    %v571 = vadd.f32 0.0, %v570
    %v572 = vpop.f32.mrf.mxu0
    %573 = vdwg.mxu0
    %574 = vrot.lane.b32.xlu0 %v407, 104
    %v575 = vpop.permute.xlu0 %574
    %576 = vrot.lane.b32.xlu0 %v407, 72
    %v577 = vpop.permute.xlu0 %576
    %v579 = vsel %vm167, %v575, 0
    %v582 = vsel %vm167, %v577, 0
    %584 = vmatpush.bf16.xpose.msra.mxu0 0
    %585 = vmatpush.bf16.xpose.msra.mxu0 0
    %586 = vmatpush.bf16.xpose.msra.mxu0 0
    %587 = vmatpush.bf16.xpose.msra.mxu0 0
    %588 = vmatpush.bf16.xpose.msra.mxu0 0
    %589 = vmatpush.bf16.xpose.msra.mxu0 0
    %590 = vmatpush.bf16.xpose.msra.mxu0 0
    %591 = vmatpush.bf16.xpose.msra.mxu0 %v582
    %592 = vmatmul.bf16.gmra.mxu0 %v579
    %v593 = vpop.f32.mrf.mxu0
    %v594 = vadd.f32 0.0, %v593
    %v595 = vpop.f32.mrf.mxu0
    %596 = vdwg.mxu0
    %v597 = vsel %vm167, %v594, -inf
    %598 = vmax.xlane.f32.xlu0 %v597
    %v599 = vpop.xlane.xlu0 %598
    %v600 = vsub.f32 %v594, %v599
    %v601 = vmul.f32 %v600, 1.442695
    %v602 = vpow.pop %v601
    %v603 = vsel %vm167, %v602, 0.0
    %604 = vadd.xlane.f32.xlu0 %v603
    %v605 = vpop.xlane.xlu0 %604
    %v606 = vrcp.pop %v605
    %v607 = vmul.f32 %v602, %v606
    %v608 = vpack.c.bf16 %v607, %v607
    %609 = vrot.lane.b32.xlu0 %v407, 40
    %v610 = vpop.permute.xlu0 %609
    %v612 = vsel %vm167, %v608, 0
    %v615 = vsel %vm204, %v610, 0
    %617 = vmatpush.bf16.msra.mxu0 0
    %618 = vmatpush.bf16.msra.mxu0 0
    %619 = vmatpush.bf16.msra.mxu0 0
    %620 = vmatpush.bf16.msra.mxu0 0
    %621 = vmatpush.bf16.msra.mxu0 0
    %622 = vmatpush.bf16.msra.mxu0 0
    %623 = vmatpush.bf16.msra.mxu0 0
    %624 = vmatpush.bf16.msra.mxu0 %v615
    %625 = vmatmul.bf16.gmra.mxu0 %v612
    %v626 = vpop.f32.mrf.mxu0
    %v627 = vadd.f32 0.0, %v626
    %v628 = vpop.f32.mrf.mxu0
    %629 = vdwg.mxu0
    %631 = vrot.lane.b32.xlu0 %v515, 8
    %v632 = vpop.permute.xlu0 %631
    %635 = vrot.lane.b32.xlu0 %v571, 16
    %v636 = vpop.permute.xlu0 %635
    %639 = vrot.lane.b32.xlu0 %v627, 24
    %v640 = vpop.permute.xlu0 %639
    %v642 = vsel %vm167, %v459, %v632
    %v643 = vsel %vm85, %v642, %v636
    %v644 = vsel %vm403, %v643, %v640
    %v645 = vpack.c.bf16 %v644, %v404
    %v646 = vperm.slane %v125, 0
    %v651 = vunpack.c.l.b16 %v108
    %v652 = vunpack.c.l.b16 %v109
    %v653 = vunpack.c.l.b16 %v110
    %v654 = vunpack.c.l.b16 %v111
    %v655 = vpack.c.b16 %v652, %v651
    %v656 = vpack.c.b16 %v654, %v653
    %v660 = vsel %vm142, %v645, 0
    %662 = vmatpush.bf16.msra.mxu0 0
    %663 = vmatpush.bf16.msra.mxu0 0
    %664 = vmatpush.bf16.msra.mxu0 0
    %665 = vmatpush.bf16.msra.mxu0 0
    %666 = vmatpush.bf16.msra.mxu0 0
    %667 = vmatpush.bf16.msra.mxu0 0
    %668 = vmatpush.bf16.msra.mxu0 %v656
    %669 = vmatpush.bf16.msra.mxu0 %v655
    %670 = vmatmul.bf16.gmra.mxu0 %v660
    %v671 = vpop.f32.mrf.mxu0
    %v672 = vadd.f32 %v646, %v671
    %v673 = vpop.f32.mrf.mxu0
    %v674 = vadd.f32 %v646, %v673
    %675 = vdwg.mxu0
    %v676 = vadd.f32 %v99, %v672
    %v677 = vadd.f32 %v101, %v674
    %v678 = vsel %vm142, %v676, 0.0
    %679 = vadd.xlane.f32.xlu0 %v678
    %v680 = vpop.xlane.xlu0 %679
    %v681 = vsel %vm142, %v677, 0.0
    %682 = vadd.xlane.f32.xlu0 %v681
    %v683 = vpop.xlane.xlu0 %682
    %v684 = vrcp.pop 32.0
    %v685 = vmul.f32 32.0, %v684
    %v686 = vsub.f32 1.0, %v685
    %v687 = vmul.f32 %v684, %v686
    %v688 = vadd.f32 %v684, %v687
    %vm689 = vweird.f32 %v684
    %v690 = vsel %vm689, %v684, %v688
    %v691 = vmul.f32 %v680, %v690
    %v692 = vmul.f32 %v683, %v690
    %v693 = vsub.f32 %v676, %v691
    %v694 = vsub.f32 %v677, %v692
    %v695 = vmul.f32 %v693, %v693
    %v696 = vmul.f32 %v694, %v694
    %v697 = vsel %vm142, %v695, 0.0
    %698 = vadd.xlane.f32.xlu0 %v697
    %v699 = vpop.xlane.xlu0 %698
    %v700 = vsel %vm142, %v696, 0.0
    %701 = vadd.xlane.f32.xlu0 %v700
    %v702 = vpop.xlane.xlu0 %701
    %v703 = vmul.f32 %v699, %v690
    %v704 = vmul.f32 %v702, %v690
    %v705 = vadd.f32 %v703, 1e-05
    %v706 = vadd.f32 %v704, 1e-05
    %v707 = vrsqrt.pop %v705
    %v708 = vmul.f32 %v707, %v705
    %v709 = vmul.f32 %v708, %v707
    %v710 = vmul.f32 0.5, %v709
    %v711 = vsub.f32 1.5, %v710
    %v712 = vmul.f32 %v707, %v711
    %vm713 = vweird.f32 %v705
    %vm714 = vweird.f32 %v707
    %vm715 = vmor %vm713, %vm714
    %v716 = vsel %vm715, %v707, %v712
    %v717 = vrsqrt.pop %v706
    %v718 = vmul.f32 %v717, %v706
    %v719 = vmul.f32 %v718, %v717
    %v720 = vmul.f32 0.5, %v719
    %v721 = vsub.f32 1.5, %v720
    %v722 = vmul.f32 %v717, %v721
    %vm723 = vweird.f32 %v706
    %vm724 = vweird.f32 %v717
    %vm725 = vmor %vm723, %vm724
    %v726 = vsel %vm725, %v717, %v722
    %v727 = vmul.f32 %v693, %v716
    %v728 = vmul.f32 %v694, %v726
    %v729 = vperm.slane %v125, 1
    %v730 = vmul.f32 %v727, %v729
    %v731 = vmul.f32 %v728, %v729
    %v732 = vperm.slane %v125, 2
    %v733 = vadd.f32 %v730, %v732
    %v734 = vadd.f32 %v731, %v732
    %v735 = vpack.c.bf16 %v734, %v733
    %v737 = vperm.slane %v116, 0
    %v743 = vunpack.c.l.b16 %v112
    %v744 = vunpack.c.l.b16 %v113
    %v745 = vunpack.c.l.b16 %v114
    %v746 = vunpack.c.l.b16 %v115
    %v747 = vpack.c.b16 %v744, %v743
    %v748 = vpack.c.b16 %v746, %v745
    %v752 = vsel %vm142, %v735, 0
    %754 = vmatpush.bf16.msra.mxu0 0
    %755 = vmatpush.bf16.msra.mxu0 0
    %756 = vmatpush.bf16.msra.mxu0 0
    %757 = vmatpush.bf16.msra.mxu0 0
    %758 = vmatpush.bf16.msra.mxu0 0
    %759 = vmatpush.bf16.msra.mxu0 0
    %760 = vmatpush.bf16.msra.mxu0 %v748
    %761 = vmatpush.bf16.msra.mxu0 %v747
    %762 = vmatmul.bf16.gmra.mxu0 %v752
    %v763 = vpop.f32.mrf.mxu0
    %v764 = vadd.f32 %v737, %v763
    %v765 = vpop.f32.mrf.mxu0
    %v766 = vadd.f32 %v737, %v765
    %767 = vdwg.mxu0
    %v768 = vmax.f32 %v764, 0.0
    %v769 = vmax.f32 %v766, 0.0
    %v770 = vpack.c.bf16 %v769, %v768
    %v771 = vperm.slane %v125, 3
    %v780 = vunpack.c.l.b16 %v117
    %v781 = vunpack.c.l.b16 %v118
    %v782 = vunpack.c.l.b16 %v119
    %v783 = vunpack.c.l.b16 %v120
    %v784 = vunpack.c.l.b16 %v121
    %v785 = vunpack.c.l.b16 %v122
    %v786 = vunpack.c.l.b16 %v123
    %v787 = vunpack.c.l.b16 %v124
    %v788 = vpack.c.b16 %v781, %v780
    %v789 = vpack.c.b16 %v783, %v782
    %v790 = vpack.c.b16 %v785, %v784
    %v791 = vpack.c.b16 %v787, %v786
    %vm796 = vcmask 523264
    %v798 = vsel %vm796, %v770, 0
    %800 = vmatpush.bf16.msra.mxu0 0
    %801 = vmatpush.bf16.msra.mxu0 0
    %802 = vmatpush.bf16.msra.mxu0 0
    %803 = vmatpush.bf16.msra.mxu0 0
    %804 = vmatpush.bf16.msra.mxu0 %v791
    %805 = vmatpush.bf16.msra.mxu0 %v790
    %806 = vmatpush.bf16.msra.mxu0 %v789
    %807 = vmatpush.bf16.msra.mxu0 %v788
    %808 = vmatmul.bf16.gmra.mxu0 %v798
    %v809 = vpop.f32.mrf.mxu0
    %v810 = vadd.f32 %v771, %v809
    %v811 = vpop.f32.mrf.mxu0
    %v812 = vadd.f32 %v771, %v811
    %813 = vdwg.mxu0
    %v814 = vadd.f32 %v733, %v810
    %v815 = vadd.f32 %v734, %v812
    %v816 = vsel %vm142, %v814, 0.0
    %817 = vadd.xlane.f32.xlu0 %v816
    %v818 = vpop.xlane.xlu0 %817
    %v819 = vsel %vm142, %v815, 0.0
    %820 = vadd.xlane.f32.xlu0 %v819
    %v821 = vpop.xlane.xlu0 %820
    %v822 = vmul.f32 %v818, %v690
    %v823 = vmul.f32 %v821, %v690
    %v824 = vsub.f32 %v814, %v822
    %v825 = vsub.f32 %v815, %v823
    %v826 = vmul.f32 %v824, %v824
    %v827 = vmul.f32 %v825, %v825
    %v828 = vsel %vm142, %v826, 0.0
    %829 = vadd.xlane.f32.xlu0 %v828
    %v830 = vpop.xlane.xlu0 %829
    %v831 = vsel %vm142, %v827, 0.0
    %832 = vadd.xlane.f32.xlu0 %v831
    %v833 = vpop.xlane.xlu0 %832
    %v834 = vmul.f32 %v830, %v690
    %v835 = vmul.f32 %v833, %v690
    %v836 = vadd.f32 %v834, 1e-05
    %v837 = vadd.f32 %v835, 1e-05
    %v838 = vrsqrt.pop %v836
    %v839 = vmul.f32 %v838, %v836
    %v840 = vmul.f32 %v839, %v838
    %v841 = vmul.f32 0.5, %v840
    %v842 = vsub.f32 1.5, %v841
    %v843 = vmul.f32 %v838, %v842
    %vm844 = vweird.f32 %v836
    %vm845 = vweird.f32 %v838
    %vm846 = vmor %vm844, %vm845
    %v847 = vsel %vm846, %v838, %v843
    %v848 = vrsqrt.pop %v837
    %v849 = vmul.f32 %v848, %v837
    %v850 = vmul.f32 %v849, %v848
    %v851 = vmul.f32 0.5, %v850
    %v852 = vsub.f32 1.5, %v851
    %v853 = vmul.f32 %v848, %v852
    %vm854 = vweird.f32 %v837
    %vm855 = vweird.f32 %v848
    %vm856 = vmor %vm854, %vm855
    %v857 = vsel %vm856, %v848, %v853
    %v858 = vmul.f32 %v824, %v847
    %v859 = vmul.f32 %v825, %v857
    %v860 = vperm.slane %v125, 4
    %v861 = vmul.f32 %v858, %v860
    %v862 = vmul.f32 %v859, %v860
    %v863 = vperm.slane %v125, 5
    %v864 = vadd.f32 %v861, %v863
    %v865 = vadd.f32 %v862, %v863
    %s866 = scalar_lea.vmem %s4, 16
    %v867 = vld [vmem:[%s866] sm:$0xf]
    %v868 = vld [vmem:[%s866 + $0x4] sm:$0xf]
    %v869 = vld [vmem:[%s866 + $0x8] sm:$0xf]
    %v870 = vld [vmem:[%s866 + $0xc] sm:$0xf]
    %s871 = scalar_lea.vmem %s5, 1
    %v872 = vld [vmem:[%s871] sm:$0x1]
    %s873 = scalar_lea.vmem %s6, 16
    %v874 = vld [vmem:[%s873] sm:$0xf]
    %v875 = vld [vmem:[%s873 + $0x4] sm:$0xf]
    %v876 = vld [vmem:[%s873 + $0x8] sm:$0xf]
    %v877 = vld [vmem:[%s873 + $0xc] sm:$0xf]
    %s878 = scalar_lea.vmem %s7, 16
    %v879 = vld [vmem:[%s878] sm:$0xf]
    %v880 = vld [vmem:[%s878 + $0x4] sm:$0xf]
    %v881 = vld [vmem:[%s878 + $0x8] sm:$0xf]
    %v882 = vld [vmem:[%s878 + $0xc] sm:$0xf]
    %s883 = scalar_lea.vmem %s8, 1
    %v884 = vld [vmem:[%s883] sm:$0x1]
    %s885 = scalar_lea.vmem %s9, 32
    %v886 = vld [vmem:[%s885] sm:$0xf]
    %v887 = vld [vmem:[%s885 + $0x4] sm:$0xf]
    %v888 = vld [vmem:[%s885 + $0x8] sm:$0xf]
    %v889 = vld [vmem:[%s885 + $0xc] sm:$0xf]
    %v890 = vld [vmem:[%s885 + $0x10] sm:$0xf]
    %v891 = vld [vmem:[%s885 + $0x14] sm:$0xf]
    %v892 = vld [vmem:[%s885 + $0x18] sm:$0xf]
    %v893 = vld [vmem:[%s885 + $0x1c] sm:$0xf]
    %s894 = scalar_lea.vmem %s10, 8
    %v895 = vld [vmem:[%s894] sm:$0x3f]
    %v896 = vpack.c.bf16 %v865, %v864
    %v898 = vperm.slane %v872, 0
    %v904 = vunpack.c.l.b16 %v867
    %v905 = vunpack.c.l.b16 %v868
    %v906 = vunpack.c.l.b16 %v869
    %v907 = vunpack.c.l.b16 %v870
    %v908 = vpack.c.b16 %v905, %v904
    %v909 = vpack.c.b16 %v907, %v906
    %v913 = vsel %vm142, %v896, 0
    %915 = vmatpush.bf16.msra.mxu0 0
    %916 = vmatpush.bf16.msra.mxu0 0
    %917 = vmatpush.bf16.msra.mxu0 0
    %918 = vmatpush.bf16.msra.mxu0 0
    %919 = vmatpush.bf16.msra.mxu0 0
    %920 = vmatpush.bf16.msra.mxu0 0
    %921 = vmatpush.bf16.msra.mxu0 %v909
    %922 = vmatpush.bf16.msra.mxu0 %v908
    %923 = vmatmul.bf16.gmra.mxu0 %v913
    %v924 = vpop.f32.mrf.mxu0
    %v925 = vadd.f32 %v898, %v924
    %v926 = vpop.f32.mrf.mxu0
    %v927 = vadd.f32 %v898, %v926
    %928 = vdwg.mxu0
    %v929 = vpack.c.bf16 %v925, %v925
    %v930 = vpack.c.bf16 %v927, %v927
    %v932 = vunpack.c.l.b16 %v929
    %v933 = vpack.c.b16 %v932, %v932
    %934 = vrot.lane.b32.xlu0 %v933, 96
    %v935 = vpop.permute.xlu0 %934
    %v937 = vsel %vm167, %v929, 0
    %v940 = vsel %vm167, %v935, 0
    %942 = vmatpush.bf16.xpose.msra.mxu0 0
    %943 = vmatpush.bf16.xpose.msra.mxu0 0
    %944 = vmatpush.bf16.xpose.msra.mxu0 0
    %945 = vmatpush.bf16.xpose.msra.mxu0 0
    %946 = vmatpush.bf16.xpose.msra.mxu0 0
    %947 = vmatpush.bf16.xpose.msra.mxu0 0
    %948 = vmatpush.bf16.xpose.msra.mxu0 0
    %949 = vmatpush.bf16.xpose.msra.mxu0 %v940
    %950 = vmatmul.bf16.gmra.mxu0 %v937
    %v951 = vpop.f32.mrf.mxu0
    %v952 = vadd.f32 0.0, %v951
    %v953 = vpop.f32.mrf.mxu0
    %954 = vdwg.mxu0
    %v955 = vsel %vm167, %v952, -inf
    %956 = vmax.xlane.f32.xlu0 %v955
    %v957 = vpop.xlane.xlu0 %956
    %v958 = vsub.f32 %v952, %v957
    %v959 = vmul.f32 %v958, 1.442695
    %v960 = vpow.pop %v959
    %v961 = vsel %vm167, %v960, 0.0
    %962 = vadd.xlane.f32.xlu0 %v961
    %v963 = vpop.xlane.xlu0 %962
    %v964 = vrcp.pop %v963
    %v965 = vmul.f32 %v960, %v964
    %v966 = vpack.c.bf16 %v965, %v965
    %967 = vrot.lane.b32.xlu0 %v933, 64
    %v968 = vpop.permute.xlu0 %967
    %v970 = vsel %vm167, %v966, 0
    %v973 = vsel %vm204, %v968, 0
    %975 = vmatpush.bf16.msra.mxu0 0
    %976 = vmatpush.bf16.msra.mxu0 0
    %977 = vmatpush.bf16.msra.mxu0 0
    %978 = vmatpush.bf16.msra.mxu0 0
    %979 = vmatpush.bf16.msra.mxu0 0
    %980 = vmatpush.bf16.msra.mxu0 0
    %981 = vmatpush.bf16.msra.mxu0 0
    %982 = vmatpush.bf16.msra.mxu0 %v973
    %983 = vmatmul.bf16.gmra.mxu0 %v970
    %v984 = vpop.f32.mrf.mxu0
    %v985 = vadd.f32 0.0, %v984
    %v986 = vpop.f32.mrf.mxu0
    %987 = vdwg.mxu0
    %988 = vrot.lane.b32.xlu0 %v933, 120
    %v989 = vpop.permute.xlu0 %988
    %990 = vrot.lane.b32.xlu0 %v933, 88
    %v991 = vpop.permute.xlu0 %990
    %v993 = vsel %vm167, %v989, 0
    %v996 = vsel %vm167, %v991, 0
    %998 = vmatpush.bf16.xpose.msra.mxu0 0
    %999 = vmatpush.bf16.xpose.msra.mxu0 0
    %1000 = vmatpush.bf16.xpose.msra.mxu0 0
    %1001 = vmatpush.bf16.xpose.msra.mxu0 0
    %1002 = vmatpush.bf16.xpose.msra.mxu0 0
    %1003 = vmatpush.bf16.xpose.msra.mxu0 0
    %1004 = vmatpush.bf16.xpose.msra.mxu0 0
    %1005 = vmatpush.bf16.xpose.msra.mxu0 %v996
    %1006 = vmatmul.bf16.gmra.mxu0 %v993
    %v1007 = vpop.f32.mrf.mxu0
    %v1008 = vadd.f32 0.0, %v1007
    %v1009 = vpop.f32.mrf.mxu0
    %1010 = vdwg.mxu0
    %v1011 = vsel %vm167, %v1008, -inf
    %1012 = vmax.xlane.f32.xlu0 %v1011
    %v1013 = vpop.xlane.xlu0 %1012
    %v1014 = vsub.f32 %v1008, %v1013
    %v1015 = vmul.f32 %v1014, 1.442695
    %v1016 = vpow.pop %v1015
    %v1017 = vsel %vm167, %v1016, 0.0
    %1018 = vadd.xlane.f32.xlu0 %v1017
    %v1019 = vpop.xlane.xlu0 %1018
    %v1020 = vrcp.pop %v1019
    %v1021 = vmul.f32 %v1016, %v1020
    %v1022 = vpack.c.bf16 %v1021, %v1021
    %1023 = vrot.lane.b32.xlu0 %v933, 56
    %v1024 = vpop.permute.xlu0 %1023
    %v1026 = vsel %vm167, %v1022, 0
    %v1029 = vsel %vm204, %v1024, 0
    %1031 = vmatpush.bf16.msra.mxu0 0
    %1032 = vmatpush.bf16.msra.mxu0 0
    %1033 = vmatpush.bf16.msra.mxu0 0
    %1034 = vmatpush.bf16.msra.mxu0 0
    %1035 = vmatpush.bf16.msra.mxu0 0
    %1036 = vmatpush.bf16.msra.mxu0 0
    %1037 = vmatpush.bf16.msra.mxu0 0
    %1038 = vmatpush.bf16.msra.mxu0 %v1029
    %1039 = vmatmul.bf16.gmra.mxu0 %v1026
    %v1040 = vpop.f32.mrf.mxu0
    %v1041 = vadd.f32 0.0, %v1040
    %v1042 = vpop.f32.mrf.mxu0
    %1043 = vdwg.mxu0
    %1044 = vrot.lane.b32.xlu0 %v933, 112
    %v1045 = vpop.permute.xlu0 %1044
    %1046 = vrot.lane.b32.xlu0 %v933, 80
    %v1047 = vpop.permute.xlu0 %1046
    %v1049 = vsel %vm167, %v1045, 0
    %v1052 = vsel %vm167, %v1047, 0
    %1054 = vmatpush.bf16.xpose.msra.mxu0 0
    %1055 = vmatpush.bf16.xpose.msra.mxu0 0
    %1056 = vmatpush.bf16.xpose.msra.mxu0 0
    %1057 = vmatpush.bf16.xpose.msra.mxu0 0
    %1058 = vmatpush.bf16.xpose.msra.mxu0 0
    %1059 = vmatpush.bf16.xpose.msra.mxu0 0
    %1060 = vmatpush.bf16.xpose.msra.mxu0 0
    %1061 = vmatpush.bf16.xpose.msra.mxu0 %v1052
    %1062 = vmatmul.bf16.gmra.mxu0 %v1049
    %v1063 = vpop.f32.mrf.mxu0
    %v1064 = vadd.f32 0.0, %v1063
    %v1065 = vpop.f32.mrf.mxu0
    %1066 = vdwg.mxu0
    %v1067 = vsel %vm167, %v1064, -inf
    %1068 = vmax.xlane.f32.xlu0 %v1067
    %v1069 = vpop.xlane.xlu0 %1068
    %v1070 = vsub.f32 %v1064, %v1069
    %v1071 = vmul.f32 %v1070, 1.442695
    %v1072 = vpow.pop %v1071
    %v1073 = vsel %vm167, %v1072, 0.0
    %1074 = vadd.xlane.f32.xlu0 %v1073
    %v1075 = vpop.xlane.xlu0 %1074
    %v1076 = vrcp.pop %v1075
    %v1077 = vmul.f32 %v1072, %v1076
    %v1078 = vpack.c.bf16 %v1077, %v1077
    %1079 = vrot.lane.b32.xlu0 %v933, 48
    %v1080 = vpop.permute.xlu0 %1079
    %v1082 = vsel %vm167, %v1078, 0
    %v1085 = vsel %vm204, %v1080, 0
    %1087 = vmatpush.bf16.msra.mxu0 0
    %1088 = vmatpush.bf16.msra.mxu0 0
    %1089 = vmatpush.bf16.msra.mxu0 0
    %1090 = vmatpush.bf16.msra.mxu0 0
    %1091 = vmatpush.bf16.msra.mxu0 0
    %1092 = vmatpush.bf16.msra.mxu0 0
    %1093 = vmatpush.bf16.msra.mxu0 0
    %1094 = vmatpush.bf16.msra.mxu0 %v1085
    %1095 = vmatmul.bf16.gmra.mxu0 %v1082
    %v1096 = vpop.f32.mrf.mxu0
    %v1097 = vadd.f32 0.0, %v1096
    %v1098 = vpop.f32.mrf.mxu0
    %1099 = vdwg.mxu0
    %1100 = vrot.lane.b32.xlu0 %v933, 104
    %v1101 = vpop.permute.xlu0 %1100
    %1102 = vrot.lane.b32.xlu0 %v933, 72
    %v1103 = vpop.permute.xlu0 %1102
    %v1105 = vsel %vm167, %v1101, 0
    %v1108 = vsel %vm167, %v1103, 0
    %1110 = vmatpush.bf16.xpose.msra.mxu0 0
    %1111 = vmatpush.bf16.xpose.msra.mxu0 0
    %1112 = vmatpush.bf16.xpose.msra.mxu0 0
    %1113 = vmatpush.bf16.xpose.msra.mxu0 0
    %1114 = vmatpush.bf16.xpose.msra.mxu0 0
    %1115 = vmatpush.bf16.xpose.msra.mxu0 0
    %1116 = vmatpush.bf16.xpose.msra.mxu0 0
    %1117 = vmatpush.bf16.xpose.msra.mxu0 %v1108
    %1118 = vmatmul.bf16.gmra.mxu0 %v1105
    %v1119 = vpop.f32.mrf.mxu0
    %v1120 = vadd.f32 0.0, %v1119
    %v1121 = vpop.f32.mrf.mxu0
    %1122 = vdwg.mxu0
    %v1123 = vsel %vm167, %v1120, -inf
    %1124 = vmax.xlane.f32.xlu0 %v1123
    %v1125 = vpop.xlane.xlu0 %1124
    %v1126 = vsub.f32 %v1120, %v1125
    %v1127 = vmul.f32 %v1126, 1.442695
    %v1128 = vpow.pop %v1127
    %v1129 = vsel %vm167, %v1128, 0.0
    %1130 = vadd.xlane.f32.xlu0 %v1129
    %v1131 = vpop.xlane.xlu0 %1130
    %v1132 = vrcp.pop %v1131
    %v1133 = vmul.f32 %v1128, %v1132
    %v1134 = vpack.c.bf16 %v1133, %v1133
    %1135 = vrot.lane.b32.xlu0 %v933, 40
    %v1136 = vpop.permute.xlu0 %1135
    %v1138 = vsel %vm167, %v1134, 0
    %v1141 = vsel %vm204, %v1136, 0
    %1143 = vmatpush.bf16.msra.mxu0 0
    %1144 = vmatpush.bf16.msra.mxu0 0
    %1145 = vmatpush.bf16.msra.mxu0 0
    %1146 = vmatpush.bf16.msra.mxu0 0
    %1147 = vmatpush.bf16.msra.mxu0 0
    %1148 = vmatpush.bf16.msra.mxu0 0
    %1149 = vmatpush.bf16.msra.mxu0 0
    %1150 = vmatpush.bf16.msra.mxu0 %v1141
    %1151 = vmatmul.bf16.gmra.mxu0 %v1138
    %v1152 = vpop.f32.mrf.mxu0
    %v1153 = vadd.f32 0.0, %v1152
    %v1154 = vpop.f32.mrf.mxu0
    %1155 = vdwg.mxu0
    %1157 = vrot.lane.b32.xlu0 %v1041, 8
    %v1158 = vpop.permute.xlu0 %1157
    %1161 = vrot.lane.b32.xlu0 %v1097, 16
    %v1162 = vpop.permute.xlu0 %1161
    %1165 = vrot.lane.b32.xlu0 %v1153, 24
    %v1166 = vpop.permute.xlu0 %1165
    %v1168 = vsel %vm167, %v985, %v1158
    %v1169 = vsel %vm85, %v1168, %v1162
    %v1170 = vsel %vm403, %v1169, %v1166
    %v1172 = vunpack.c.l.b16 %v930
    %v1173 = vpack.c.b16 %v1172, %v1172
    %1174 = vrot.lane.b32.xlu0 %v1173, 96
    %v1175 = vpop.permute.xlu0 %1174
    %v1177 = vsel %vm167, %v930, 0
    %v1180 = vsel %vm167, %v1175, 0
    %1182 = vmatpush.bf16.xpose.msra.mxu0 0
    %1183 = vmatpush.bf16.xpose.msra.mxu0 0
    %1184 = vmatpush.bf16.xpose.msra.mxu0 0
    %1185 = vmatpush.bf16.xpose.msra.mxu0 0
    %1186 = vmatpush.bf16.xpose.msra.mxu0 0
    %1187 = vmatpush.bf16.xpose.msra.mxu0 0
    %1188 = vmatpush.bf16.xpose.msra.mxu0 0
    %1189 = vmatpush.bf16.xpose.msra.mxu0 %v1180
    %1190 = vmatmul.bf16.gmra.mxu0 %v1177
    %v1191 = vpop.f32.mrf.mxu0
    %v1192 = vadd.f32 0.0, %v1191
    %v1193 = vpop.f32.mrf.mxu0
    %1194 = vdwg.mxu0
    %v1195 = vsel %vm167, %v1192, -inf
    %1196 = vmax.xlane.f32.xlu0 %v1195
    %v1197 = vpop.xlane.xlu0 %1196
    %v1198 = vsub.f32 %v1192, %v1197
    %v1199 = vmul.f32 %v1198, 1.442695
    %v1200 = vpow.pop %v1199
    %v1201 = vsel %vm167, %v1200, 0.0
    %1202 = vadd.xlane.f32.xlu0 %v1201
    %v1203 = vpop.xlane.xlu0 %1202
    %v1204 = vrcp.pop %v1203
    %v1205 = vmul.f32 %v1200, %v1204
    %v1206 = vpack.c.bf16 %v1205, %v1205
    %1207 = vrot.lane.b32.xlu0 %v1173, 64
    %v1208 = vpop.permute.xlu0 %1207
    %v1210 = vsel %vm167, %v1206, 0
    %v1213 = vsel %vm204, %v1208, 0
    %1215 = vmatpush.bf16.msra.mxu0 0
    %1216 = vmatpush.bf16.msra.mxu0 0
    %1217 = vmatpush.bf16.msra.mxu0 0
    %1218 = vmatpush.bf16.msra.mxu0 0
    %1219 = vmatpush.bf16.msra.mxu0 0
    %1220 = vmatpush.bf16.msra.mxu0 0
    %1221 = vmatpush.bf16.msra.mxu0 0
    %1222 = vmatpush.bf16.msra.mxu0 %v1213
    %1223 = vmatmul.bf16.gmra.mxu0 %v1210
    %v1224 = vpop.f32.mrf.mxu0
    %v1225 = vadd.f32 0.0, %v1224
    %v1226 = vpop.f32.mrf.mxu0
    %1227 = vdwg.mxu0
    %1228 = vrot.lane.b32.xlu0 %v1173, 120
    %v1229 = vpop.permute.xlu0 %1228
    %1230 = vrot.lane.b32.xlu0 %v1173, 88
    %v1231 = vpop.permute.xlu0 %1230
    %v1233 = vsel %vm167, %v1229, 0
    %v1236 = vsel %vm167, %v1231, 0
    %1238 = vmatpush.bf16.xpose.msra.mxu0 0
    %1239 = vmatpush.bf16.xpose.msra.mxu0 0
    %1240 = vmatpush.bf16.xpose.msra.mxu0 0
    %1241 = vmatpush.bf16.xpose.msra.mxu0 0
    %1242 = vmatpush.bf16.xpose.msra.mxu0 0
    %1243 = vmatpush.bf16.xpose.msra.mxu0 0
    %1244 = vmatpush.bf16.xpose.msra.mxu0 0
    %1245 = vmatpush.bf16.xpose.msra.mxu0 %v1236
    %1246 = vmatmul.bf16.gmra.mxu0 %v1233
    %v1247 = vpop.f32.mrf.mxu0
    %v1248 = vadd.f32 0.0, %v1247
    %v1249 = vpop.f32.mrf.mxu0
    %1250 = vdwg.mxu0
    %v1251 = vsel %vm167, %v1248, -inf
    %1252 = vmax.xlane.f32.xlu0 %v1251
    %v1253 = vpop.xlane.xlu0 %1252
    %v1254 = vsub.f32 %v1248, %v1253
    %v1255 = vmul.f32 %v1254, 1.442695
    %v1256 = vpow.pop %v1255
    %v1257 = vsel %vm167, %v1256, 0.0
    %1258 = vadd.xlane.f32.xlu0 %v1257
    %v1259 = vpop.xlane.xlu0 %1258
    %v1260 = vrcp.pop %v1259
    %v1261 = vmul.f32 %v1256, %v1260
    %v1262 = vpack.c.bf16 %v1261, %v1261
    %1263 = vrot.lane.b32.xlu0 %v1173, 56
    %v1264 = vpop.permute.xlu0 %1263
    %v1266 = vsel %vm167, %v1262, 0
    %v1269 = vsel %vm204, %v1264, 0
    %1271 = vmatpush.bf16.msra.mxu0 0
    %1272 = vmatpush.bf16.msra.mxu0 0
    %1273 = vmatpush.bf16.msra.mxu0 0
    %1274 = vmatpush.bf16.msra.mxu0 0
    %1275 = vmatpush.bf16.msra.mxu0 0
    %1276 = vmatpush.bf16.msra.mxu0 0
    %1277 = vmatpush.bf16.msra.mxu0 0
    %1278 = vmatpush.bf16.msra.mxu0 %v1269
    %1279 = vmatmul.bf16.gmra.mxu0 %v1266
    %v1280 = vpop.f32.mrf.mxu0
    %v1281 = vadd.f32 0.0, %v1280
    %v1282 = vpop.f32.mrf.mxu0
    %1283 = vdwg.mxu0
    %1284 = vrot.lane.b32.xlu0 %v1173, 112
    %v1285 = vpop.permute.xlu0 %1284
    %1286 = vrot.lane.b32.xlu0 %v1173, 80
    %v1287 = vpop.permute.xlu0 %1286
    %v1289 = vsel %vm167, %v1285, 0
    %v1292 = vsel %vm167, %v1287, 0
    %1294 = vmatpush.bf16.xpose.msra.mxu0 0
    %1295 = vmatpush.bf16.xpose.msra.mxu0 0
    %1296 = vmatpush.bf16.xpose.msra.mxu0 0
    %1297 = vmatpush.bf16.xpose.msra.mxu0 0
    %1298 = vmatpush.bf16.xpose.msra.mxu0 0
    %1299 = vmatpush.bf16.xpose.msra.mxu0 0
    %1300 = vmatpush.bf16.xpose.msra.mxu0 0
    %1301 = vmatpush.bf16.xpose.msra.mxu0 %v1292
    %1302 = vmatmul.bf16.gmra.mxu0 %v1289
    %v1303 = vpop.f32.mrf.mxu0
    %v1304 = vadd.f32 0.0, %v1303
    %v1305 = vpop.f32.mrf.mxu0
    %1306 = vdwg.mxu0
    %v1307 = vsel %vm167, %v1304, -inf
    %1308 = vmax.xlane.f32.xlu0 %v1307
    %v1309 = vpop.xlane.xlu0 %1308
    %v1310 = vsub.f32 %v1304, %v1309
    %v1311 = vmul.f32 %v1310, 1.442695
    %v1312 = vpow.pop %v1311
    %v1313 = vsel %vm167, %v1312, 0.0
    %1314 = vadd.xlane.f32.xlu0 %v1313
    %v1315 = vpop.xlane.xlu0 %1314
    %v1316 = vrcp.pop %v1315
    %v1317 = vmul.f32 %v1312, %v1316
    %v1318 = vpack.c.bf16 %v1317, %v1317
    %1319 = vrot.lane.b32.xlu0 %v1173, 48
    %v1320 = vpop.permute.xlu0 %1319
    %v1322 = vsel %vm167, %v1318, 0
    %v1325 = vsel %vm204, %v1320, 0
    %1327 = vmatpush.bf16.msra.mxu0 0
    %1328 = vmatpush.bf16.msra.mxu0 0
    %1329 = vmatpush.bf16.msra.mxu0 0
    %1330 = vmatpush.bf16.msra.mxu0 0
    %1331 = vmatpush.bf16.msra.mxu0 0
    %1332 = vmatpush.bf16.msra.mxu0 0
    %1333 = vmatpush.bf16.msra.mxu0 0
    %1334 = vmatpush.bf16.msra.mxu0 %v1325
    %1335 = vmatmul.bf16.gmra.mxu0 %v1322
    %v1336 = vpop.f32.mrf.mxu0
    %v1337 = vadd.f32 0.0, %v1336
    %v1338 = vpop.f32.mrf.mxu0
    %1339 = vdwg.mxu0
    %1340 = vrot.lane.b32.xlu0 %v1173, 104
    %v1341 = vpop.permute.xlu0 %1340
    %1342 = vrot.lane.b32.xlu0 %v1173, 72
    %v1343 = vpop.permute.xlu0 %1342
    %v1345 = vsel %vm167, %v1341, 0
    %v1348 = vsel %vm167, %v1343, 0
    %1350 = vmatpush.bf16.xpose.msra.mxu0 0
    %1351 = vmatpush.bf16.xpose.msra.mxu0 0
    %1352 = vmatpush.bf16.xpose.msra.mxu0 0
    %1353 = vmatpush.bf16.xpose.msra.mxu0 0
    %1354 = vmatpush.bf16.xpose.msra.mxu0 0
    %1355 = vmatpush.bf16.xpose.msra.mxu0 0
    %1356 = vmatpush.bf16.xpose.msra.mxu0 0
    %1357 = vmatpush.bf16.xpose.msra.mxu0 %v1348
    %1358 = vmatmul.bf16.gmra.mxu0 %v1345
    %v1359 = vpop.f32.mrf.mxu0
    %v1360 = vadd.f32 0.0, %v1359
    %v1361 = vpop.f32.mrf.mxu0
    %1362 = vdwg.mxu0
    %v1363 = vsel %vm167, %v1360, -inf
    %1364 = vmax.xlane.f32.xlu0 %v1363
    %v1365 = vpop.xlane.xlu0 %1364
    %v1366 = vsub.f32 %v1360, %v1365
    %v1367 = vmul.f32 %v1366, 1.442695
    %v1368 = vpow.pop %v1367
    %v1369 = vsel %vm167, %v1368, 0.0
    %1370 = vadd.xlane.f32.xlu0 %v1369
    %v1371 = vpop.xlane.xlu0 %1370
    %v1372 = vrcp.pop %v1371
    %v1373 = vmul.f32 %v1368, %v1372
    %v1374 = vpack.c.bf16 %v1373, %v1373
    %1375 = vrot.lane.b32.xlu0 %v1173, 40
    %v1376 = vpop.permute.xlu0 %1375
    %v1378 = vsel %vm167, %v1374, 0
    %v1381 = vsel %vm204, %v1376, 0
    %1383 = vmatpush.bf16.msra.mxu0 0
    %1384 = vmatpush.bf16.msra.mxu0 0
    %1385 = vmatpush.bf16.msra.mxu0 0
    %1386 = vmatpush.bf16.msra.mxu0 0
    %1387 = vmatpush.bf16.msra.mxu0 0
    %1388 = vmatpush.bf16.msra.mxu0 0
    %1389 = vmatpush.bf16.msra.mxu0 0
    %1390 = vmatpush.bf16.msra.mxu0 %v1381
    %1391 = vmatmul.bf16.gmra.mxu0 %v1378
    %v1392 = vpop.f32.mrf.mxu0
    %v1393 = vadd.f32 0.0, %v1392
    %v1394 = vpop.f32.mrf.mxu0
    %1395 = vdwg.mxu0
    %1397 = vrot.lane.b32.xlu0 %v1281, 8
    %v1398 = vpop.permute.xlu0 %1397
    %1401 = vrot.lane.b32.xlu0 %v1337, 16
    %v1402 = vpop.permute.xlu0 %1401
    %1405 = vrot.lane.b32.xlu0 %v1393, 24
    %v1406 = vpop.permute.xlu0 %1405
    %v1408 = vsel %vm167, %v1225, %v1398
    %v1409 = vsel %vm85, %v1408, %v1402
    %v1410 = vsel %vm403, %v1409, %v1406
    %v1411 = vpack.c.bf16 %v1410, %v1170
    %v1412 = vperm.slane %v895, 0
    %v1417 = vunpack.c.l.b16 %v874
    %v1418 = vunpack.c.l.b16 %v875
    %v1419 = vunpack.c.l.b16 %v876
    %v1420 = vunpack.c.l.b16 %v877
    %v1421 = vpack.c.b16 %v1418, %v1417
    %v1422 = vpack.c.b16 %v1420, %v1419
    %v1426 = vsel %vm142, %v1411, 0
    %1428 = vmatpush.bf16.msra.mxu0 0
    %1429 = vmatpush.bf16.msra.mxu0 0
    %1430 = vmatpush.bf16.msra.mxu0 0
    %1431 = vmatpush.bf16.msra.mxu0 0
    %1432 = vmatpush.bf16.msra.mxu0 0
    %1433 = vmatpush.bf16.msra.mxu0 0
    %1434 = vmatpush.bf16.msra.mxu0 %v1422
    %1435 = vmatpush.bf16.msra.mxu0 %v1421
    %1436 = vmatmul.bf16.gmra.mxu0 %v1426
    %v1437 = vpop.f32.mrf.mxu0
    %v1438 = vadd.f32 %v1412, %v1437
    %v1439 = vpop.f32.mrf.mxu0
    %v1440 = vadd.f32 %v1412, %v1439
    %1441 = vdwg.mxu0
    %v1442 = vadd.f32 %v864, %v1438
    %v1443 = vadd.f32 %v865, %v1440
    %v1444 = vsel %vm142, %v1442, 0.0
    %1445 = vadd.xlane.f32.xlu0 %v1444
    %v1446 = vpop.xlane.xlu0 %1445
    %v1447 = vsel %vm142, %v1443, 0.0
    %1448 = vadd.xlane.f32.xlu0 %v1447
    %v1449 = vpop.xlane.xlu0 %1448
    %v1450 = vmul.f32 %v1446, %v690
    %v1451 = vmul.f32 %v1449, %v690
    %v1452 = vsub.f32 %v1442, %v1450
    %v1453 = vsub.f32 %v1443, %v1451
    %v1454 = vmul.f32 %v1452, %v1452
    %v1455 = vmul.f32 %v1453, %v1453
    %v1456 = vsel %vm142, %v1454, 0.0
    %1457 = vadd.xlane.f32.xlu0 %v1456
    %v1458 = vpop.xlane.xlu0 %1457
    %v1459 = vsel %vm142, %v1455, 0.0
    %1460 = vadd.xlane.f32.xlu0 %v1459
    %v1461 = vpop.xlane.xlu0 %1460
    %v1462 = vmul.f32 %v1458, %v690
    %v1463 = vmul.f32 %v1461, %v690
    %v1464 = vadd.f32 %v1462, 1e-05
    %v1465 = vadd.f32 %v1463, 1e-05
    %v1466 = vrsqrt.pop %v1464
    %v1467 = vmul.f32 %v1466, %v1464
    %v1468 = vmul.f32 %v1467, %v1466
    %v1469 = vmul.f32 0.5, %v1468
    %v1470 = vsub.f32 1.5, %v1469
    %v1471 = vmul.f32 %v1466, %v1470
    %vm1472 = vweird.f32 %v1464
    %vm1473 = vweird.f32 %v1466
    %vm1474 = vmor %vm1472, %vm1473
    %v1475 = vsel %vm1474, %v1466, %v1471
    %v1476 = vrsqrt.pop %v1465
    %v1477 = vmul.f32 %v1476, %v1465
    %v1478 = vmul.f32 %v1477, %v1476
    %v1479 = vmul.f32 0.5, %v1478
    %v1480 = vsub.f32 1.5, %v1479
    %v1481 = vmul.f32 %v1476, %v1480
    %vm1482 = vweird.f32 %v1465
    %vm1483 = vweird.f32 %v1476
    %vm1484 = vmor %vm1482, %vm1483
    %v1485 = vsel %vm1484, %v1476, %v1481
    %v1486 = vmul.f32 %v1452, %v1475
    %v1487 = vmul.f32 %v1453, %v1485
    %v1488 = vperm.slane %v895, 1
    %v1489 = vmul.f32 %v1486, %v1488
    %v1490 = vmul.f32 %v1487, %v1488
    %v1491 = vperm.slane %v895, 2
    %v1492 = vadd.f32 %v1489, %v1491
    %v1493 = vadd.f32 %v1490, %v1491
    %v1494 = vpack.c.bf16 %v1493, %v1492
    %v1496 = vperm.slane %v884, 0
    %v1502 = vunpack.c.l.b16 %v879
    %v1503 = vunpack.c.l.b16 %v880
    %v1504 = vunpack.c.l.b16 %v881
    %v1505 = vunpack.c.l.b16 %v882
    %v1506 = vpack.c.b16 %v1503, %v1502
    %v1507 = vpack.c.b16 %v1505, %v1504
    %v1511 = vsel %vm142, %v1494, 0
    %1513 = vmatpush.bf16.msra.mxu0 0
    %1514 = vmatpush.bf16.msra.mxu0 0
    %1515 = vmatpush.bf16.msra.mxu0 0
    %1516 = vmatpush.bf16.msra.mxu0 0
    %1517 = vmatpush.bf16.msra.mxu0 0
    %1518 = vmatpush.bf16.msra.mxu0 0
    %1519 = vmatpush.bf16.msra.mxu0 %v1507
    %1520 = vmatpush.bf16.msra.mxu0 %v1506
    %1521 = vmatmul.bf16.gmra.mxu0 %v1511
    %v1522 = vpop.f32.mrf.mxu0
    %v1523 = vadd.f32 %v1496, %v1522
    %v1524 = vpop.f32.mrf.mxu0
    %v1525 = vadd.f32 %v1496, %v1524
    %1526 = vdwg.mxu0
    %v1527 = vmax.f32 %v1523, 0.0
    %v1528 = vmax.f32 %v1525, 0.0
    %v1529 = vpack.c.bf16 %v1528, %v1527
    %v1530 = vperm.slane %v895, 3
    %v1539 = vunpack.c.l.b16 %v886
    %v1540 = vunpack.c.l.b16 %v887
    %v1541 = vunpack.c.l.b16 %v888
    %v1542 = vunpack.c.l.b16 %v889
    %v1543 = vunpack.c.l.b16 %v890
    %v1544 = vunpack.c.l.b16 %v891
    %v1545 = vunpack.c.l.b16 %v892
    %v1546 = vunpack.c.l.b16 %v893
    %v1547 = vpack.c.b16 %v1540, %v1539
    %v1548 = vpack.c.b16 %v1542, %v1541
    %v1549 = vpack.c.b16 %v1544, %v1543
    %v1550 = vpack.c.b16 %v1546, %v1545
    %v1556 = vsel %vm796, %v1529, 0
    %1558 = vmatpush.bf16.msra.mxu0 0
    %1559 = vmatpush.bf16.msra.mxu0 0
    %1560 = vmatpush.bf16.msra.mxu0 0
    %1561 = vmatpush.bf16.msra.mxu0 0
    %1562 = vmatpush.bf16.msra.mxu0 %v1550
    %1563 = vmatpush.bf16.msra.mxu0 %v1549
    %1564 = vmatpush.bf16.msra.mxu0 %v1548
    %1565 = vmatpush.bf16.msra.mxu0 %v1547
    %1566 = vmatmul.bf16.gmra.mxu0 %v1556
    %v1567 = vpop.f32.mrf.mxu0
    %v1568 = vadd.f32 %v1530, %v1567
    %v1569 = vpop.f32.mrf.mxu0
    %v1570 = vadd.f32 %v1530, %v1569
    %1571 = vdwg.mxu0
    %v1572 = vadd.f32 %v1492, %v1568
    %v1573 = vadd.f32 %v1493, %v1570
    %v1574 = vsel %vm142, %v1572, 0.0
    %1575 = vadd.xlane.f32.xlu0 %v1574
    %v1576 = vpop.xlane.xlu0 %1575
    %v1577 = vsel %vm142, %v1573, 0.0
    %1578 = vadd.xlane.f32.xlu0 %v1577
    %v1579 = vpop.xlane.xlu0 %1578
    %v1580 = vmul.f32 %v1576, %v690
    %v1581 = vmul.f32 %v1579, %v690
    %v1582 = vsub.f32 %v1572, %v1580
    %v1583 = vsub.f32 %v1573, %v1581
    %v1584 = vmul.f32 %v1582, %v1582
    %v1585 = vmul.f32 %v1583, %v1583
    %v1586 = vsel %vm142, %v1584, 0.0
    %1587 = vadd.xlane.f32.xlu0 %v1586
    %v1588 = vpop.xlane.xlu0 %1587
    %v1589 = vsel %vm142, %v1585, 0.0
    %1590 = vadd.xlane.f32.xlu0 %v1589
    %v1591 = vpop.xlane.xlu0 %1590
    %v1592 = vmul.f32 %v1588, %v690
    %v1593 = vmul.f32 %v1591, %v690
    %v1594 = vadd.f32 %v1592, 1e-05
    %v1595 = vadd.f32 %v1593, 1e-05
    %v1596 = vrsqrt.pop %v1594
    %v1597 = vmul.f32 %v1596, %v1594
    %v1598 = vmul.f32 %v1597, %v1596
    %v1599 = vmul.f32 0.5, %v1598
    %v1600 = vsub.f32 1.5, %v1599
    %v1601 = vmul.f32 %v1596, %v1600
    %vm1602 = vweird.f32 %v1594
    %vm1603 = vweird.f32 %v1596
    %vm1604 = vmor %vm1602, %vm1603
    %v1605 = vsel %vm1604, %v1596, %v1601
    %v1606 = vrsqrt.pop %v1595
    %v1607 = vmul.f32 %v1606, %v1595
    %v1608 = vmul.f32 %v1607, %v1606
    %v1609 = vmul.f32 0.5, %v1608
    %v1610 = vsub.f32 1.5, %v1609
    %v1611 = vmul.f32 %v1606, %v1610
    %vm1612 = vweird.f32 %v1595
    %vm1613 = vweird.f32 %v1606
    %vm1614 = vmor %vm1612, %vm1613
    %v1615 = vsel %vm1614, %v1606, %v1611
    %v1616 = vmul.f32 %v1582, %v1605
    %v1617 = vmul.f32 %v1583, %v1615
    %v1618 = vperm.slane %v895, 4
    %v1619 = vmul.f32 %v1616, %v1618
    %v1620 = vmul.f32 %v1617, %v1618
    %v1621 = vperm.slane %v895, 5
    %v1622 = vadd.f32 %v1619, %v1621
    %v1623 = vadd.f32 %v1620, %v1621
    %v1624 = vld [vmem:[%s1] sm:$0xff]
    %v1625 = vld [vmem:[%s1 + $0x8] sm:$0xff]
    %v1626 = vpack.c.bf16 %v1625, %v1624
    %v1627 = vld [vmem:[%s11] sm:$0xf]
    %v1628 = vld [vmem:[%s11 + $0x4] sm:$0xf]
    %v1629 = vld [vmem:[%s12] sm:$0x1]
    %v1631 = vperm.slane %v1629, 0
    %v1635 = vunpack.c.l.b16 %v1627
    %v1636 = vunpack.c.l.b16 %v1628
    %v1637 = vpack.c.b16 %v1636, %v1635
    %v1640 = vsel %vm85, %v1626, 0
    %1642 = vmatpush.bf16.msra.mxu0 0
    %1643 = vmatpush.bf16.msra.mxu0 0
    %1644 = vmatpush.bf16.msra.mxu0 0
    %1645 = vmatpush.bf16.msra.mxu0 0
    %1646 = vmatpush.bf16.msra.mxu0 0
    %1647 = vmatpush.bf16.msra.mxu0 0
    %1648 = vmatpush.bf16.msra.mxu0 0
    %1649 = vmatpush.bf16.msra.mxu0 %v1637
    %1650 = vmatmul.bf16.gmra.mxu0 %v1640
    %v1651 = vpop.f32.mrf.mxu0
    %v1652 = vadd.f32 %v1631, %v1651
    %v1653 = vpop.f32.mrf.mxu0
    %v1654 = vadd.f32 %v1631, %v1653
    %1655 = vdwg.mxu0
    %v1656 = vld [vmem:[%s13] sm:$0xf]
    %v1657 = vld [vmem:[%s13 + $0x4] sm:$0xf]
    %v1658 = vld [vmem:[%s13 + $0x8] sm:$0xf]
    %v1659 = vld [vmem:[%s13 + $0xc] sm:$0xf]
    %v1660 = vld [vmem:[%s14] sm:$0x1]
    %v1661 = vld [vmem:[%s15] sm:$0xf]
    %v1662 = vld [vmem:[%s15 + $0x4] sm:$0xf]
    %v1663 = vld [vmem:[%s15 + $0x8] sm:$0xf]
    %v1664 = vld [vmem:[%s15 + $0xc] sm:$0xf]
    %v1665 = vld [vmem:[%s16] sm:$0xf]
    %v1666 = vld [vmem:[%s16 + $0x4] sm:$0xf]
    %v1667 = vld [vmem:[%s16 + $0x8] sm:$0xf]
    %v1668 = vld [vmem:[%s16 + $0xc] sm:$0xf]
    %v1669 = vld [vmem:[%s17] sm:$0x1]
    %v1670 = vld [vmem:[%s18] sm:$0xf]
    %v1671 = vld [vmem:[%s18 + $0x4] sm:$0xf]
    %v1672 = vld [vmem:[%s18 + $0x8] sm:$0xf]
    %v1673 = vld [vmem:[%s18 + $0xc] sm:$0xf]
    %v1674 = vld [vmem:[%s18 + $0x10] sm:$0xf]
    %v1675 = vld [vmem:[%s18 + $0x14] sm:$0xf]
    %v1676 = vld [vmem:[%s18 + $0x18] sm:$0xf]
    %v1677 = vld [vmem:[%s18 + $0x1c] sm:$0xf]
    %v1678 = vld [vmem:[%s19] sm:$0x3f]
    %v1679 = vpack.c.bf16 %v1654, %v1652
    %v1681 = vperm.slane %v1660, 0
    %v1687 = vunpack.c.l.b16 %v1656
    %v1688 = vunpack.c.l.b16 %v1657
    %v1689 = vunpack.c.l.b16 %v1658
    %v1690 = vunpack.c.l.b16 %v1659
    %v1691 = vpack.c.b16 %v1688, %v1687
    %v1692 = vpack.c.b16 %v1690, %v1689
    %v1696 = vsel %vm142, %v1679, 0
    %1698 = vmatpush.bf16.msra.mxu0 0
    %1699 = vmatpush.bf16.msra.mxu0 0
    %1700 = vmatpush.bf16.msra.mxu0 0
    %1701 = vmatpush.bf16.msra.mxu0 0
    %1702 = vmatpush.bf16.msra.mxu0 0
    %1703 = vmatpush.bf16.msra.mxu0 0
    %1704 = vmatpush.bf16.msra.mxu0 %v1692
    %1705 = vmatpush.bf16.msra.mxu0 %v1691
    %1706 = vmatmul.bf16.gmra.mxu0 %v1696
    %v1707 = vpop.f32.mrf.mxu0
    %v1708 = vadd.f32 %v1681, %v1707
    %v1709 = vpop.f32.mrf.mxu0
    %v1710 = vadd.f32 %v1681, %v1709
    %1711 = vdwg.mxu0
    %v1712 = vpack.c.bf16 %v1708, %v1708
    %v1713 = vpack.c.bf16 %v1710, %v1710
    %v1715 = vunpack.c.l.b16 %v1712
    %v1716 = vpack.c.b16 %v1715, %v1715
    %1717 = vrot.lane.b32.xlu0 %v1716, 96
    %v1718 = vpop.permute.xlu0 %1717
    %v1720 = vsel %vm167, %v1712, 0
    %v1723 = vsel %vm167, %v1718, 0
    %1725 = vmatpush.bf16.xpose.msra.mxu0 0
    %1726 = vmatpush.bf16.xpose.msra.mxu0 0
    %1727 = vmatpush.bf16.xpose.msra.mxu0 0
    %1728 = vmatpush.bf16.xpose.msra.mxu0 0
    %1729 = vmatpush.bf16.xpose.msra.mxu0 0
    %1730 = vmatpush.bf16.xpose.msra.mxu0 0
    %1731 = vmatpush.bf16.xpose.msra.mxu0 0
    %1732 = vmatpush.bf16.xpose.msra.mxu0 %v1723
    %1733 = vmatmul.bf16.gmra.mxu0 %v1720
    %v1734 = vpop.f32.mrf.mxu0
    %v1735 = vadd.f32 0.0, %v1734
    %v1736 = vpop.f32.mrf.mxu0
    %1737 = vdwg.mxu0
    %v1738 = vsel %vm167, %v1735, -inf
    %1739 = vmax.xlane.f32.xlu0 %v1738
    %v1740 = vpop.xlane.xlu0 %1739
    %v1741 = vsub.f32 %v1735, %v1740
    %v1742 = vmul.f32 %v1741, 1.442695
    %v1743 = vpow.pop %v1742
    %v1744 = vsel %vm167, %v1743, 0.0
    %1745 = vadd.xlane.f32.xlu0 %v1744
    %v1746 = vpop.xlane.xlu0 %1745
    %v1747 = vrcp.pop %v1746
    %v1748 = vmul.f32 %v1743, %v1747
    %v1749 = vpack.c.bf16 %v1748, %v1748
    %1750 = vrot.lane.b32.xlu0 %v1716, 64
    %v1751 = vpop.permute.xlu0 %1750
    %v1753 = vsel %vm167, %v1749, 0
    %v1756 = vsel %vm204, %v1751, 0
    %1758 = vmatpush.bf16.msra.mxu0 0
    %1759 = vmatpush.bf16.msra.mxu0 0
    %1760 = vmatpush.bf16.msra.mxu0 0
    %1761 = vmatpush.bf16.msra.mxu0 0
    %1762 = vmatpush.bf16.msra.mxu0 0
    %1763 = vmatpush.bf16.msra.mxu0 0
    %1764 = vmatpush.bf16.msra.mxu0 0
    %1765 = vmatpush.bf16.msra.mxu0 %v1756
    %1766 = vmatmul.bf16.gmra.mxu0 %v1753
    %v1767 = vpop.f32.mrf.mxu0
    %v1768 = vadd.f32 0.0, %v1767
    %v1769 = vpop.f32.mrf.mxu0
    %1770 = vdwg.mxu0
    %1771 = vrot.lane.b32.xlu0 %v1716, 120
    %v1772 = vpop.permute.xlu0 %1771
    %1773 = vrot.lane.b32.xlu0 %v1716, 88
    %v1774 = vpop.permute.xlu0 %1773
    %v1776 = vsel %vm167, %v1772, 0
    %v1779 = vsel %vm167, %v1774, 0
    %1781 = vmatpush.bf16.xpose.msra.mxu0 0
    %1782 = vmatpush.bf16.xpose.msra.mxu0 0
    %1783 = vmatpush.bf16.xpose.msra.mxu0 0
    %1784 = vmatpush.bf16.xpose.msra.mxu0 0
    %1785 = vmatpush.bf16.xpose.msra.mxu0 0
    %1786 = vmatpush.bf16.xpose.msra.mxu0 0
    %1787 = vmatpush.bf16.xpose.msra.mxu0 0
    %1788 = vmatpush.bf16.xpose.msra.mxu0 %v1779
    %1789 = vmatmul.bf16.gmra.mxu0 %v1776
    %v1790 = vpop.f32.mrf.mxu0
    %v1791 = vadd.f32 0.0, %v1790
    %v1792 = vpop.f32.mrf.mxu0
    %1793 = vdwg.mxu0
    %v1794 = vsel %vm167, %v1791, -inf
    %1795 = vmax.xlane.f32.xlu0 %v1794
    %v1796 = vpop.xlane.xlu0 %1795
    %v1797 = vsub.f32 %v1791, %v1796
    %v1798 = vmul.f32 %v1797, 1.442695
    %v1799 = vpow.pop %v1798
    %v1800 = vsel %vm167, %v1799, 0.0
    %1801 = vadd.xlane.f32.xlu0 %v1800
    %v1802 = vpop.xlane.xlu0 %1801
    %v1803 = vrcp.pop %v1802
    %v1804 = vmul.f32 %v1799, %v1803
    %v1805 = vpack.c.bf16 %v1804, %v1804
    %1806 = vrot.lane.b32.xlu0 %v1716, 56
    %v1807 = vpop.permute.xlu0 %1806
    %v1809 = vsel %vm167, %v1805, 0
    %v1812 = vsel %vm204, %v1807, 0
    %1814 = vmatpush.bf16.msra.mxu0 0
    %1815 = vmatpush.bf16.msra.mxu0 0
    %1816 = vmatpush.bf16.msra.mxu0 0
    %1817 = vmatpush.bf16.msra.mxu0 0
    %1818 = vmatpush.bf16.msra.mxu0 0
    %1819 = vmatpush.bf16.msra.mxu0 0
    %1820 = vmatpush.bf16.msra.mxu0 0
    %1821 = vmatpush.bf16.msra.mxu0 %v1812
    %1822 = vmatmul.bf16.gmra.mxu0 %v1809
    %v1823 = vpop.f32.mrf.mxu0
    %v1824 = vadd.f32 0.0, %v1823
    %v1825 = vpop.f32.mrf.mxu0
    %1826 = vdwg.mxu0
    %1827 = vrot.lane.b32.xlu0 %v1716, 112
    %v1828 = vpop.permute.xlu0 %1827
    %1829 = vrot.lane.b32.xlu0 %v1716, 80
    %v1830 = vpop.permute.xlu0 %1829
    %v1832 = vsel %vm167, %v1828, 0
    %v1835 = vsel %vm167, %v1830, 0
    %1837 = vmatpush.bf16.xpose.msra.mxu0 0
    %1838 = vmatpush.bf16.xpose.msra.mxu0 0
    %1839 = vmatpush.bf16.xpose.msra.mxu0 0
    %1840 = vmatpush.bf16.xpose.msra.mxu0 0
    %1841 = vmatpush.bf16.xpose.msra.mxu0 0
    %1842 = vmatpush.bf16.xpose.msra.mxu0 0
    %1843 = vmatpush.bf16.xpose.msra.mxu0 0
    %1844 = vmatpush.bf16.xpose.msra.mxu0 %v1835
    %1845 = vmatmul.bf16.gmra.mxu0 %v1832
    %v1846 = vpop.f32.mrf.mxu0
    %v1847 = vadd.f32 0.0, %v1846
    %v1848 = vpop.f32.mrf.mxu0
    %1849 = vdwg.mxu0
    %v1850 = vsel %vm167, %v1847, -inf
    %1851 = vmax.xlane.f32.xlu0 %v1850
    %v1852 = vpop.xlane.xlu0 %1851
    %v1853 = vsub.f32 %v1847, %v1852
    %v1854 = vmul.f32 %v1853, 1.442695
    %v1855 = vpow.pop %v1854
    %v1856 = vsel %vm167, %v1855, 0.0
    %1857 = vadd.xlane.f32.xlu0 %v1856
    %v1858 = vpop.xlane.xlu0 %1857
    %v1859 = vrcp.pop %v1858
    %v1860 = vmul.f32 %v1855, %v1859
    %v1861 = vpack.c.bf16 %v1860, %v1860
    %1862 = vrot.lane.b32.xlu0 %v1716, 48
    %v1863 = vpop.permute.xlu0 %1862
    %v1865 = vsel %vm167, %v1861, 0
    %v1868 = vsel %vm204, %v1863, 0
    %1870 = vmatpush.bf16.msra.mxu0 0
    %1871 = vmatpush.bf16.msra.mxu0 0
    %1872 = vmatpush.bf16.msra.mxu0 0
    %1873 = vmatpush.bf16.msra.mxu0 0
    %1874 = vmatpush.bf16.msra.mxu0 0
    %1875 = vmatpush.bf16.msra.mxu0 0
    %1876 = vmatpush.bf16.msra.mxu0 0
    %1877 = vmatpush.bf16.msra.mxu0 %v1868
    %1878 = vmatmul.bf16.gmra.mxu0 %v1865
    %v1879 = vpop.f32.mrf.mxu0
    %v1880 = vadd.f32 0.0, %v1879
    %v1881 = vpop.f32.mrf.mxu0
    %1882 = vdwg.mxu0
    %1883 = vrot.lane.b32.xlu0 %v1716, 104
    %v1884 = vpop.permute.xlu0 %1883
    %1885 = vrot.lane.b32.xlu0 %v1716, 72
    %v1886 = vpop.permute.xlu0 %1885
    %v1888 = vsel %vm167, %v1884, 0
    %v1891 = vsel %vm167, %v1886, 0
    %1893 = vmatpush.bf16.xpose.msra.mxu0 0
    %1894 = vmatpush.bf16.xpose.msra.mxu0 0
    %1895 = vmatpush.bf16.xpose.msra.mxu0 0
    %1896 = vmatpush.bf16.xpose.msra.mxu0 0
    %1897 = vmatpush.bf16.xpose.msra.mxu0 0
    %1898 = vmatpush.bf16.xpose.msra.mxu0 0
    %1899 = vmatpush.bf16.xpose.msra.mxu0 0
    %1900 = vmatpush.bf16.xpose.msra.mxu0 %v1891
    %1901 = vmatmul.bf16.gmra.mxu0 %v1888
    %v1902 = vpop.f32.mrf.mxu0
    %v1903 = vadd.f32 0.0, %v1902
    %v1904 = vpop.f32.mrf.mxu0
    %1905 = vdwg.mxu0
    %v1906 = vsel %vm167, %v1903, -inf
    %1907 = vmax.xlane.f32.xlu0 %v1906
    %v1908 = vpop.xlane.xlu0 %1907
    %v1909 = vsub.f32 %v1903, %v1908
    %v1910 = vmul.f32 %v1909, 1.442695
    %v1911 = vpow.pop %v1910
    %v1912 = vsel %vm167, %v1911, 0.0
    %1913 = vadd.xlane.f32.xlu0 %v1912
    %v1914 = vpop.xlane.xlu0 %1913
    %v1915 = vrcp.pop %v1914
    %v1916 = vmul.f32 %v1911, %v1915
    %v1917 = vpack.c.bf16 %v1916, %v1916
    %1918 = vrot.lane.b32.xlu0 %v1716, 40
    %v1919 = vpop.permute.xlu0 %1918
    %v1921 = vsel %vm167, %v1917, 0
    %v1924 = vsel %vm204, %v1919, 0
    %1926 = vmatpush.bf16.msra.mxu0 0
    %1927 = vmatpush.bf16.msra.mxu0 0
    %1928 = vmatpush.bf16.msra.mxu0 0
    %1929 = vmatpush.bf16.msra.mxu0 0
    %1930 = vmatpush.bf16.msra.mxu0 0
    %1931 = vmatpush.bf16.msra.mxu0 0
    %1932 = vmatpush.bf16.msra.mxu0 0
    %1933 = vmatpush.bf16.msra.mxu0 %v1924
    %1934 = vmatmul.bf16.gmra.mxu0 %v1921
    %v1935 = vpop.f32.mrf.mxu0
    %v1936 = vadd.f32 0.0, %v1935
    %v1937 = vpop.f32.mrf.mxu0
    %1938 = vdwg.mxu0
    %1940 = vrot.lane.b32.xlu0 %v1824, 8
    %v1941 = vpop.permute.xlu0 %1940
    %1944 = vrot.lane.b32.xlu0 %v1880, 16
    %v1945 = vpop.permute.xlu0 %1944
    %1948 = vrot.lane.b32.xlu0 %v1936, 24
    %v1949 = vpop.permute.xlu0 %1948
    %v1951 = vsel %vm167, %v1768, %v1941
    %v1952 = vsel %vm85, %v1951, %v1945
    %v1953 = vsel %vm403, %v1952, %v1949
    %v1955 = vunpack.c.l.b16 %v1713
    %v1956 = vpack.c.b16 %v1955, %v1955
    %1957 = vrot.lane.b32.xlu0 %v1956, 96
    %v1958 = vpop.permute.xlu0 %1957
    %v1960 = vsel %vm167, %v1713, 0
    %v1963 = vsel %vm167, %v1958, 0
    %1965 = vmatpush.bf16.xpose.msra.mxu0 0
    %1966 = vmatpush.bf16.xpose.msra.mxu0 0
    %1967 = vmatpush.bf16.xpose.msra.mxu0 0
    %1968 = vmatpush.bf16.xpose.msra.mxu0 0
    %1969 = vmatpush.bf16.xpose.msra.mxu0 0
    %1970 = vmatpush.bf16.xpose.msra.mxu0 0
    %1971 = vmatpush.bf16.xpose.msra.mxu0 0
    %1972 = vmatpush.bf16.xpose.msra.mxu0 %v1963
    %1973 = vmatmul.bf16.gmra.mxu0 %v1960
    %v1974 = vpop.f32.mrf.mxu0
    %v1975 = vadd.f32 0.0, %v1974
    %v1976 = vpop.f32.mrf.mxu0
    %1977 = vdwg.mxu0
    %v1978 = vsel %vm167, %v1975, -inf
    %1979 = vmax.xlane.f32.xlu0 %v1978
    %v1980 = vpop.xlane.xlu0 %1979
    %v1981 = vsub.f32 %v1975, %v1980
    %v1982 = vmul.f32 %v1981, 1.442695
    %v1983 = vpow.pop %v1982
    %v1984 = vsel %vm167, %v1983, 0.0
    %1985 = vadd.xlane.f32.xlu0 %v1984
    %v1986 = vpop.xlane.xlu0 %1985
    %v1987 = vrcp.pop %v1986
    %v1988 = vmul.f32 %v1983, %v1987
    %v1989 = vpack.c.bf16 %v1988, %v1988
    %1990 = vrot.lane.b32.xlu0 %v1956, 64
    %v1991 = vpop.permute.xlu0 %1990
    %v1993 = vsel %vm167, %v1989, 0
    %v1996 = vsel %vm204, %v1991, 0
    %1998 = vmatpush.bf16.msra.mxu0 0
    %1999 = vmatpush.bf16.msra.mxu0 0
    %2000 = vmatpush.bf16.msra.mxu0 0
    %2001 = vmatpush.bf16.msra.mxu0 0
    %2002 = vmatpush.bf16.msra.mxu0 0
    %2003 = vmatpush.bf16.msra.mxu0 0
    %2004 = vmatpush.bf16.msra.mxu0 0
    %2005 = vmatpush.bf16.msra.mxu0 %v1996
    %2006 = vmatmul.bf16.gmra.mxu0 %v1993
    %v2007 = vpop.f32.mrf.mxu0
    %v2008 = vadd.f32 0.0, %v2007
    %v2009 = vpop.f32.mrf.mxu0
    %2010 = vdwg.mxu0
    %2011 = vrot.lane.b32.xlu0 %v1956, 120
    %v2012 = vpop.permute.xlu0 %2011
    %2013 = vrot.lane.b32.xlu0 %v1956, 88
    %v2014 = vpop.permute.xlu0 %2013
    %v2016 = vsel %vm167, %v2012, 0
    %v2019 = vsel %vm167, %v2014, 0
    %2021 = vmatpush.bf16.xpose.msra.mxu0 0
    %2022 = vmatpush.bf16.xpose.msra.mxu0 0
    %2023 = vmatpush.bf16.xpose.msra.mxu0 0
    %2024 = vmatpush.bf16.xpose.msra.mxu0 0
    %2025 = vmatpush.bf16.xpose.msra.mxu0 0
    %2026 = vmatpush.bf16.xpose.msra.mxu0 0
    %2027 = vmatpush.bf16.xpose.msra.mxu0 0
    %2028 = vmatpush.bf16.xpose.msra.mxu0 %v2019
    %2029 = vmatmul.bf16.gmra.mxu0 %v2016
    %v2030 = vpop.f32.mrf.mxu0
    %v2031 = vadd.f32 0.0, %v2030
    %v2032 = vpop.f32.mrf.mxu0
    %2033 = vdwg.mxu0
    %v2034 = vsel %vm167, %v2031, -inf
    %2035 = vmax.xlane.f32.xlu0 %v2034
    %v2036 = vpop.xlane.xlu0 %2035
    %v2037 = vsub.f32 %v2031, %v2036
    %v2038 = vmul.f32 %v2037, 1.442695
    %v2039 = vpow.pop %v2038
    %v2040 = vsel %vm167, %v2039, 0.0
    %2041 = vadd.xlane.f32.xlu0 %v2040
    %v2042 = vpop.xlane.xlu0 %2041
    %v2043 = vrcp.pop %v2042
    %v2044 = vmul.f32 %v2039, %v2043
    %v2045 = vpack.c.bf16 %v2044, %v2044
    %2046 = vrot.lane.b32.xlu0 %v1956, 56
    %v2047 = vpop.permute.xlu0 %2046
    %v2049 = vsel %vm167, %v2045, 0
    %v2052 = vsel %vm204, %v2047, 0
    %2054 = vmatpush.bf16.msra.mxu0 0
    %2055 = vmatpush.bf16.msra.mxu0 0
    %2056 = vmatpush.bf16.msra.mxu0 0
    %2057 = vmatpush.bf16.msra.mxu0 0
    %2058 = vmatpush.bf16.msra.mxu0 0
    %2059 = vmatpush.bf16.msra.mxu0 0
    %2060 = vmatpush.bf16.msra.mxu0 0
    %2061 = vmatpush.bf16.msra.mxu0 %v2052
    %2062 = vmatmul.bf16.gmra.mxu0 %v2049
    %v2063 = vpop.f32.mrf.mxu0
    %v2064 = vadd.f32 0.0, %v2063
    %v2065 = vpop.f32.mrf.mxu0
    %2066 = vdwg.mxu0
    %2067 = vrot.lane.b32.xlu0 %v1956, 112
    %v2068 = vpop.permute.xlu0 %2067
    %2069 = vrot.lane.b32.xlu0 %v1956, 80
    %v2070 = vpop.permute.xlu0 %2069
    %v2072 = vsel %vm167, %v2068, 0
    %v2075 = vsel %vm167, %v2070, 0
    %2077 = vmatpush.bf16.xpose.msra.mxu0 0
    %2078 = vmatpush.bf16.xpose.msra.mxu0 0
    %2079 = vmatpush.bf16.xpose.msra.mxu0 0
    %2080 = vmatpush.bf16.xpose.msra.mxu0 0
    %2081 = vmatpush.bf16.xpose.msra.mxu0 0
    %2082 = vmatpush.bf16.xpose.msra.mxu0 0
    %2083 = vmatpush.bf16.xpose.msra.mxu0 0
    %2084 = vmatpush.bf16.xpose.msra.mxu0 %v2075
    %2085 = vmatmul.bf16.gmra.mxu0 %v2072
    %v2086 = vpop.f32.mrf.mxu0
    %v2087 = vadd.f32 0.0, %v2086
    %v2088 = vpop.f32.mrf.mxu0
    %2089 = vdwg.mxu0
    %v2090 = vsel %vm167, %v2087, -inf
    %2091 = vmax.xlane.f32.xlu0 %v2090
    %v2092 = vpop.xlane.xlu0 %2091
    %v2093 = vsub.f32 %v2087, %v2092
    %v2094 = vmul.f32 %v2093, 1.442695
    %v2095 = vpow.pop %v2094
    %v2096 = vsel %vm167, %v2095, 0.0
    %2097 = vadd.xlane.f32.xlu0 %v2096
    %v2098 = vpop.xlane.xlu0 %2097
    %v2099 = vrcp.pop %v2098
    %v2100 = vmul.f32 %v2095, %v2099
    %v2101 = vpack.c.bf16 %v2100, %v2100
    %2102 = vrot.lane.b32.xlu0 %v1956, 48
    %v2103 = vpop.permute.xlu0 %2102
    %v2105 = vsel %vm167, %v2101, 0
    %v2108 = vsel %vm204, %v2103, 0
    %2110 = vmatpush.bf16.msra.mxu0 0
    %2111 = vmatpush.bf16.msra.mxu0 0
    %2112 = vmatpush.bf16.msra.mxu0 0
    %2113 = vmatpush.bf16.msra.mxu0 0
    %2114 = vmatpush.bf16.msra.mxu0 0
    %2115 = vmatpush.bf16.msra.mxu0 0
    %2116 = vmatpush.bf16.msra.mxu0 0
    %2117 = vmatpush.bf16.msra.mxu0 %v2108
    %2118 = vmatmul.bf16.gmra.mxu0 %v2105
    %v2119 = vpop.f32.mrf.mxu0
    %v2120 = vadd.f32 0.0, %v2119
    %v2121 = vpop.f32.mrf.mxu0
    %2122 = vdwg.mxu0
    %2123 = vrot.lane.b32.xlu0 %v1956, 104
    %v2124 = vpop.permute.xlu0 %2123
    %2125 = vrot.lane.b32.xlu0 %v1956, 72
    %v2126 = vpop.permute.xlu0 %2125
    %v2128 = vsel %vm167, %v2124, 0
    %v2131 = vsel %vm167, %v2126, 0
    %2133 = vmatpush.bf16.xpose.msra.mxu0 0
    %2134 = vmatpush.bf16.xpose.msra.mxu0 0
    %2135 = vmatpush.bf16.xpose.msra.mxu0 0
    %2136 = vmatpush.bf16.xpose.msra.mxu0 0
    %2137 = vmatpush.bf16.xpose.msra.mxu0 0
    %2138 = vmatpush.bf16.xpose.msra.mxu0 0
    %2139 = vmatpush.bf16.xpose.msra.mxu0 0
    %2140 = vmatpush.bf16.xpose.msra.mxu0 %v2131
    %2141 = vmatmul.bf16.gmra.mxu0 %v2128
    %v2142 = vpop.f32.mrf.mxu0
    %v2143 = vadd.f32 0.0, %v2142
    %v2144 = vpop.f32.mrf.mxu0
    %2145 = vdwg.mxu0
    %v2146 = vsel %vm167, %v2143, -inf
    %2147 = vmax.xlane.f32.xlu0 %v2146
    %v2148 = vpop.xlane.xlu0 %2147
    %v2149 = vsub.f32 %v2143, %v2148
    %v2150 = vmul.f32 %v2149, 1.442695
    %v2151 = vpow.pop %v2150
    %v2152 = vsel %vm167, %v2151, 0.0
    %2153 = vadd.xlane.f32.xlu0 %v2152
    %v2154 = vpop.xlane.xlu0 %2153
    %v2155 = vrcp.pop %v2154
    %v2156 = vmul.f32 %v2151, %v2155
    %v2157 = vpack.c.bf16 %v2156, %v2156
    %2158 = vrot.lane.b32.xlu0 %v1956, 40
    %v2159 = vpop.permute.xlu0 %2158
    %v2161 = vsel %vm167, %v2157, 0
    %v2164 = vsel %vm204, %v2159, 0
    %2166 = vmatpush.bf16.msra.mxu0 0
    %2167 = vmatpush.bf16.msra.mxu0 0
    %2168 = vmatpush.bf16.msra.mxu0 0
    %2169 = vmatpush.bf16.msra.mxu0 0
    %2170 = vmatpush.bf16.msra.mxu0 0
    %2171 = vmatpush.bf16.msra.mxu0 0
    %2172 = vmatpush.bf16.msra.mxu0 0
    %2173 = vmatpush.bf16.msra.mxu0 %v2164
    %2174 = vmatmul.bf16.gmra.mxu0 %v2161
    %v2175 = vpop.f32.mrf.mxu0
    %v2176 = vadd.f32 0.0, %v2175
    %v2177 = vpop.f32.mrf.mxu0
    %2178 = vdwg.mxu0
    %2180 = vrot.lane.b32.xlu0 %v2064, 8
    %v2181 = vpop.permute.xlu0 %2180
    %2184 = vrot.lane.b32.xlu0 %v2120, 16
    %v2185 = vpop.permute.xlu0 %2184
    %2188 = vrot.lane.b32.xlu0 %v2176, 24
    %v2189 = vpop.permute.xlu0 %2188
    %v2191 = vsel %vm167, %v2008, %v2181
    %v2192 = vsel %vm85, %v2191, %v2185
    %v2193 = vsel %vm403, %v2192, %v2189
    %v2194 = vpack.c.bf16 %v2193, %v1953
    %v2195 = vperm.slane %v1678, 0
    %v2200 = vunpack.c.l.b16 %v1661
    %v2201 = vunpack.c.l.b16 %v1662
    %v2202 = vunpack.c.l.b16 %v1663
    %v2203 = vunpack.c.l.b16 %v1664
    %v2204 = vpack.c.b16 %v2201, %v2200
    %v2205 = vpack.c.b16 %v2203, %v2202
    %v2209 = vsel %vm142, %v2194, 0
    %2211 = vmatpush.bf16.msra.mxu0 0
    %2212 = vmatpush.bf16.msra.mxu0 0
    %2213 = vmatpush.bf16.msra.mxu0 0
    %2214 = vmatpush.bf16.msra.mxu0 0
    %2215 = vmatpush.bf16.msra.mxu0 0
    %2216 = vmatpush.bf16.msra.mxu0 0
    %2217 = vmatpush.bf16.msra.mxu0 %v2205
    %2218 = vmatpush.bf16.msra.mxu0 %v2204
    %2219 = vmatmul.bf16.gmra.mxu0 %v2209
    %v2220 = vpop.f32.mrf.mxu0
    %v2221 = vadd.f32 %v2195, %v2220
    %v2222 = vpop.f32.mrf.mxu0
    %v2223 = vadd.f32 %v2195, %v2222
    %2224 = vdwg.mxu0
    %v2225 = vadd.f32 %v1652, %v2221
    %v2226 = vadd.f32 %v1654, %v2223
    %v2227 = vsel %vm142, %v2225, 0.0
    %2228 = vadd.xlane.f32.xlu0 %v2227
    %v2229 = vpop.xlane.xlu0 %2228
    %v2230 = vsel %vm142, %v2226, 0.0
    %2231 = vadd.xlane.f32.xlu0 %v2230
    %v2232 = vpop.xlane.xlu0 %2231
    %v2233 = vmul.f32 %v2229, %v690
    %v2234 = vmul.f32 %v2232, %v690
    %v2235 = vsub.f32 %v2225, %v2233
    %v2236 = vsub.f32 %v2226, %v2234
    %v2237 = vmul.f32 %v2235, %v2235
    %v2238 = vmul.f32 %v2236, %v2236
    %v2239 = vsel %vm142, %v2237, 0.0
    %2240 = vadd.xlane.f32.xlu0 %v2239
    %v2241 = vpop.xlane.xlu0 %2240
    %v2242 = vsel %vm142, %v2238, 0.0
    %2243 = vadd.xlane.f32.xlu0 %v2242
    %v2244 = vpop.xlane.xlu0 %2243
    %v2245 = vmul.f32 %v2241, %v690
    %v2246 = vmul.f32 %v2244, %v690
    %v2247 = vadd.f32 %v2245, 1e-05
    %v2248 = vadd.f32 %v2246, 1e-05
    %v2249 = vrsqrt.pop %v2247
    %v2250 = vmul.f32 %v2249, %v2247
    %v2251 = vmul.f32 %v2250, %v2249
    %v2252 = vmul.f32 0.5, %v2251
    %v2253 = vsub.f32 1.5, %v2252
    %v2254 = vmul.f32 %v2249, %v2253
    %vm2255 = vweird.f32 %v2247
    %vm2256 = vweird.f32 %v2249
    %vm2257 = vmor %vm2255, %vm2256
    %v2258 = vsel %vm2257, %v2249, %v2254
    %v2259 = vrsqrt.pop %v2248
    %v2260 = vmul.f32 %v2259, %v2248
    %v2261 = vmul.f32 %v2260, %v2259
    %v2262 = vmul.f32 0.5, %v2261
    %v2263 = vsub.f32 1.5, %v2262
    %v2264 = vmul.f32 %v2259, %v2263
    %vm2265 = vweird.f32 %v2248
    %vm2266 = vweird.f32 %v2259
    %vm2267 = vmor %vm2265, %vm2266
    %v2268 = vsel %vm2267, %v2259, %v2264
    %v2269 = vmul.f32 %v2235, %v2258
    %v2270 = vmul.f32 %v2236, %v2268
    %v2271 = vperm.slane %v1678, 1
    %v2272 = vmul.f32 %v2269, %v2271
    %v2273 = vmul.f32 %v2270, %v2271
    %v2274 = vperm.slane %v1678, 2
    %v2275 = vadd.f32 %v2272, %v2274
    %v2276 = vadd.f32 %v2273, %v2274
    %v2277 = vpack.c.bf16 %v2276, %v2275
    %v2279 = vperm.slane %v1669, 0
    %v2285 = vunpack.c.l.b16 %v1665
    %v2286 = vunpack.c.l.b16 %v1666
    %v2287 = vunpack.c.l.b16 %v1667
    %v2288 = vunpack.c.l.b16 %v1668
    %v2289 = vpack.c.b16 %v2286, %v2285
    %v2290 = vpack.c.b16 %v2288, %v2287
    %v2294 = vsel %vm142, %v2277, 0
    %2296 = vmatpush.bf16.msra.mxu0 0
    %2297 = vmatpush.bf16.msra.mxu0 0
    %2298 = vmatpush.bf16.msra.mxu0 0
    %2299 = vmatpush.bf16.msra.mxu0 0
    %2300 = vmatpush.bf16.msra.mxu0 0
    %2301 = vmatpush.bf16.msra.mxu0 0
    %2302 = vmatpush.bf16.msra.mxu0 %v2290
    %2303 = vmatpush.bf16.msra.mxu0 %v2289
    %2304 = vmatmul.bf16.gmra.mxu0 %v2294
    %v2305 = vpop.f32.mrf.mxu0
    %v2306 = vadd.f32 %v2279, %v2305
    %v2307 = vpop.f32.mrf.mxu0
    %v2308 = vadd.f32 %v2279, %v2307
    %2309 = vdwg.mxu0
    %v2310 = vmax.f32 %v2306, 0.0
    %v2311 = vmax.f32 %v2308, 0.0
    %v2312 = vpack.c.bf16 %v2311, %v2310
    %v2313 = vperm.slane %v1678, 3
    %v2322 = vunpack.c.l.b16 %v1670
    %v2323 = vunpack.c.l.b16 %v1671
    %v2324 = vunpack.c.l.b16 %v1672
    %v2325 = vunpack.c.l.b16 %v1673
    %v2326 = vunpack.c.l.b16 %v1674
    %v2327 = vunpack.c.l.b16 %v1675
    %v2328 = vunpack.c.l.b16 %v1676
    %v2329 = vunpack.c.l.b16 %v1677
    %v2330 = vpack.c.b16 %v2323, %v2322
    %v2331 = vpack.c.b16 %v2325, %v2324
    %v2332 = vpack.c.b16 %v2327, %v2326
    %v2333 = vpack.c.b16 %v2329, %v2328
    %v2339 = vsel %vm796, %v2312, 0
    %2341 = vmatpush.bf16.msra.mxu0 0
    %2342 = vmatpush.bf16.msra.mxu0 0
    %2343 = vmatpush.bf16.msra.mxu0 0
    %2344 = vmatpush.bf16.msra.mxu0 0
    %2345 = vmatpush.bf16.msra.mxu0 %v2333
    %2346 = vmatpush.bf16.msra.mxu0 %v2332
    %2347 = vmatpush.bf16.msra.mxu0 %v2331
    %2348 = vmatpush.bf16.msra.mxu0 %v2330
    %2349 = vmatmul.bf16.gmra.mxu0 %v2339
    %v2350 = vpop.f32.mrf.mxu0
    %v2351 = vadd.f32 %v2313, %v2350
    %v2352 = vpop.f32.mrf.mxu0
    %v2353 = vadd.f32 %v2313, %v2352
    %2354 = vdwg.mxu0
    %v2355 = vadd.f32 %v2275, %v2351
    %v2356 = vadd.f32 %v2276, %v2353
    %v2357 = vsel %vm142, %v2355, 0.0
    %2358 = vadd.xlane.f32.xlu0 %v2357
    %v2359 = vpop.xlane.xlu0 %2358
    %v2360 = vsel %vm142, %v2356, 0.0
    %2361 = vadd.xlane.f32.xlu0 %v2360
    %v2362 = vpop.xlane.xlu0 %2361
    %v2363 = vmul.f32 %v2359, %v690
    %v2364 = vmul.f32 %v2362, %v690
    %v2365 = vsub.f32 %v2355, %v2363
    %v2366 = vsub.f32 %v2356, %v2364
    %v2367 = vmul.f32 %v2365, %v2365
    %v2368 = vmul.f32 %v2366, %v2366
    %v2369 = vsel %vm142, %v2367, 0.0
    %2370 = vadd.xlane.f32.xlu0 %v2369
    %v2371 = vpop.xlane.xlu0 %2370
    %v2372 = vsel %vm142, %v2368, 0.0
    %2373 = vadd.xlane.f32.xlu0 %v2372
    %v2374 = vpop.xlane.xlu0 %2373
    %v2375 = vmul.f32 %v2371, %v690
    %v2376 = vmul.f32 %v2374, %v690
    %v2377 = vadd.f32 %v2375, 1e-05
    %v2378 = vadd.f32 %v2376, 1e-05
    %v2379 = vrsqrt.pop %v2377
    %v2380 = vmul.f32 %v2379, %v2377
    %v2381 = vmul.f32 %v2380, %v2379
    %v2382 = vmul.f32 0.5, %v2381
    %v2383 = vsub.f32 1.5, %v2382
    %v2384 = vmul.f32 %v2379, %v2383
    %vm2385 = vweird.f32 %v2377
    %vm2386 = vweird.f32 %v2379
    %vm2387 = vmor %vm2385, %vm2386
    %v2388 = vsel %vm2387, %v2379, %v2384
    %v2389 = vrsqrt.pop %v2378
    %v2390 = vmul.f32 %v2389, %v2378
    %v2391 = vmul.f32 %v2390, %v2389
    %v2392 = vmul.f32 0.5, %v2391
    %v2393 = vsub.f32 1.5, %v2392
    %v2394 = vmul.f32 %v2389, %v2393
    %vm2395 = vweird.f32 %v2378
    %vm2396 = vweird.f32 %v2389
    %vm2397 = vmor %vm2395, %vm2396
    %v2398 = vsel %vm2397, %v2389, %v2394
    %v2399 = vmul.f32 %v2365, %v2388
    %v2400 = vmul.f32 %v2366, %v2398
    %v2401 = vperm.slane %v1678, 4
    %v2402 = vmul.f32 %v2399, %v2401
    %v2403 = vmul.f32 %v2400, %v2401
    %v2404 = vperm.slane %v1678, 5
    %v2405 = vadd.f32 %v2402, %v2404
    %v2406 = vadd.f32 %v2403, %v2404
    %s2407 = scalar_lea.vmem %s13, 16
    %v2408 = vld [vmem:[%s2407] sm:$0xf]
    %v2409 = vld [vmem:[%s2407 + $0x4] sm:$0xf]
    %v2410 = vld [vmem:[%s2407 + $0x8] sm:$0xf]
    %v2411 = vld [vmem:[%s2407 + $0xc] sm:$0xf]
    %s2412 = scalar_lea.vmem %s14, 1
    %v2413 = vld [vmem:[%s2412] sm:$0x1]
    %s2414 = scalar_lea.vmem %s15, 16
    %v2415 = vld [vmem:[%s2414] sm:$0xf]
    %v2416 = vld [vmem:[%s2414 + $0x4] sm:$0xf]
    %v2417 = vld [vmem:[%s2414 + $0x8] sm:$0xf]
    %v2418 = vld [vmem:[%s2414 + $0xc] sm:$0xf]
    %s2419 = scalar_lea.vmem %s16, 16
    %v2420 = vld [vmem:[%s2419] sm:$0xf]
    %v2421 = vld [vmem:[%s2419 + $0x4] sm:$0xf]
    %v2422 = vld [vmem:[%s2419 + $0x8] sm:$0xf]
    %v2423 = vld [vmem:[%s2419 + $0xc] sm:$0xf]
    %s2424 = scalar_lea.vmem %s17, 1
    %v2425 = vld [vmem:[%s2424] sm:$0x1]
    %s2426 = scalar_lea.vmem %s18, 32
    %v2427 = vld [vmem:[%s2426] sm:$0xf]
    %v2428 = vld [vmem:[%s2426 + $0x4] sm:$0xf]
    %v2429 = vld [vmem:[%s2426 + $0x8] sm:$0xf]
    %v2430 = vld [vmem:[%s2426 + $0xc] sm:$0xf]
    %v2431 = vld [vmem:[%s2426 + $0x10] sm:$0xf]
    %v2432 = vld [vmem:[%s2426 + $0x14] sm:$0xf]
    %v2433 = vld [vmem:[%s2426 + $0x18] sm:$0xf]
    %v2434 = vld [vmem:[%s2426 + $0x1c] sm:$0xf]
    %s2435 = scalar_lea.vmem %s19, 8
    %v2436 = vld [vmem:[%s2435] sm:$0x3f]
    %v2437 = vpack.c.bf16 %v2406, %v2405
    %v2439 = vperm.slane %v2413, 0
    %v2445 = vunpack.c.l.b16 %v2408
    %v2446 = vunpack.c.l.b16 %v2409
    %v2447 = vunpack.c.l.b16 %v2410
    %v2448 = vunpack.c.l.b16 %v2411
    %v2449 = vpack.c.b16 %v2446, %v2445
    %v2450 = vpack.c.b16 %v2448, %v2447
    %v2454 = vsel %vm142, %v2437, 0
    %2456 = vmatpush.bf16.msra.mxu0 0
    %2457 = vmatpush.bf16.msra.mxu0 0
    %2458 = vmatpush.bf16.msra.mxu0 0
    %2459 = vmatpush.bf16.msra.mxu0 0
    %2460 = vmatpush.bf16.msra.mxu0 0
    %2461 = vmatpush.bf16.msra.mxu0 0
    %2462 = vmatpush.bf16.msra.mxu0 %v2450
    %2463 = vmatpush.bf16.msra.mxu0 %v2449
    %2464 = vmatmul.bf16.gmra.mxu0 %v2454
    %v2465 = vpop.f32.mrf.mxu0
    %v2466 = vadd.f32 %v2439, %v2465
    %v2467 = vpop.f32.mrf.mxu0
    %v2468 = vadd.f32 %v2439, %v2467
    %2469 = vdwg.mxu0
    %v2470 = vpack.c.bf16 %v2466, %v2466
    %v2471 = vpack.c.bf16 %v2468, %v2468
    %v2473 = vunpack.c.l.b16 %v2470
    %v2474 = vpack.c.b16 %v2473, %v2473
    %2475 = vrot.lane.b32.xlu0 %v2474, 96
    %v2476 = vpop.permute.xlu0 %2475
    %v2478 = vsel %vm167, %v2470, 0
    %v2481 = vsel %vm167, %v2476, 0
    %2483 = vmatpush.bf16.xpose.msra.mxu0 0
    %2484 = vmatpush.bf16.xpose.msra.mxu0 0
    %2485 = vmatpush.bf16.xpose.msra.mxu0 0
    %2486 = vmatpush.bf16.xpose.msra.mxu0 0
    %2487 = vmatpush.bf16.xpose.msra.mxu0 0
    %2488 = vmatpush.bf16.xpose.msra.mxu0 0
    %2489 = vmatpush.bf16.xpose.msra.mxu0 0
    %2490 = vmatpush.bf16.xpose.msra.mxu0 %v2481
    %2491 = vmatmul.bf16.gmra.mxu0 %v2478
    %v2492 = vpop.f32.mrf.mxu0
    %v2493 = vadd.f32 0.0, %v2492
    %v2494 = vpop.f32.mrf.mxu0
    %2495 = vdwg.mxu0
    %v2496 = vsel %vm167, %v2493, -inf
    %2497 = vmax.xlane.f32.xlu0 %v2496
    %v2498 = vpop.xlane.xlu0 %2497
    %v2499 = vsub.f32 %v2493, %v2498
    %v2500 = vmul.f32 %v2499, 1.442695
    %v2501 = vpow.pop %v2500
    %v2502 = vsel %vm167, %v2501, 0.0
    %2503 = vadd.xlane.f32.xlu0 %v2502
    %v2504 = vpop.xlane.xlu0 %2503
    %v2505 = vrcp.pop %v2504
    %v2506 = vmul.f32 %v2501, %v2505
    %v2507 = vpack.c.bf16 %v2506, %v2506
    %2508 = vrot.lane.b32.xlu0 %v2474, 64
    %v2509 = vpop.permute.xlu0 %2508
    %v2511 = vsel %vm167, %v2507, 0
    %v2514 = vsel %vm204, %v2509, 0
    %2516 = vmatpush.bf16.msra.mxu0 0
    %2517 = vmatpush.bf16.msra.mxu0 0
    %2518 = vmatpush.bf16.msra.mxu0 0
    %2519 = vmatpush.bf16.msra.mxu0 0
    %2520 = vmatpush.bf16.msra.mxu0 0
    %2521 = vmatpush.bf16.msra.mxu0 0
    %2522 = vmatpush.bf16.msra.mxu0 0
    %2523 = vmatpush.bf16.msra.mxu0 %v2514
    %2524 = vmatmul.bf16.gmra.mxu0 %v2511
    %v2525 = vpop.f32.mrf.mxu0
    %v2526 = vadd.f32 0.0, %v2525
    %v2527 = vpop.f32.mrf.mxu0
    %2528 = vdwg.mxu0
    %2529 = vrot.lane.b32.xlu0 %v2474, 120
    %v2530 = vpop.permute.xlu0 %2529
    %2531 = vrot.lane.b32.xlu0 %v2474, 88
    %v2532 = vpop.permute.xlu0 %2531
    %v2534 = vsel %vm167, %v2530, 0
    %v2537 = vsel %vm167, %v2532, 0
    %2539 = vmatpush.bf16.xpose.msra.mxu0 0
    %2540 = vmatpush.bf16.xpose.msra.mxu0 0
    %2541 = vmatpush.bf16.xpose.msra.mxu0 0
    %2542 = vmatpush.bf16.xpose.msra.mxu0 0
    %2543 = vmatpush.bf16.xpose.msra.mxu0 0
    %2544 = vmatpush.bf16.xpose.msra.mxu0 0
    %2545 = vmatpush.bf16.xpose.msra.mxu0 0
    %2546 = vmatpush.bf16.xpose.msra.mxu0 %v2537
    %2547 = vmatmul.bf16.gmra.mxu0 %v2534
    %v2548 = vpop.f32.mrf.mxu0
    %v2549 = vadd.f32 0.0, %v2548
    %v2550 = vpop.f32.mrf.mxu0
    %2551 = vdwg.mxu0
    %v2552 = vsel %vm167, %v2549, -inf
    %2553 = vmax.xlane.f32.xlu0 %v2552
    %v2554 = vpop.xlane.xlu0 %2553
    %v2555 = vsub.f32 %v2549, %v2554
    %v2556 = vmul.f32 %v2555, 1.442695
    %v2557 = vpow.pop %v2556
    %v2558 = vsel %vm167, %v2557, 0.0
    %2559 = vadd.xlane.f32.xlu0 %v2558
    %v2560 = vpop.xlane.xlu0 %2559
    %v2561 = vrcp.pop %v2560
    %v2562 = vmul.f32 %v2557, %v2561
    %v2563 = vpack.c.bf16 %v2562, %v2562
    %2564 = vrot.lane.b32.xlu0 %v2474, 56
    %v2565 = vpop.permute.xlu0 %2564
    %v2567 = vsel %vm167, %v2563, 0
    %v2570 = vsel %vm204, %v2565, 0
    %2572 = vmatpush.bf16.msra.mxu0 0
    %2573 = vmatpush.bf16.msra.mxu0 0
    %2574 = vmatpush.bf16.msra.mxu0 0
    %2575 = vmatpush.bf16.msra.mxu0 0
    %2576 = vmatpush.bf16.msra.mxu0 0
    %2577 = vmatpush.bf16.msra.mxu0 0
    %2578 = vmatpush.bf16.msra.mxu0 0
    %2579 = vmatpush.bf16.msra.mxu0 %v2570
    %2580 = vmatmul.bf16.gmra.mxu0 %v2567
    %v2581 = vpop.f32.mrf.mxu0
    %v2582 = vadd.f32 0.0, %v2581
    %v2583 = vpop.f32.mrf.mxu0
    %2584 = vdwg.mxu0
    %2585 = vrot.lane.b32.xlu0 %v2474, 112
    %v2586 = vpop.permute.xlu0 %2585
    %2587 = vrot.lane.b32.xlu0 %v2474, 80
    %v2588 = vpop.permute.xlu0 %2587
    %v2590 = vsel %vm167, %v2586, 0
    %v2593 = vsel %vm167, %v2588, 0
    %2595 = vmatpush.bf16.xpose.msra.mxu0 0
    %2596 = vmatpush.bf16.xpose.msra.mxu0 0
    %2597 = vmatpush.bf16.xpose.msra.mxu0 0
    %2598 = vmatpush.bf16.xpose.msra.mxu0 0
    %2599 = vmatpush.bf16.xpose.msra.mxu0 0
    %2600 = vmatpush.bf16.xpose.msra.mxu0 0
    %2601 = vmatpush.bf16.xpose.msra.mxu0 0
    %2602 = vmatpush.bf16.xpose.msra.mxu0 %v2593
    %2603 = vmatmul.bf16.gmra.mxu0 %v2590
    %v2604 = vpop.f32.mrf.mxu0
    %v2605 = vadd.f32 0.0, %v2604
    %v2606 = vpop.f32.mrf.mxu0
    %2607 = vdwg.mxu0
    %v2608 = vsel %vm167, %v2605, -inf
    %2609 = vmax.xlane.f32.xlu0 %v2608
    %v2610 = vpop.xlane.xlu0 %2609
    %v2611 = vsub.f32 %v2605, %v2610
    %v2612 = vmul.f32 %v2611, 1.442695
    %v2613 = vpow.pop %v2612
    %v2614 = vsel %vm167, %v2613, 0.0
    %2615 = vadd.xlane.f32.xlu0 %v2614
    %v2616 = vpop.xlane.xlu0 %2615
    %v2617 = vrcp.pop %v2616
    %v2618 = vmul.f32 %v2613, %v2617
    %v2619 = vpack.c.bf16 %v2618, %v2618
    %2620 = vrot.lane.b32.xlu0 %v2474, 48
    %v2621 = vpop.permute.xlu0 %2620
    %v2623 = vsel %vm167, %v2619, 0
    %v2626 = vsel %vm204, %v2621, 0
    %2628 = vmatpush.bf16.msra.mxu0 0
    %2629 = vmatpush.bf16.msra.mxu0 0
    %2630 = vmatpush.bf16.msra.mxu0 0
    %2631 = vmatpush.bf16.msra.mxu0 0
    %2632 = vmatpush.bf16.msra.mxu0 0
    %2633 = vmatpush.bf16.msra.mxu0 0
    %2634 = vmatpush.bf16.msra.mxu0 0
    %2635 = vmatpush.bf16.msra.mxu0 %v2626
    %2636 = vmatmul.bf16.gmra.mxu0 %v2623
    %v2637 = vpop.f32.mrf.mxu0
    %v2638 = vadd.f32 0.0, %v2637
    %v2639 = vpop.f32.mrf.mxu0
    %2640 = vdwg.mxu0
    %2641 = vrot.lane.b32.xlu0 %v2474, 104
    %v2642 = vpop.permute.xlu0 %2641
    %2643 = vrot.lane.b32.xlu0 %v2474, 72
    %v2644 = vpop.permute.xlu0 %2643
    %v2646 = vsel %vm167, %v2642, 0
    %v2649 = vsel %vm167, %v2644, 0
    %2651 = vmatpush.bf16.xpose.msra.mxu0 0
    %2652 = vmatpush.bf16.xpose.msra.mxu0 0
    %2653 = vmatpush.bf16.xpose.msra.mxu0 0
    %2654 = vmatpush.bf16.xpose.msra.mxu0 0
    %2655 = vmatpush.bf16.xpose.msra.mxu0 0
    %2656 = vmatpush.bf16.xpose.msra.mxu0 0
    %2657 = vmatpush.bf16.xpose.msra.mxu0 0
    %2658 = vmatpush.bf16.xpose.msra.mxu0 %v2649
    %2659 = vmatmul.bf16.gmra.mxu0 %v2646
    %v2660 = vpop.f32.mrf.mxu0
    %v2661 = vadd.f32 0.0, %v2660
    %v2662 = vpop.f32.mrf.mxu0
    %2663 = vdwg.mxu0
    %v2664 = vsel %vm167, %v2661, -inf
    %2665 = vmax.xlane.f32.xlu0 %v2664
    %v2666 = vpop.xlane.xlu0 %2665
    %v2667 = vsub.f32 %v2661, %v2666
    %v2668 = vmul.f32 %v2667, 1.442695
    %v2669 = vpow.pop %v2668
    %v2670 = vsel %vm167, %v2669, 0.0
    %2671 = vadd.xlane.f32.xlu0 %v2670
    %v2672 = vpop.xlane.xlu0 %2671
    %v2673 = vrcp.pop %v2672
    %v2674 = vmul.f32 %v2669, %v2673
    %v2675 = vpack.c.bf16 %v2674, %v2674
    %2676 = vrot.lane.b32.xlu0 %v2474, 40
    %v2677 = vpop.permute.xlu0 %2676
    %v2679 = vsel %vm167, %v2675, 0
    %v2682 = vsel %vm204, %v2677, 0
    %2684 = vmatpush.bf16.msra.mxu0 0
    %2685 = vmatpush.bf16.msra.mxu0 0
    %2686 = vmatpush.bf16.msra.mxu0 0
    %2687 = vmatpush.bf16.msra.mxu0 0
    %2688 = vmatpush.bf16.msra.mxu0 0
    %2689 = vmatpush.bf16.msra.mxu0 0
    %2690 = vmatpush.bf16.msra.mxu0 0
    %2691 = vmatpush.bf16.msra.mxu0 %v2682
    %2692 = vmatmul.bf16.gmra.mxu0 %v2679
    %v2693 = vpop.f32.mrf.mxu0
    %v2694 = vadd.f32 0.0, %v2693
    %v2695 = vpop.f32.mrf.mxu0
    %2696 = vdwg.mxu0
    %2698 = vrot.lane.b32.xlu0 %v2582, 8
    %v2699 = vpop.permute.xlu0 %2698
    %2702 = vrot.lane.b32.xlu0 %v2638, 16
    %v2703 = vpop.permute.xlu0 %2702
    %2706 = vrot.lane.b32.xlu0 %v2694, 24
    %v2707 = vpop.permute.xlu0 %2706
    %v2709 = vsel %vm167, %v2526, %v2699
    %v2710 = vsel %vm85, %v2709, %v2703
    %v2711 = vsel %vm403, %v2710, %v2707
    %v2713 = vunpack.c.l.b16 %v2471
    %v2714 = vpack.c.b16 %v2713, %v2713
    %2715 = vrot.lane.b32.xlu0 %v2714, 96
    %v2716 = vpop.permute.xlu0 %2715
    %v2718 = vsel %vm167, %v2471, 0
    %v2721 = vsel %vm167, %v2716, 0
    %2723 = vmatpush.bf16.xpose.msra.mxu0 0
    %2724 = vmatpush.bf16.xpose.msra.mxu0 0
    %2725 = vmatpush.bf16.xpose.msra.mxu0 0
    %2726 = vmatpush.bf16.xpose.msra.mxu0 0
    %2727 = vmatpush.bf16.xpose.msra.mxu0 0
    %2728 = vmatpush.bf16.xpose.msra.mxu0 0
    %2729 = vmatpush.bf16.xpose.msra.mxu0 0
    %2730 = vmatpush.bf16.xpose.msra.mxu0 %v2721
    %2731 = vmatmul.bf16.gmra.mxu0 %v2718
    %v2732 = vpop.f32.mrf.mxu0
    %v2733 = vadd.f32 0.0, %v2732
    %v2734 = vpop.f32.mrf.mxu0
    %2735 = vdwg.mxu0
    %v2736 = vsel %vm167, %v2733, -inf
    %2737 = vmax.xlane.f32.xlu0 %v2736
    %v2738 = vpop.xlane.xlu0 %2737
    %v2739 = vsub.f32 %v2733, %v2738
    %v2740 = vmul.f32 %v2739, 1.442695
    %v2741 = vpow.pop %v2740
    %v2742 = vsel %vm167, %v2741, 0.0
    %2743 = vadd.xlane.f32.xlu0 %v2742
    %v2744 = vpop.xlane.xlu0 %2743
    %v2745 = vrcp.pop %v2744
    %v2746 = vmul.f32 %v2741, %v2745
    %v2747 = vpack.c.bf16 %v2746, %v2746
    %2748 = vrot.lane.b32.xlu0 %v2714, 64
    %v2749 = vpop.permute.xlu0 %2748
    %v2751 = vsel %vm167, %v2747, 0
    %v2754 = vsel %vm204, %v2749, 0
    %2756 = vmatpush.bf16.msra.mxu0 0
    %2757 = vmatpush.bf16.msra.mxu0 0
    %2758 = vmatpush.bf16.msra.mxu0 0
    %2759 = vmatpush.bf16.msra.mxu0 0
    %2760 = vmatpush.bf16.msra.mxu0 0
    %2761 = vmatpush.bf16.msra.mxu0 0
    %2762 = vmatpush.bf16.msra.mxu0 0
    %2763 = vmatpush.bf16.msra.mxu0 %v2754
    %2764 = vmatmul.bf16.gmra.mxu0 %v2751
    %v2765 = vpop.f32.mrf.mxu0
    %v2766 = vadd.f32 0.0, %v2765
    %v2767 = vpop.f32.mrf.mxu0
    %2768 = vdwg.mxu0
    %2769 = vrot.lane.b32.xlu0 %v2714, 120
    %v2770 = vpop.permute.xlu0 %2769
    %2771 = vrot.lane.b32.xlu0 %v2714, 88
    %v2772 = vpop.permute.xlu0 %2771
    %v2774 = vsel %vm167, %v2770, 0
    %v2777 = vsel %vm167, %v2772, 0
    %2779 = vmatpush.bf16.xpose.msra.mxu0 0
    %2780 = vmatpush.bf16.xpose.msra.mxu0 0
    %2781 = vmatpush.bf16.xpose.msra.mxu0 0
    %2782 = vmatpush.bf16.xpose.msra.mxu0 0
    %2783 = vmatpush.bf16.xpose.msra.mxu0 0
    %2784 = vmatpush.bf16.xpose.msra.mxu0 0
    %2785 = vmatpush.bf16.xpose.msra.mxu0 0
    %2786 = vmatpush.bf16.xpose.msra.mxu0 %v2777
    %2787 = vmatmul.bf16.gmra.mxu0 %v2774
    %v2788 = vpop.f32.mrf.mxu0
    %v2789 = vadd.f32 0.0, %v2788
    %v2790 = vpop.f32.mrf.mxu0
    %2791 = vdwg.mxu0
    %v2792 = vsel %vm167, %v2789, -inf
    %2793 = vmax.xlane.f32.xlu0 %v2792
    %v2794 = vpop.xlane.xlu0 %2793
    %v2795 = vsub.f32 %v2789, %v2794
    %v2796 = vmul.f32 %v2795, 1.442695
    %v2797 = vpow.pop %v2796
    %v2798 = vsel %vm167, %v2797, 0.0
    %2799 = vadd.xlane.f32.xlu0 %v2798
    %v2800 = vpop.xlane.xlu0 %2799
    %v2801 = vrcp.pop %v2800
    %v2802 = vmul.f32 %v2797, %v2801
    %v2803 = vpack.c.bf16 %v2802, %v2802
    %2804 = vrot.lane.b32.xlu0 %v2714, 56
    %v2805 = vpop.permute.xlu0 %2804
    %v2807 = vsel %vm167, %v2803, 0
    %v2810 = vsel %vm204, %v2805, 0
    %2812 = vmatpush.bf16.msra.mxu0 0
    %2813 = vmatpush.bf16.msra.mxu0 0
    %2814 = vmatpush.bf16.msra.mxu0 0
    %2815 = vmatpush.bf16.msra.mxu0 0
    %2816 = vmatpush.bf16.msra.mxu0 0
    %2817 = vmatpush.bf16.msra.mxu0 0
    %2818 = vmatpush.bf16.msra.mxu0 0
    %2819 = vmatpush.bf16.msra.mxu0 %v2810
    %2820 = vmatmul.bf16.gmra.mxu0 %v2807
    %v2821 = vpop.f32.mrf.mxu0
    %v2822 = vadd.f32 0.0, %v2821
    %v2823 = vpop.f32.mrf.mxu0
    %2824 = vdwg.mxu0
    %2825 = vrot.lane.b32.xlu0 %v2714, 112
    %v2826 = vpop.permute.xlu0 %2825
    %2827 = vrot.lane.b32.xlu0 %v2714, 80
    %v2828 = vpop.permute.xlu0 %2827
    %v2830 = vsel %vm167, %v2826, 0
    %v2833 = vsel %vm167, %v2828, 0
    %2835 = vmatpush.bf16.xpose.msra.mxu0 0
    %2836 = vmatpush.bf16.xpose.msra.mxu0 0
    %2837 = vmatpush.bf16.xpose.msra.mxu0 0
    %2838 = vmatpush.bf16.xpose.msra.mxu0 0
    %2839 = vmatpush.bf16.xpose.msra.mxu0 0
    %2840 = vmatpush.bf16.xpose.msra.mxu0 0
    %2841 = vmatpush.bf16.xpose.msra.mxu0 0
    %2842 = vmatpush.bf16.xpose.msra.mxu0 %v2833
    %2843 = vmatmul.bf16.gmra.mxu0 %v2830
    %v2844 = vpop.f32.mrf.mxu0
    %v2845 = vadd.f32 0.0, %v2844
    %v2846 = vpop.f32.mrf.mxu0
    %2847 = vdwg.mxu0
    %v2848 = vsel %vm167, %v2845, -inf
    %2849 = vmax.xlane.f32.xlu0 %v2848
    %v2850 = vpop.xlane.xlu0 %2849
    %v2851 = vsub.f32 %v2845, %v2850
    %v2852 = vmul.f32 %v2851, 1.442695
    %v2853 = vpow.pop %v2852
    %v2854 = vsel %vm167, %v2853, 0.0
    %2855 = vadd.xlane.f32.xlu0 %v2854
    %v2856 = vpop.xlane.xlu0 %2855
    %v2857 = vrcp.pop %v2856
    %v2858 = vmul.f32 %v2853, %v2857
    %v2859 = vpack.c.bf16 %v2858, %v2858
    %2860 = vrot.lane.b32.xlu0 %v2714, 48
    %v2861 = vpop.permute.xlu0 %2860
    %v2863 = vsel %vm167, %v2859, 0
    %v2866 = vsel %vm204, %v2861, 0
    %2868 = vmatpush.bf16.msra.mxu0 0
    %2869 = vmatpush.bf16.msra.mxu0 0
    %2870 = vmatpush.bf16.msra.mxu0 0
    %2871 = vmatpush.bf16.msra.mxu0 0
    %2872 = vmatpush.bf16.msra.mxu0 0
    %2873 = vmatpush.bf16.msra.mxu0 0
    %2874 = vmatpush.bf16.msra.mxu0 0
    %2875 = vmatpush.bf16.msra.mxu0 %v2866
    %2876 = vmatmul.bf16.gmra.mxu0 %v2863
    %v2877 = vpop.f32.mrf.mxu0
    %v2878 = vadd.f32 0.0, %v2877
    %v2879 = vpop.f32.mrf.mxu0
    %2880 = vdwg.mxu0
    %2881 = vrot.lane.b32.xlu0 %v2714, 104
    %v2882 = vpop.permute.xlu0 %2881
    %2883 = vrot.lane.b32.xlu0 %v2714, 72
    %v2884 = vpop.permute.xlu0 %2883
    %v2886 = vsel %vm167, %v2882, 0
    %v2889 = vsel %vm167, %v2884, 0
    %2891 = vmatpush.bf16.xpose.msra.mxu0 0
    %2892 = vmatpush.bf16.xpose.msra.mxu0 0
    %2893 = vmatpush.bf16.xpose.msra.mxu0 0
    %2894 = vmatpush.bf16.xpose.msra.mxu0 0
    %2895 = vmatpush.bf16.xpose.msra.mxu0 0
    %2896 = vmatpush.bf16.xpose.msra.mxu0 0
    %2897 = vmatpush.bf16.xpose.msra.mxu0 0
    %2898 = vmatpush.bf16.xpose.msra.mxu0 %v2889
    %2899 = vmatmul.bf16.gmra.mxu0 %v2886
    %v2900 = vpop.f32.mrf.mxu0
    %v2901 = vadd.f32 0.0, %v2900
    %v2902 = vpop.f32.mrf.mxu0
    %2903 = vdwg.mxu0
    %v2904 = vsel %vm167, %v2901, -inf
    %2905 = vmax.xlane.f32.xlu0 %v2904
    %v2906 = vpop.xlane.xlu0 %2905
    %v2907 = vsub.f32 %v2901, %v2906
    %v2908 = vmul.f32 %v2907, 1.442695
    %v2909 = vpow.pop %v2908
    %v2910 = vsel %vm167, %v2909, 0.0
    %2911 = vadd.xlane.f32.xlu0 %v2910
    %v2912 = vpop.xlane.xlu0 %2911
    %v2913 = vrcp.pop %v2912
    %v2914 = vmul.f32 %v2909, %v2913
    %v2915 = vpack.c.bf16 %v2914, %v2914
    %2916 = vrot.lane.b32.xlu0 %v2714, 40
    %v2917 = vpop.permute.xlu0 %2916
    %v2919 = vsel %vm167, %v2915, 0
    %v2922 = vsel %vm204, %v2917, 0
    %2924 = vmatpush.bf16.msra.mxu0 0
    %2925 = vmatpush.bf16.msra.mxu0 0
    %2926 = vmatpush.bf16.msra.mxu0 0
    %2927 = vmatpush.bf16.msra.mxu0 0
    %2928 = vmatpush.bf16.msra.mxu0 0
    %2929 = vmatpush.bf16.msra.mxu0 0
    %2930 = vmatpush.bf16.msra.mxu0 0
    %2931 = vmatpush.bf16.msra.mxu0 %v2922
    %2932 = vmatmul.bf16.gmra.mxu0 %v2919
    %v2933 = vpop.f32.mrf.mxu0
    %v2934 = vadd.f32 0.0, %v2933
    %v2935 = vpop.f32.mrf.mxu0
    %2936 = vdwg.mxu0
    %2938 = vrot.lane.b32.xlu0 %v2822, 8
    %v2939 = vpop.permute.xlu0 %2938
    %2942 = vrot.lane.b32.xlu0 %v2878, 16
    %v2943 = vpop.permute.xlu0 %2942
    %2946 = vrot.lane.b32.xlu0 %v2934, 24
    %v2947 = vpop.permute.xlu0 %2946
    %v2949 = vsel %vm167, %v2766, %v2939
    %v2950 = vsel %vm85, %v2949, %v2943
    %v2951 = vsel %vm403, %v2950, %v2947
    %v2952 = vpack.c.bf16 %v2951, %v2711
    %v2953 = vperm.slane %v2436, 0
    %v2958 = vunpack.c.l.b16 %v2415
    %v2959 = vunpack.c.l.b16 %v2416
    %v2960 = vunpack.c.l.b16 %v2417
    %v2961 = vunpack.c.l.b16 %v2418
    %v2962 = vpack.c.b16 %v2959, %v2958
    %v2963 = vpack.c.b16 %v2961, %v2960
    %v2967 = vsel %vm142, %v2952, 0
    %2969 = vmatpush.bf16.msra.mxu0 0
    %2970 = vmatpush.bf16.msra.mxu0 0
    %2971 = vmatpush.bf16.msra.mxu0 0
    %2972 = vmatpush.bf16.msra.mxu0 0
    %2973 = vmatpush.bf16.msra.mxu0 0
    %2974 = vmatpush.bf16.msra.mxu0 0
    %2975 = vmatpush.bf16.msra.mxu0 %v2963
    %2976 = vmatpush.bf16.msra.mxu0 %v2962
    %2977 = vmatmul.bf16.gmra.mxu0 %v2967
    %v2978 = vpop.f32.mrf.mxu0
    %v2979 = vadd.f32 %v2953, %v2978
    %v2980 = vpop.f32.mrf.mxu0
    %v2981 = vadd.f32 %v2953, %v2980
    %2982 = vdwg.mxu0
    %v2983 = vadd.f32 %v2405, %v2979
    %v2984 = vadd.f32 %v2406, %v2981
    %v2985 = vsel %vm142, %v2983, 0.0
    %2986 = vadd.xlane.f32.xlu0 %v2985
    %v2987 = vpop.xlane.xlu0 %2986
    %v2988 = vsel %vm142, %v2984, 0.0
    %2989 = vadd.xlane.f32.xlu0 %v2988
    %v2990 = vpop.xlane.xlu0 %2989
    %v2991 = vmul.f32 %v2987, %v690
    %v2992 = vmul.f32 %v2990, %v690
    %v2993 = vsub.f32 %v2983, %v2991
    %v2994 = vsub.f32 %v2984, %v2992
    %v2995 = vmul.f32 %v2993, %v2993
    %v2996 = vmul.f32 %v2994, %v2994
    %v2997 = vsel %vm142, %v2995, 0.0
    %2998 = vadd.xlane.f32.xlu0 %v2997
    %v2999 = vpop.xlane.xlu0 %2998
    %v3000 = vsel %vm142, %v2996, 0.0
    %3001 = vadd.xlane.f32.xlu0 %v3000
    %v3002 = vpop.xlane.xlu0 %3001
    %v3003 = vmul.f32 %v2999, %v690
    %v3004 = vmul.f32 %v3002, %v690
    %v3005 = vadd.f32 %v3003, 1e-05
    %v3006 = vadd.f32 %v3004, 1e-05
    %v3007 = vrsqrt.pop %v3005
    %v3008 = vmul.f32 %v3007, %v3005
    %v3009 = vmul.f32 %v3008, %v3007
    %v3010 = vmul.f32 0.5, %v3009
    %v3011 = vsub.f32 1.5, %v3010
    %v3012 = vmul.f32 %v3007, %v3011
    %vm3013 = vweird.f32 %v3005
    %vm3014 = vweird.f32 %v3007
    %vm3015 = vmor %vm3013, %vm3014
    %v3016 = vsel %vm3015, %v3007, %v3012
    %v3017 = vrsqrt.pop %v3006
    %v3018 = vmul.f32 %v3017, %v3006
    %v3019 = vmul.f32 %v3018, %v3017
    %v3020 = vmul.f32 0.5, %v3019
    %v3021 = vsub.f32 1.5, %v3020
    %v3022 = vmul.f32 %v3017, %v3021
    %vm3023 = vweird.f32 %v3006
    %vm3024 = vweird.f32 %v3017
    %vm3025 = vmor %vm3023, %vm3024
    %v3026 = vsel %vm3025, %v3017, %v3022
    %v3027 = vmul.f32 %v2993, %v3016
    %v3028 = vmul.f32 %v2994, %v3026
    %v3029 = vperm.slane %v2436, 1
    %v3030 = vmul.f32 %v3027, %v3029
    %v3031 = vmul.f32 %v3028, %v3029
    %v3032 = vperm.slane %v2436, 2
    %v3033 = vadd.f32 %v3030, %v3032
    %v3034 = vadd.f32 %v3031, %v3032
    %v3035 = vpack.c.bf16 %v3034, %v3033
    %v3037 = vperm.slane %v2425, 0
    %v3043 = vunpack.c.l.b16 %v2420
    %v3044 = vunpack.c.l.b16 %v2421
    %v3045 = vunpack.c.l.b16 %v2422
    %v3046 = vunpack.c.l.b16 %v2423
    %v3047 = vpack.c.b16 %v3044, %v3043
    %v3048 = vpack.c.b16 %v3046, %v3045
    %v3052 = vsel %vm142, %v3035, 0
    %3054 = vmatpush.bf16.msra.mxu0 0
    %3055 = vmatpush.bf16.msra.mxu0 0
    %3056 = vmatpush.bf16.msra.mxu0 0
    %3057 = vmatpush.bf16.msra.mxu0 0
    %3058 = vmatpush.bf16.msra.mxu0 0
    %3059 = vmatpush.bf16.msra.mxu0 0
    %3060 = vmatpush.bf16.msra.mxu0 %v3048
    %3061 = vmatpush.bf16.msra.mxu0 %v3047
    %3062 = vmatmul.bf16.gmra.mxu0 %v3052
    %v3063 = vpop.f32.mrf.mxu0
    %v3064 = vadd.f32 %v3037, %v3063
    %v3065 = vpop.f32.mrf.mxu0
    %v3066 = vadd.f32 %v3037, %v3065
    %3067 = vdwg.mxu0
    %v3068 = vmax.f32 %v3064, 0.0
    %v3069 = vmax.f32 %v3066, 0.0
    %v3070 = vpack.c.bf16 %v3069, %v3068
    %v3071 = vperm.slane %v2436, 3
    %v3080 = vunpack.c.l.b16 %v2427
    %v3081 = vunpack.c.l.b16 %v2428
    %v3082 = vunpack.c.l.b16 %v2429
    %v3083 = vunpack.c.l.b16 %v2430
    %v3084 = vunpack.c.l.b16 %v2431
    %v3085 = vunpack.c.l.b16 %v2432
    %v3086 = vunpack.c.l.b16 %v2433
    %v3087 = vunpack.c.l.b16 %v2434
    %v3088 = vpack.c.b16 %v3081, %v3080
    %v3089 = vpack.c.b16 %v3083, %v3082
    %v3090 = vpack.c.b16 %v3085, %v3084
    %v3091 = vpack.c.b16 %v3087, %v3086
    %v3097 = vsel %vm796, %v3070, 0
    %3099 = vmatpush.bf16.msra.mxu0 0
    %3100 = vmatpush.bf16.msra.mxu0 0
    %3101 = vmatpush.bf16.msra.mxu0 0
    %3102 = vmatpush.bf16.msra.mxu0 0
    %3103 = vmatpush.bf16.msra.mxu0 %v3091
    %3104 = vmatpush.bf16.msra.mxu0 %v3090
    %3105 = vmatpush.bf16.msra.mxu0 %v3089
    %3106 = vmatpush.bf16.msra.mxu0 %v3088
    %3107 = vmatmul.bf16.gmra.mxu0 %v3097
    %v3108 = vpop.f32.mrf.mxu0
    %v3109 = vadd.f32 %v3071, %v3108
    %v3110 = vpop.f32.mrf.mxu0
    %v3111 = vadd.f32 %v3071, %v3110
    %3112 = vdwg.mxu0
    %v3113 = vadd.f32 %v3033, %v3109
    %v3114 = vadd.f32 %v3034, %v3111
    %v3115 = vsel %vm142, %v3113, 0.0
    %3116 = vadd.xlane.f32.xlu0 %v3115
    %v3117 = vpop.xlane.xlu0 %3116
    %v3118 = vsel %vm142, %v3114, 0.0
    %3119 = vadd.xlane.f32.xlu0 %v3118
    %v3120 = vpop.xlane.xlu0 %3119
    %v3121 = vmul.f32 %v3117, %v690
    %v3122 = vmul.f32 %v3120, %v690
    %v3123 = vsub.f32 %v3113, %v3121
    %v3124 = vsub.f32 %v3114, %v3122
    %v3125 = vmul.f32 %v3123, %v3123
    %v3126 = vmul.f32 %v3124, %v3124
    %v3127 = vsel %vm142, %v3125, 0.0
    %3128 = vadd.xlane.f32.xlu0 %v3127
    %v3129 = vpop.xlane.xlu0 %3128
    %v3130 = vsel %vm142, %v3126, 0.0
    %3131 = vadd.xlane.f32.xlu0 %v3130
    %v3132 = vpop.xlane.xlu0 %3131
    %v3133 = vmul.f32 %v3129, %v690
    %v3134 = vmul.f32 %v3132, %v690
    %v3135 = vadd.f32 %v3133, 1e-05
    %v3136 = vadd.f32 %v3134, 1e-05
    %v3137 = vrsqrt.pop %v3135
    %v3138 = vmul.f32 %v3137, %v3135
    %v3139 = vmul.f32 %v3138, %v3137
    %v3140 = vmul.f32 0.5, %v3139
    %v3141 = vsub.f32 1.5, %v3140
    %v3142 = vmul.f32 %v3137, %v3141
    %vm3143 = vweird.f32 %v3135
    %vm3144 = vweird.f32 %v3137
    %vm3145 = vmor %vm3143, %vm3144
    %v3146 = vsel %vm3145, %v3137, %v3142
    %v3147 = vrsqrt.pop %v3136
    %v3148 = vmul.f32 %v3147, %v3136
    %v3149 = vmul.f32 %v3148, %v3147
    %v3150 = vmul.f32 0.5, %v3149
    %v3151 = vsub.f32 1.5, %v3150
    %v3152 = vmul.f32 %v3147, %v3151
    %vm3153 = vweird.f32 %v3136
    %vm3154 = vweird.f32 %v3147
    %vm3155 = vmor %vm3153, %vm3154
    %v3156 = vsel %vm3155, %v3147, %v3152
    %v3157 = vmul.f32 %v3123, %v3146
    %v3158 = vmul.f32 %v3124, %v3156
    %v3159 = vperm.slane %v2436, 4
    %v3160 = vmul.f32 %v3157, %v3159
    %v3161 = vmul.f32 %v3158, %v3159
    %v3162 = vperm.slane %v2436, 5
    %v3163 = vadd.f32 %v3160, %v3162
    %v3164 = vadd.f32 %v3161, %v3162
    %v3165 = vadd.f32 %v1622, %v3163
    %v3166 = vadd.f32 %v1623, %v3164
    %v3167 = vld [vmem:[%s20] sm:$0x1]
    %v3168 = vld [vmem:[%s20 + $0x1] sm:$0x1]
    %v3169 = vsel %vm142, %v3165, 0.0
    %3170 = vadd.xlane.f32.xlu0 %v3169
    %v3171 = vpop.xlane.xlu0 %3170
    %v3172 = vsel %vm142, %v3166, 0.0
    %3173 = vadd.xlane.f32.xlu0 %v3172
    %v3174 = vpop.xlane.xlu0 %3173
    %v3175 = vmul.f32 %v3171, %v690
    %v3176 = vmul.f32 %v3174, %v690
    %v3177 = vsub.f32 %v3165, %v3175
    %v3178 = vsub.f32 %v3166, %v3176
    %v3179 = vmul.f32 %v3177, %v3177
    %v3180 = vmul.f32 %v3178, %v3178
    %v3181 = vsel %vm142, %v3179, 0.0
    %3182 = vadd.xlane.f32.xlu0 %v3181
    %v3183 = vpop.xlane.xlu0 %3182
    %v3184 = vsel %vm142, %v3180, 0.0
    %3185 = vadd.xlane.f32.xlu0 %v3184
    %v3186 = vpop.xlane.xlu0 %3185
    %v3187 = vmul.f32 %v3183, %v690
    %v3188 = vmul.f32 %v3186, %v690
    %v3189 = vadd.f32 %v3187, 1e-05
    %v3190 = vadd.f32 %v3188, 1e-05
    %v3191 = vrsqrt.pop %v3189
    %v3192 = vmul.f32 %v3191, %v3189
    %v3193 = vmul.f32 %v3192, %v3191
    %v3194 = vmul.f32 0.5, %v3193
    %v3195 = vsub.f32 1.5, %v3194
    %v3196 = vmul.f32 %v3191, %v3195
    %vm3197 = vweird.f32 %v3189
    %vm3198 = vweird.f32 %v3191
    %vm3199 = vmor %vm3197, %vm3198
    %v3200 = vsel %vm3199, %v3191, %v3196
    %v3201 = vrsqrt.pop %v3190
    %v3202 = vmul.f32 %v3201, %v3190
    %v3203 = vmul.f32 %v3202, %v3201
    %v3204 = vmul.f32 0.5, %v3203
    %v3205 = vsub.f32 1.5, %v3204
    %v3206 = vmul.f32 %v3201, %v3205
    %vm3207 = vweird.f32 %v3190
    %vm3208 = vweird.f32 %v3201
    %vm3209 = vmor %vm3207, %vm3208
    %v3210 = vsel %vm3209, %v3201, %v3206
    %v3211 = vmul.f32 %v3177, %v3200
    %v3212 = vmul.f32 %v3178, %v3210
    %v3213 = vperm.slane %v3167, 0
    %v3214 = vmul.f32 %v3211, %v3213
    %v3215 = vmul.f32 %v3212, %v3213
    %v3216 = vperm.slane %v3168, 0
    %v3217 = vadd.f32 %v3214, %v3216
    %v3218 = vadd.f32 %v3215, %v3216
    %3219 = vst.msk [vmem:[#allocation2] sm:$0xff] %vm142, %v3217
    %3220 = vst.msk [vmem:[#allocation2 + $0x8] sm:$0xff] %vm142, %v3218
    // Predicated region
    $region86: #{bidirectional_transformer_pallas.1} parent=1 // pred_check
      _
    $region87: #{bidirectional_transformer_pallas.1} parent=1 // pred_check_branch
      %3222 = sbr.rel (0) target = $region89
    $region88: #{bidirectional_transformer_pallas.1} parent=1 // pred_region
      %3224 = vsyncadd [#allocation3], 0
      %s3225 = sshll.u32 [#allocation2], 4
      %s3226 = int_to_ptr.vmem [resolvable:$true] %s3225
      %s3227 = sshll.u32 %s21, 4
      %s3228 = int_to_ptr.hbm [resolvable:$true] %s3227
      %3233 = dma.vmem_to_hbm [thread:$0]  %s3226, 256, %s3228, [#allocation3], 128, 128, 8
    $region89: #{bidirectional_transformer_pallas.1} parent=1 // pred_fallthru
      _
    // Predicated region
    $region90: #{bidirectional_transformer_pallas.1} parent=1 // pred_check
      _
    $region91: #{bidirectional_transformer_pallas.1} parent=1 // pred_check_branch
      %3235 = sbr.rel (0) target = $region93
    $region92: #{bidirectional_transformer_pallas.1} parent=1 // pred_region
      %3237 = dma.done [#allocation3], 256
    $region93: #{bidirectional_transformer_pallas.1} parent=1 // pred_fallthru
      _
    %3238 = vsyncpa [#allocation3], 1

</llo_original>
